<compile_context>
chip_gen: v6e
topology: v6e:2x2x1
jax: 0.10.0
libtpu: 0.0.40
codegen_flags: <defaults>
</compile_context>

<pallas_src>
import jax
import jax.numpy as jnp
from jax import lax
from jax.experimental import pallas as pl
from jax.experimental.pallas import tpu as pltpu


_LAYER_DIMS = [(3, 16), (16, 32), (32, 64), (64, 128), (128, 256)]
FEAT_DIMS = [64, 128, 256]  # channels of the 3 pyramid features

_TILE_N = 512   # lane-dim tile over flattened output positions (multiple of 128)
_K_ALIGN = 16   # bf16 sublane tile for the contraction dim


def _round_up(v, m):
    return ((v + m - 1) // m) * m


# ----------------------------------------------------------------------------
# Pallas kernel: one fused (3x3 stride-2 conv + bias + ReLU) output tile.
# ----------------------------------------------------------------------------
def _conv3x3s2_kernel(w_ref, b_ref, p_ref, o_ref):
    """
    w_ref : (Cout, Kp)  bf16   packed weights, k = (ki, kj, ci)
    b_ref : (Cout, 1)   f32
    p_ref : (Kp, TN)    bf16   patch tile, lanes = flattened output positions
    o_ref : (Cout, TN)  bf16
    """
    acc = jnp.dot(w_ref[...], p_ref[...], preferred_element_type=jnp.float32)
    acc = acc + b_ref[...]                       # broadcast over lanes
    o_ref[...] = jnp.maximum(acc, 0.0).astype(o_ref.dtype)


# ----------------------------------------------------------------------------
# One conv stage = one pallas_call (grid over output-position tiles)
# ----------------------------------------------------------------------------
def conv3x3_s2_relu(x_cbhw, w, b):
    """
    x_cbhw : (Cin, B, H, W) bf16 channel-major activation
    w      : (3, 3, Cin, Cout) f32
    b      : (Cout,) f32
    returns: (Cout, B, H//2, W//2) bf16
    """
    Cin, B, H, W = x_cbhw.shape
    Cout = w.shape[-1]
    Ho, Wo = H // 2, W // 2
    N = B * Ho * Wo                    # flattened output positions
    K = 9 * Cin                        # 3x3 taps x input channels
    Kp = _round_up(K, _K_ALIGN)

    # ---- wrapper-side patch build (one fused XLA gather/copy pass) ---------
    # patches[(ki*3+kj)*Cin + ci, b*Ho*Wo + r*Wo + c] = x_pad[ci, b, 2r+ki, 2c+kj]
    xp = jnp.pad(x_cbhw, ((0, 0), (0, 0), (1, 1), (1, 1)))
    taps = [xp[:, :, ki:ki + 2 * Ho:2, kj:kj + 2 * Wo:2]
            for ki in range(3) for kj in range(3)]           # 9 x (Cin,B,Ho,Wo)
    patches = jnp.stack(taps, axis=0).reshape(K, N).astype(jnp.bfloat16)

    if N >= _TILE_N:
        tn = _TILE_N
        n_pad = _round_up(N, tn)
    else:
        tn = N                         # tiny deep layers: a single full block
        n_pad = N
    patches = jnp.pad(patches, ((0, Kp - K), (0, n_pad - N)))

    # weights as the dot LHS: (Cout, 9*Cin), column index = (ki, kj, ci)
    wt = jnp.transpose(w, (3, 0, 1, 2)).reshape(Cout, K)
    wt = jnp.pad(wt, ((0, 0), (0, Kp - K))).astype(jnp.bfloat16)
    b2 = b.reshape(Cout, 1).astype(jnp.float32)

    out = pl.pallas_call(
        _conv3x3s2_kernel,
        out_shape=jax.ShapeDtypeStruct((Cout, n_pad), jnp.bfloat16),
        grid_spec=pltpu.PrefetchScalarGridSpec(
            num_scalar_prefetch=0,
            grid=(n_pad // tn,),
            in_specs=[
                pl.BlockSpec((Cout, Kp), lambda n: (0, 0)),   # weights (resident)
                pl.BlockSpec((Cout, 1), lambda n: (0, 0)),    # bias (resident)
                pl.BlockSpec((Kp, tn), lambda n: (0, n)),     # patch tile
            ],
            out_specs=pl.BlockSpec((Cout, tn), lambda n: (0, n)),
        ),
        compiler_params=pltpu.CompilerParams(
            dimension_semantics=("parallel",),
        ),
    )(wt, b2, patches)

    # drop padded lanes (free: fuses into the next stage's patch builder) and
    # re-view as the next stage's channel-major activation.
    return out[:, :N].reshape(Cout, B, Ho, Wo)


# ----------------------------------------------------------------------------
# Backbone2D
# ----------------------------------------------------------------------------
def init_backbone2d_params():
    params = []
    for idx, (cin, cout) in enumerate(_LAYER_DIMS):
        kkey = jax.random.PRNGKey(100 + idx)
        bkey = jax.random.PRNGKey(200 + idx)
        fan_in = 9 * cin
        wgt = jax.random.normal(kkey, (3, 3, cin, cout), jnp.float32) * (
            1.0 / jnp.sqrt(jnp.float32(fan_in))
        )
        bias = 0.01 * jax.random.normal(bkey, (cout,), jnp.float32)
        params.append((wgt, bias))
    return params


def backbone2d_forward(x_nchw, params):
    """
    Input : x_nchw (B, C, H, W), H and W multiples of 32.
    Output: [C3 (B,64,H/8,W/8), C4 (B,128,H/16,W/16), C5 (B,256,H/32,W/32)] NCHW f32.
    """
    B, C, H, W = x_nchw.shape
    assert H % 32 == 0 and W % 32 == 0, "H, W must be multiples of 32"
    # channel-major (C, B, H, W) is both what the kernels emit and what the
    # patch builder consumes -> stages chain without an NHWC round trip.
    x = jnp.transpose(x_nchw, (1, 0, 2, 3)).astype(jnp.bfloat16)
    feats = []
    for idx, (wgt, bias) in enumerate(params):
        x = conv3x3_s2_relu(x, wgt, bias)
        if idx >= 2:                       # stages 2, 3, 4 emit C3, C4, C5
            feats.append(x)
    return [jnp.transpose(f, (1, 0, 2, 3)).astype(jnp.float32) for f in feats]


# ----------------------------------------------------------------------------
# Pure-JAX reference (same bf16 rounding points) for a numerical self-check.
# ----------------------------------------------------------------------------
def _reference_forward(x_nchw, params):
    x = jnp.transpose(x_nchw, (0, 2, 3, 1)).astype(jnp.bfloat16).astype(jnp.float32)
    feats = []
    for idx, (w, b) in enumerate(params):
        wq = w.astype(jnp.bfloat16).astype(jnp.float32)
        y = lax.conv_general_dilated(
            x, wq, window_strides=(2, 2), padding=((1, 1), (1, 1)),
            dimension_numbers=("NHWC", "HWIO", "NHWC"))
        y = jnp.maximum(y + b.reshape(1, 1, 1, -1), 0.0)
        x = y.astype(jnp.bfloat16).astype(jnp.float32)
        if idx >= 2:
            feats.append(x)
    return [jnp.transpose(f, (0, 3, 1, 2)) for f in feats]


if __name__ == "__main__":
    key = jax.random.PRNGKey(0)
    B, C, H, W = 2, 3, 64, 64
    x = jax.random.normal(key, (B, C, H, W), jnp.float32)

    params = init_backbone2d_params()
    fwd = jax.jit(lambda inp: backbone2d_forward(inp, params))
    feats = fwd(x)
    feats = [jax.block_until_ready(f) for f in feats]

    expected = [
        (B, 64, H // 8, W // 8),
        (B, 128, H // 16, W // 16),
        (B, 256, H // 32, W // 32),
    ]
    assert [tuple(f.shape) for f in feats] == expected, \
        [tuple(f.shape) for f in feats]
    assert all(bool(jnp.all(jnp.isfinite(f))) for f in feats)

    ref = _reference_forward(x, params)
    for f, r in zip(feats, ref):
        assert bool(jnp.allclose(f, r, atol=5e-2, rtol=5e-2)), \
            float(jnp.max(jnp.abs(f - r)))

    print("KERNEL_OK")
</pallas_src>

<mosaic_0001>
module attributes {stable_mosaic.version = 11 : i64} {
  func.func @_conv3x3s2_kernel(%arg0: i32, %arg1: memref<16x32xbf16, #tpu.memory_space<vmem>>, %arg2: memref<16x1xf32, #tpu.memory_space<vmem>>, %arg3: memref<32x512xbf16, #tpu.memory_space<vmem>>, %arg4: memref<16x512xbf16, #tpu.memory_space<vmem>>) attributes {dimension_semantics = [#tpu.dimension_semantics<parallel>], iteration_bounds = array<i64: 4>, scalar_prefetch = 0 : i64, scratch_operands = 0 : i64, tpu.core_type = #tpu.core_type<tc>, window_params = [{pipeline_mode = #tpu.pipeline_mode<synchronous>, transform_indices = @transform_0, window_bounds = array<i64: 16, 32>}, {pipeline_mode = #tpu.pipeline_mode<synchronous>, transform_indices = @transform_1, window_bounds = array<i64: 16, 1>}, {transform_indices = @transform_2, window_bounds = array<i64: 32, 512>}, {transform_indices = @transform_3, window_bounds = array<i64: 16, 512>}]} {
    %c0 = arith.constant 0 : index
    %c0_0 = arith.constant 0 : index
    %0 = vector.load %arg1[%c0, %c0_0] : memref<16x32xbf16, #tpu.memory_space<vmem>>, vector<16x32xbf16>
    %c0_1 = arith.constant 0 : index
    %c0_2 = arith.constant 0 : index
    %1 = vector.load %arg3[%c0_1, %c0_2] : memref<32x512xbf16, #tpu.memory_space<vmem>>, vector<32x512xbf16>
    %cst = arith.constant dense<0.000000e+00> : vector<16x512xf32>
    %2 = tpu.matmul %0, %1, %cst {dimension_numbers = #tpu.dot_dimension_numbers<[1], [0], [0], [1], [0, 0, 1, 1], [], []>} : vector<16x32xbf16>, vector<32x512xbf16>, vector<16x512xf32> -> vector<16x512xf32>
    %c0_3 = arith.constant 0 : index
    %c0_4 = arith.constant 0 : index
    %3 = vector.load %arg2[%c0_3, %c0_4] : memref<16x1xf32, #tpu.memory_space<vmem>>, vector<16x1xf32>
    %4 = vector.broadcast %3 : vector<16x1xf32> to vector<16x512xf32>
    %5 = arith.addf %2, %4 : vector<16x512xf32>
    %cst_5 = arith.constant 0.000000e+00 : f32
    %6 = vector.broadcast %cst_5 : f32 to vector<16x512xf32>
    %7 = arith.maximumf %5, %6 : vector<16x512xf32>
    %8 = arith.truncf %7 : vector<16x512xf32> to vector<16x512xbf16>
    %c0_6 = arith.constant 0 : index
    %c0_7 = arith.constant 0 : index
    %9 = vector.load %arg4[%c0_6, %c0_7] : memref<16x512xbf16, #tpu.memory_space<vmem>>, vector<16x512xbf16>
    tpu.vector_store %arg4[%c0_6, %c0_7], %8 {strides = array<i32>} : memref<16x512xbf16, #tpu.memory_space<vmem>>, vector<16x512xbf16>,
    return
  }
  func.func @transform_0(%arg0: i32) -> (i32, i32) {
    %c0_i32 = arith.constant 0 : i32
    %c0_i32_0 = arith.constant 0 : i32
    %c0_i32_1 = arith.constant 0 : i32
    return %c0_i32, %c0_i32_0 : i32, i32
  }
  func.func @transform_1(%arg0: i32) -> (i32, i32) {
    %c0_i32 = arith.constant 0 : i32
    %c0_i32_0 = arith.constant 0 : i32
    %c0_i32_1 = arith.constant 0 : i32
    return %c0_i32, %c0_i32_0 : i32, i32
  }
  func.func @transform_2(%arg0: i32) -> (i32, i32) {
    %c0_i32 = arith.constant 0 : i32
    %c0_i32_0 = arith.constant 0 : i32
    return %c0_i32, %arg0 : i32, i32
  }
  func.func @transform_3(%arg0: i32) -> (i32, i32) {
    %c0_i32 = arith.constant 0 : i32
    %c0_i32_0 = arith.constant 0 : i32
    return %c0_i32, %arg0 : i32, i32
  }
}

module attributes {stable_mosaic.version = 11 : i64} {
  func.func @_conv3x3s2_kernel(%arg0: i32, %arg1: memref<32x144xbf16, #tpu.memory_space<vmem>>, %arg2: memref<32x1xf32, #tpu.memory_space<vmem>>, %arg3: memref<144x512xbf16, #tpu.memory_space<vmem>>, %arg4: memref<32x512xbf16, #tpu.memory_space<vmem>>) attributes {dimension_semantics = [#tpu.dimension_semantics<parallel>], iteration_bounds = array<i64: 1>, scalar_prefetch = 0 : i64, scratch_operands = 0 : i64, tpu.core_type = #tpu.core_type<tc>, window_params = [{pipeline_mode = #tpu.pipeline_mode<synchronous>, transform_indices = @transform_0, window_bounds = array<i64: 32, 144>}, {pipeline_mode = #tpu.pipeline_mode<synchronous>, transform_indices = @transform_1, window_bounds = array<i64: 32, 1>}, {transform_indices = @transform_2, window_bounds = array<i64: 144, 512>}, {transform_indices = @transform_3, window_bounds = array<i64: 32, 512>}]} {
    %c0 = arith.constant 0 : index
    %c0_0 = arith.constant 0 : index
    %0 = vector.load %arg1[%c0, %c0_0] : memref<32x144xbf16, #tpu.memory_space<vmem>>, vector<32x144xbf16>
    %c0_1 = arith.constant 0 : index
    %c0_2 = arith.constant 0 : index
    %1 = vector.load %arg3[%c0_1, %c0_2] : memref<144x512xbf16, #tpu.memory_space<vmem>>, vector<144x512xbf16>
    %cst = arith.constant dense<0.000000e+00> : vector<32x512xf32>
    %2 = tpu.matmul %0, %1, %cst {dimension_numbers = #tpu.dot_dimension_numbers<[1], [0], [0], [1], [0, 0, 1, 1], [], []>} : vector<32x144xbf16>, vector<144x512xbf16>, vector<32x512xf32> -> vector<32x512xf32>
    %c0_3 = arith.constant 0 : index
    %c0_4 = arith.constant 0 : index
    %3 = vector.load %arg2[%c0_3, %c0_4] : memref<32x1xf32, #tpu.memory_space<vmem>>, vector<32x1xf32>
    %4 = vector.broadcast %3 : vector<32x1xf32> to vector<32x512xf32>
    %5 = arith.addf %2, %4 : vector<32x512xf32>
    %cst_5 = arith.constant 0.000000e+00 : f32
    %6 = vector.broadcast %cst_5 : f32 to vector<32x512xf32>
    %7 = arith.maximumf %5, %6 : vector<32x512xf32>
    %8 = arith.truncf %7 : vector<32x512xf32> to vector<32x512xbf16>
    %c0_6 = arith.constant 0 : index
    %c0_7 = arith.constant 0 : index
    %9 = vector.load %arg4[%c0_6, %c0_7] : memref<32x512xbf16, #tpu.memory_space<vmem>>, vector<32x512xbf16>
    tpu.vector_store %arg4[%c0_6, %c0_7], %8 {strides = array<i32>} : memref<32x512xbf16, #tpu.memory_space<vmem>>, vector<32x512xbf16>,
    return
  }
  func.func @transform_0(%arg0: i32) -> (i32, i32) {
    %c0_i32 = arith.constant 0 : i32
    %c0_i32_0 = arith.constant 0 : i32
    %c0_i32_1 = arith.constant 0 : i32
    return %c0_i32, %c0_i32_0 : i32, i32
  }
  func.func @transform_1(%arg0: i32) -> (i32, i32) {
    %c0_i32 = arith.constant 0 : i32
    %c0_i32_0 = arith.constant 0 : i32
    %c0_i32_1 = arith.constant 0 : i32
    return %c0_i32, %c0_i32_0 : i32, i32
  }
  func.func @transform_2(%arg0: i32) -> (i32, i32) {
    %c0_i32 = arith.constant 0 : i32
    %c0_i32_0 = arith.constant 0 : i32
    return %c0_i32, %arg0 : i32, i32
  }
  func.func @transform_3(%arg0: i32) -> (i32, i32) {
    %c0_i32 = arith.constant 0 : i32
    %c0_i32_0 = arith.constant 0 : i32
    return %c0_i32, %arg0 : i32, i32
  }
}

module attributes {stable_mosaic.version = 11 : i64} {
  func.func @_conv3x3s2_kernel(%arg0: i32, %arg1: memref<64x288xbf16, #tpu.memory_space<vmem>>, %arg2: memref<64x1xf32, #tpu.memory_space<vmem>>, %arg3: memref<288x128xbf16, #tpu.memory_space<vmem>>, %arg4: memref<64x128xbf16, #tpu.memory_space<vmem>>) attributes {dimension_semantics = [#tpu.dimension_semantics<parallel>], iteration_bounds = array<i64: 1>, scalar_prefetch = 0 : i64, scratch_operands = 0 : i64, tpu.core_type = #tpu.core_type<tc>, window_params = [{pipeline_mode = #tpu.pipeline_mode<synchronous>, transform_indices = @transform_0, window_bounds = array<i64: 64, 288>}, {pipeline_mode = #tpu.pipeline_mode<synchronous>, transform_indices = @transform_1, window_bounds = array<i64: 64, 1>}, {transform_indices = @transform_2, window_bounds = array<i64: 288, 128>}, {transform_indices = @transform_3, window_bounds = array<i64: 64, 128>}]} {
    %c0 = arith.constant 0 : index
    %c0_0 = arith.constant 0 : index
    %0 = vector.load %arg1[%c0, %c0_0] : memref<64x288xbf16, #tpu.memory_space<vmem>>, vector<64x288xbf16>
    %c0_1 = arith.constant 0 : index
    %c0_2 = arith.constant 0 : index
    %1 = vector.load %arg3[%c0_1, %c0_2] : memref<288x128xbf16, #tpu.memory_space<vmem>>, vector<288x128xbf16>
    %cst = arith.constant dense<0.000000e+00> : vector<64x128xf32>
    %2 = tpu.matmul %0, %1, %cst {dimension_numbers = #tpu.dot_dimension_numbers<[1], [0], [0], [1], [0, 0, 1, 1], [], []>} : vector<64x288xbf16>, vector<288x128xbf16>, vector<64x128xf32> -> vector<64x128xf32>
    %c0_3 = arith.constant 0 : index
    %c0_4 = arith.constant 0 : index
    %3 = vector.load %arg2[%c0_3, %c0_4] : memref<64x1xf32, #tpu.memory_space<vmem>>, vector<64x1xf32>
    %4 = vector.broadcast %3 : vector<64x1xf32> to vector<64x128xf32>
    %5 = arith.addf %2, %4 : vector<64x128xf32>
    %cst_5 = arith.constant 0.000000e+00 : f32
    %6 = vector.broadcast %cst_5 : f32 to vector<64x128xf32>
    %7 = arith.maximumf %5, %6 : vector<64x128xf32>
    %8 = arith.truncf %7 : vector<64x128xf32> to vector<64x128xbf16>
    %c0_6 = arith.constant 0 : index
    %c0_7 = arith.constant 0 : index
    %9 = vector.load %arg4[%c0_6, %c0_7] : memref<64x128xbf16, #tpu.memory_space<vmem>>, vector<64x128xbf16>
    tpu.vector_store %arg4[%c0_6, %c0_7], %8 {strides = array<i32>} : memref<64x128xbf16, #tpu.memory_space<vmem>>, vector<64x128xbf16>,
    return
  }
  func.func @transform_0(%arg0: i32) -> (i32, i32) {
    %c0_i32 = arith.constant 0 : i32
    %c0_i32_0 = arith.constant 0 : i32
    %c0_i32_1 = arith.constant 0 : i32
    return %c0_i32, %c0_i32_0 : i32, i32
  }
  func.func @transform_1(%arg0: i32) -> (i32, i32) {
    %c0_i32 = arith.constant 0 : i32
    %c0_i32_0 = arith.constant 0 : i32
    %c0_i32_1 = arith.constant 0 : i32
    return %c0_i32, %c0_i32_0 : i32, i32
  }
  func.func @transform_2(%arg0: i32) -> (i32, i32) {
    %c0_i32 = arith.constant 0 : i32
    %c0_i32_0 = arith.constant 0 : i32
    return %c0_i32, %arg0 : i32, i32
  }
  func.func @transform_3(%arg0: i32) -> (i32, i32) {
    %c0_i32 = arith.constant 0 : i32
    %c0_i32_0 = arith.constant 0 : i32
    return %c0_i32, %arg0 : i32, i32
  }
}

module attributes {stable_mosaic.version = 11 : i64} {
  func.func @_conv3x3s2_kernel(%arg0: i32, %arg1: memref<128x576xbf16, #tpu.memory_space<vmem>>, %arg2: memref<128x1xf32, #tpu.memory_space<vmem>>, %arg3: memref<576x32xbf16, #tpu.memory_space<vmem>>, %arg4: memref<128x32xbf16, #tpu.memory_space<vmem>>) attributes {dimension_semantics = [#tpu.dimension_semantics<parallel>], iteration_bounds = array<i64: 1>, scalar_prefetch = 0 : i64, scratch_operands = 0 : i64, tpu.core_type = #tpu.core_type<tc>, window_params = [{pipeline_mode = #tpu.pipeline_mode<synchronous>, transform_indices = @transform_0, window_bounds = array<i64: 128, 576>}, {pipeline_mode = #tpu.pipeline_mode<synchronous>, transform_indices = @transform_1, window_bounds = array<i64: 128, 1>}, {transform_indices = @transform_2, window_bounds = array<i64: 576, 32>}, {transform_indices = @transform_3, window_bounds = array<i64: 128, 32>}]} {
    %c0 = arith.constant 0 : index
    %c0_0 = arith.constant 0 : index
    %0 = vector.load %arg1[%c0, %c0_0] : memref<128x576xbf16, #tpu.memory_space<vmem>>, vector<128x576xbf16>
    %c0_1 = arith.constant 0 : index
    %c0_2 = arith.constant 0 : index
    %1 = vector.load %arg3[%c0_1, %c0_2] : memref<576x32xbf16, #tpu.memory_space<vmem>>, vector<576x32xbf16>
    %cst = arith.constant dense<0.000000e+00> : vector<128x32xf32>
    %2 = tpu.matmul %0, %1, %cst {dimension_numbers = #tpu.dot_dimension_numbers<[1], [0], [0], [1], [0, 0, 1, 1], [], []>} : vector<128x576xbf16>, vector<576x32xbf16>, vector<128x32xf32> -> vector<128x32xf32>
    %c0_3 = arith.constant 0 : index
    %c0_4 = arith.constant 0 : index
    %3 = vector.load %arg2[%c0_3, %c0_4] : memref<128x1xf32, #tpu.memory_space<vmem>>, vector<128x1xf32>
    %4 = vector.broadcast %3 : vector<128x1xf32> to vector<128x32xf32>
    %5 = arith.addf %2, %4 : vector<128x32xf32>
    %cst_5 = arith.constant 0.000000e+00 : f32
    %6 = vector.broadcast %cst_5 : f32 to vector<128x32xf32>
    %7 = arith.maximumf %5, %6 : vector<128x32xf32>
    %8 = arith.truncf %7 : vector<128x32xf32> to vector<128x32xbf16>
    %c0_6 = arith.constant 0 : index
    %c0_7 = arith.constant 0 : index
    %9 = vector.load %arg4[%c0_6, %c0_7] : memref<128x32xbf16, #tpu.memory_space<vmem>>, vector<128x32xbf16>
    tpu.vector_store %arg4[%c0_6, %c0_7], %8 {strides = array<i32>} : memref<128x32xbf16, #tpu.memory_space<vmem>>, vector<128x32xbf16>,
    return
  }
  func.func @transform_0(%arg0: i32) -> (i32, i32) {
    %c0_i32 = arith.constant 0 : i32
    %c0_i32_0 = arith.constant 0 : i32
    %c0_i32_1 = arith.constant 0 : i32
    return %c0_i32, %c0_i32_0 : i32, i32
  }
  func.func @transform_1(%arg0: i32) -> (i32, i32) {
    %c0_i32 = arith.constant 0 : i32
    %c0_i32_0 = arith.constant 0 : i32
    %c0_i32_1 = arith.constant 0 : i32
    return %c0_i32, %c0_i32_0 : i32, i32
  }
  func.func @transform_2(%arg0: i32) -> (i32, i32) {
    %c0_i32 = arith.constant 0 : i32
    %c0_i32_0 = arith.constant 0 : i32
    return %c0_i32, %arg0 : i32, i32
  }
  func.func @transform_3(%arg0: i32) -> (i32, i32) {
    %c0_i32 = arith.constant 0 : i32
    %c0_i32_0 = arith.constant 0 : i32
    return %c0_i32, %arg0 : i32, i32
  }
}

module attributes {stable_mosaic.version = 11 : i64} {
  func.func @_conv3x3s2_kernel(%arg0: i32, %arg1: memref<256x1152xbf16, #tpu.memory_space<vmem>>, %arg2: memref<256x1xf32, #tpu.memory_space<vmem>>, %arg3: memref<1152x8xbf16, #tpu.memory_space<vmem>>, %arg4: memref<256x8xbf16, #tpu.memory_space<vmem>>) attributes {dimension_semantics = [#tpu.dimension_semantics<parallel>], iteration_bounds = array<i64: 1>, scalar_prefetch = 0 : i64, scratch_operands = 0 : i64, tpu.core_type = #tpu.core_type<tc>, window_params = [{pipeline_mode = #tpu.pipeline_mode<synchronous>, transform_indices = @transform_0, window_bounds = array<i64: 256, 1152>}, {pipeline_mode = #tpu.pipeline_mode<synchronous>, transform_indices = @transform_1, window_bounds = array<i64: 256, 1>}, {transform_indices = @transform_2, window_bounds = array<i64: 1152, 8>}, {transform_indices = @transform_3, window_bounds = array<i64: 256, 8>}]} {
    %c0 = arith.constant 0 : index
    %c0_0 = arith.constant 0 : index
    %0 = vector.load %arg1[%c0, %c0_0] : memref<256x1152xbf16, #tpu.memory_space<vmem>>, vector<256x1152xbf16>
    %c0_1 = arith.constant 0 : index
    %c0_2 = arith.constant 0 : index
    %1 = vector.load %arg3[%c0_1, %c0_2] : memref<1152x8xbf16, #tpu.memory_space<vmem>>, vector<1152x8xbf16>
    %cst = arith.constant dense<0.000000e+00> : vector<256x8xf32>
    %2 = tpu.matmul %0, %1, %cst {dimension_numbers = #tpu.dot_dimension_numbers<[1], [0], [0], [1], [0, 0, 1, 1], [], []>} : vector<256x1152xbf16>, vector<1152x8xbf16>, vector<256x8xf32> -> vector<256x8xf32>
    %c0_3 = arith.constant 0 : index
    %c0_4 = arith.constant 0 : index
    %3 = vector.load %arg2[%c0_3, %c0_4] : memref<256x1xf32, #tpu.memory_space<vmem>>, vector<256x1xf32>
    %4 = vector.broadcast %3 : vector<256x1xf32> to vector<256x8xf32>
    %5 = arith.addf %2, %4 : vector<256x8xf32>
    %cst_5 = arith.constant 0.000000e+00 : f32
    %6 = vector.broadcast %cst_5 : f32 to vector<256x8xf32>
    %7 = arith.maximumf %5, %6 : vector<256x8xf32>
    %8 = arith.truncf %7 : vector<256x8xf32> to vector<256x8xbf16>
    %c0_6 = arith.constant 0 : index
    %c0_7 = arith.constant 0 : index
    %9 = vector.load %arg4[%c0_6, %c0_7] : memref<256x8xbf16, #tpu.memory_space<vmem>>, vector<256x8xbf16>
    tpu.vector_store %arg4[%c0_6, %c0_7], %8 {strides = array<i32>} : memref<256x8xbf16, #tpu.memory_space<vmem>>, vector<256x8xbf16>,
    return
  }
  func.func @transform_0(%arg0: i32) -> (i32, i32) {
    %c0_i32 = arith.constant 0 : i32
    %c0_i32_0 = arith.constant 0 : i32
    %c0_i32_1 = arith.constant 0 : i32
    return %c0_i32, %c0_i32_0 : i32, i32
  }
  func.func @transform_1(%arg0: i32) -> (i32, i32) {
    %c0_i32 = arith.constant 0 : i32
    %c0_i32_0 = arith.constant 0 : i32
    %c0_i32_1 = arith.constant 0 : i32
    return %c0_i32, %c0_i32_0 : i32, i32
  }
  func.func @transform_2(%arg0: i32) -> (i32, i32) {
    %c0_i32 = arith.constant 0 : i32
    %c0_i32_0 = arith.constant 0 : i32
    return %c0_i32, %arg0 : i32, i32
  }
  func.func @transform_3(%arg0: i32) -> (i32, i32) {
    %c0_i32 = arith.constant 0 : i32
    %c0_i32_0 = arith.constant 0 : i32
    return %c0_i32, %arg0 : i32, i32
  }
}

</mosaic_0001>

<llo_original>
// kernel: _lambda_.5
$region0: #{_lambda_.5}
  #allocation0 [shape = 'u32[]', space=smem, size = 0x4, offset = 0x4, fixed_abs, tag = 'smem constant byte address 0x4 - core index']
  #allocation1 [shape = 'u32[144,128]{1,0:T(1,128)}', space=vmem, size = 0x12000, scoped, tag = 'internal scratch']
  %s0 = inlined_call_operand.vmem [shape: bf16[16,32], index: 0, kind: input, shape index: {}]
  %s1 = inlined_call_operand.vmem [shape: f32[16,1], index: 1, kind: input, shape index: {}]
  %s2 = inlined_call_operand.vmem [shape: bf16[32,2048], index: 2, kind: input, shape index: {}]
  %s3 = inlined_call_operand.vmem [shape: bf16[16,2048], index: 3, kind: output, shape index: {}]
  %s4 = sld [smem:[#allocation0]]
  $region87: #{_lambda_.5} parent=0
    _
  %s6 = ssub.s32 1, %s4
  %s7 = scalar_select 0, %s6, %s4
  $region1: #{_lambda_.5} parent=0
    #allocation2 [shape = 'u8[65536]{0}', space=vmem, size = 0x10000, scoped, tag = 'input window, operand 2']
    #allocation3 [shape = 'u8[32768]{0}', space=vmem, size = 0x8000, scoped, tag = 'output window, operand 0']
    loop: start=0, step=1, limit=6
    $region2: #{_lambda_.5} parent=1 // loop_pre_header
      _
    $region3: #{_lambda_.5} parent=1 // loop_header
      %s9 = sphi 0, %s13
      %p10 = scmp.ge.s32.totalorder %s9, 6
      %s17 = sphi 0, %s17
      %s19 = sphi 0, %s17
      %s20 = sphi 0, %s19
      %s34 = sphi 0, %s20
      %s38 = sphi 0, %s38
      %s40 = sphi 0, %s38
      %s41 = sphi 0, %s40
      %s55 = sphi 0, %s41
      %s61 = sphi 0, %s63
      %s64 = sphi 0, %s61
      %s65 = sphi 0, %s64
      %s81 = sphi 0, %s65
      %s87 = sphi 0, %s89
      %s90 = sphi 0, %s87
      %s91 = sphi 0, %s90
      %s107 = sphi 0, %s91
    $region4: #{_lambda_.5} parent=1 // loop_header_branch
      %12 = sbr.rel (%p10) target = $region8
    $region5: #{_lambda_.5} parent=1 // loop_body
      %s14 = ssub.s32 %s9, 1
      %s15 = ssub.s32 %s9, 2
      %s16 = sadd.s32 %s9, 1
      %s18 = sadd.s32 %s17, 1
      %p21 = scmp.eq.s32.totalorder %s9, 3
      %p22 = scmp.ne.s32.totalorder %s17, %s19
      %p23 = scmp.eq.s32.totalorder %s9, 0
      %p24 = por %p22, %p23
      %p25 = scmp.ne.s32.totalorder %s17, %s19
      %p26 = scmp.eq.s32.totalorder %s14, 3
      %p27 = por %p25, %p26
      %p28 = scmp.ne.s32.totalorder %s19, %s20
      %p29 = scmp.eq.s32.totalorder %s14, 0
      %p30 = por %p28, %p29
      %p31 = scmp.ne.s32.totalorder %s19, %s20
      %p32 = scmp.eq.s32.totalorder %s15, 3
      %p33 = por %p31, %p32
      %p35 = scmp.ne.s32.totalorder %s20, %s34
      %p36 = scmp.eq.s32.totalorder %s15, 0
      %p37 = por %p35, %p36
      %s39 = sadd.s32 %s38, 1
      %p42 = scmp.eq.s32.totalorder %s9, 3
      %p43 = scmp.ne.s32.totalorder %s38, %s40
      %p44 = scmp.eq.s32.totalorder %s9, 0
      %p45 = por %p43, %p44
      %p46 = scmp.ne.s32.totalorder %s38, %s40
      %p47 = scmp.eq.s32.totalorder %s14, 3
      %p48 = por %p46, %p47
      %p49 = scmp.ne.s32.totalorder %s40, %s41
      %p50 = scmp.eq.s32.totalorder %s14, 0
      %p51 = por %p49, %p50
      %p52 = scmp.ne.s32.totalorder %s40, %s41
      %p53 = scmp.eq.s32.totalorder %s15, 3
      %p54 = por %p52, %p53
      %p56 = scmp.ne.s32.totalorder %s41, %s55
      %p57 = scmp.eq.s32.totalorder %s15, 0
      %p58 = por %p56, %p57
      %s59 = ssub.s32 %s9, %s16
      %p60 = scmp.eq.s32.totalorder %s59, 0
      %s62 = sadd.s32 %s61, 1
      %s63 = scalar_select %p60, %s61, %s62
      %p66 = pneg %p60
      %p67 = scmp.eq.s32.totalorder %s9, 3
      %p68 = por %p66, %p67
      %p69 = scmp.ne.s32.totalorder %s61, %s64
      %p70 = scmp.eq.s32.totalorder %s9, 0
      %p71 = por %p69, %p70
      %p72 = scmp.ne.s32.totalorder %s61, %s64
      %p73 = scmp.eq.s32.totalorder %s14, 3
      %p74 = por %p72, %p73
      %p75 = scmp.ne.s32.totalorder %s64, %s65
      %p76 = scmp.eq.s32.totalorder %s14, 0
      %p77 = por %p75, %p76
      %p78 = scmp.ne.s32.totalorder %s64, %s65
      %p79 = scmp.eq.s32.totalorder %s15, 3
      %p80 = por %p78, %p79
      %p82 = scmp.ne.s32.totalorder %s65, %s81
      %p83 = scmp.eq.s32.totalorder %s15, 0
      %p84 = por %p82, %p83
      %s85 = ssub.s32 %s9, %s16
      %p86 = scmp.eq.s32.totalorder %s85, 0
      %s88 = sadd.s32 %s87, 1
      %s89 = scalar_select %p86, %s87, %s88
      %p92 = pneg %p86
      %p93 = scmp.eq.s32.totalorder %s9, 3
      %p94 = por %p92, %p93
      %p95 = scmp.ne.s32.totalorder %s87, %s90
      %p96 = scmp.eq.s32.totalorder %s9, 0
      %p97 = por %p95, %p96
      %p98 = scmp.ne.s32.totalorder %s87, %s90
      %p99 = scmp.eq.s32.totalorder %s14, 3
      %p100 = por %p98, %p99
      %p101 = scmp.ne.s32.totalorder %s90, %s91
      %p102 = scmp.eq.s32.totalorder %s14, 0
      %p103 = por %p101, %p102
      %p104 = scmp.ne.s32.totalorder %s90, %s91
      %p105 = scmp.eq.s32.totalorder %s15, 3
      %p106 = por %p104, %p105
      %p108 = scmp.ne.s32.totalorder %s91, %s107
      %p109 = scmp.eq.s32.totalorder %s15, 0
      %p110 = por %p108, %p109
      %p111 = scmp.le.s32.totalorder 1, %s9
      %p112 = scmp.lt.s32.totalorder %s9, 5
      %p113 = pnand %p111, %p112
      %p114 = pneg %p113
      // Predicated region
      $region9: #{_lambda_.5} parent=5 // pred_check
        _
      $region10: #{_lambda_.5} parent=5 // pred_check_branch
        %116 = sbr.rel (%p113) target = $region12
      $region11: #{_lambda_.5} parent=5 // pred_region
        %s117 = ssub.s32 %s9, 1
        // Predicated region
        $region13: #{_lambda_.5} parent=11 // pred_check
          %p118 = pneg %p30
        $region14: #{_lambda_.5} parent=11 // pred_check_branch
          %120 = sbr.rel (%p118) target = $region16
        $region15: #{_lambda_.5} parent=11 // pred_region
          _
        $region16: #{_lambda_.5} parent=11 // pred_fallthru
          _
        // Predicated region
        $region17: #{_lambda_.5} parent=11 // pred_check
          %p121 = pneg %p51
        $region18: #{_lambda_.5} parent=11 // pred_check_branch
          %123 = sbr.rel (%p121) target = $region20
        $region19: #{_lambda_.5} parent=11 // pred_region
          _
        $region20: #{_lambda_.5} parent=11 // pred_fallthru
          _
      $region12: #{_lambda_.5} parent=5 // pred_fallthru
        _
      %p124 = scmp.lt.s32.totalorder %s9, 4
      // Predicated region
      $region21: #{_lambda_.5} parent=5 // pred_check
        %p125 = pneg %p124
      $region22: #{_lambda_.5} parent=5 // pred_check_branch
        %127 = sbr.rel (%p125) target = $region24
      $region23: #{_lambda_.5} parent=5 // pred_region
        // Predicated region
        $region25: #{_lambda_.5} parent=23 // pred_check
          %p128 = pneg %p71
        $region26: #{_lambda_.5} parent=23 // pred_check_branch
          %130 = sbr.rel (%p128) target = $region28
        $region27: #{_lambda_.5} parent=23 // pred_region
          %s131 = sand.u32 %s61, 1
          %s132 = sand.u32 %s61, 1
          %s133 = smul.addr %s132, 64
          %s134 = scalar_lea.vmem [#allocation2], %s133
          %s135 = smul.u32 4, %s9
          %s136 = smul.addr %s135, 4
          %s137 = scalar_lea.vmem %s2, %s136
          // Predicated region
          $region29: #{_lambda_.5} parent=27 // pred_check
            _
          $region30: #{_lambda_.5} parent=27 // pred_check_branch
            %139 = sbr.rel (0) target = $region32
          $region31: #{_lambda_.5} parent=27 // pred_region
            // Predicated region
            $region33: #{_lambda_.5} parent=31 // pred_check
              _
            $region34: #{_lambda_.5} parent=31 // pred_check_branch
              %141 = sbr.rel (0) target = $region36
            $region35: #{_lambda_.5} parent=31 // pred_region
              loop: start=0, step=1, limit=1
              $region37: #{_lambda_.5} parent=35 // loop_pre_header
                _
              $region38: #{_lambda_.5} parent=35 // loop_header
                %s143 = sphi 0, %s147
                %p144 = scmp.ge.s32.totalorder %s143, 1
                %s148 = sphi %s137, %s137
                %s149 = sphi %s134, %s134
              $region39: #{_lambda_.5} parent=35 // loop_header_branch
                %146 = sbr.rel (%p144) target = $region43
              $region40: #{_lambda_.5} parent=35 // loop_body
                %v150 = vld [vmem:[%s148] sm:$0xff]
                %151 = vst [vmem:[%s149] sm:$0xff] %v150
                %v152 = vld [vmem:[%s148 + $0x8] sm:$0xff]
                %153 = vst [vmem:[%s149 + $0x8] sm:$0xff] %v152
                %v154 = vld [vmem:[%s148 + $0x40] sm:$0xff]
                %155 = vst [vmem:[%s149 + $0x10] sm:$0xff] %v154
                %v156 = vld [vmem:[%s148 + $0x48] sm:$0xff]
                %157 = vst [vmem:[%s149 + $0x18] sm:$0xff] %v156
                %v158 = vld [vmem:[%s148 + $0x80] sm:$0xff]
                %159 = vst [vmem:[%s149 + $0x20] sm:$0xff] %v158
                %v160 = vld [vmem:[%s148 + $0x88] sm:$0xff]
                %161 = vst [vmem:[%s149 + $0x28] sm:$0xff] %v160
                %v162 = vld [vmem:[%s148 + $0xc0] sm:$0xff]
                %163 = vst [vmem:[%s149 + $0x30] sm:$0xff] %v162
                %v164 = vld [vmem:[%s148 + $0xc8] sm:$0xff]
                %165 = vst [vmem:[%s149 + $0x38] sm:$0xff] %v164
              $region41: #{_lambda_.5} parent=35 // loop_footer
                %s147 = sadd.s32 1, %s143
              $region42: #{_lambda_.5} parent=35 // loop_footer_branch
                %142 = sbr.rel target = $region38
              $region43: #{_lambda_.5} parent=35 // loop_exit
                _
            $region36: #{_lambda_.5} parent=31 // pred_fallthru
              _
            // Predicated region
            $region44: #{_lambda_.5} parent=31 // pred_check
              _
            $region45: #{_lambda_.5} parent=31 // pred_check_branch
              %167 = sbr.rel target = $region47
            $region46: #{_lambda_.5} parent=31 // pred_region
              _
            $region47: #{_lambda_.5} parent=31 // pred_fallthru
              _
          $region32: #{_lambda_.5} parent=27 // pred_fallthru
            _
          %168 = vnop
        $region28: #{_lambda_.5} parent=23 // pred_fallthru
          _
      $region24: #{_lambda_.5} parent=5 // pred_fallthru
        _
      %p169 = scmp.le.s32.totalorder 1, %s9
      %p170 = scmp.lt.s32.totalorder %s9, 5
      %p171 = pnand %p169, %p170
      %p172 = pneg %p171
      // Predicated region
      $region48: #{_lambda_.5} parent=5 // pred_check
        _
      $region49: #{_lambda_.5} parent=5 // pred_check_branch
        %174 = sbr.rel (%p171) target = $region51
      $region50: #{_lambda_.5} parent=5 // pred_region
        %s175 = ssub.s32 %s9, 1
        %s176 = sand.u32 %s64, 1
        %s177 = sand.u32 %s64, 1
        %s178 = smul.addr %s177, 64
        %s179 = scalar_lea.vmem [#allocation2], %s178
        // Predicated region
        $region52: #{_lambda_.5} parent=50 // pred_check
          %p180 = pneg %p77
        $region53: #{_lambda_.5} parent=50 // pred_check_branch
          %182 = sbr.rel (%p180) target = $region55
        $region54: #{_lambda_.5} parent=50 // pred_region
          _
        $region55: #{_lambda_.5} parent=50 // pred_fallthru
          _
        %p183 = pneg %p30
        %p184 = pneg %p27
        %p185 = pneg %p51
        %p186 = pneg %p48
        %s187 = sand.u32 %s64, 1
        %s188 = sand.u32 %s64, 1
        %s189 = smul.addr %s188, 64
        %s190 = scalar_lea.vmem [#allocation2], %s189
        %p191 = pneg %p77
        %p192 = pneg %p74
        %p193 = pneg %p103
        %p194 = pneg %p100
        %s195 = sand.u32 %s90, 1
        %s196 = sand.u32 %s90, 1
        %s197 = smul.addr %s196, 32
        %s198 = scalar_lea.vmem [#allocation3], %s197
        %s199 = smul.u32 4, %s14
        %s200 = smul.u32 4, %s14
        %v202 = vld [vmem:[%s0] sm:$0xf]
        %v203 = vld [vmem:[%s0 + $0x4] sm:$0xf]
        %v204 = vld [vmem:[%s179] sm:$0xff]
        %v205 = vld [vmem:[%s179 + $0x8] sm:$0xff]
        %v206 = vld [vmem:[%s179 + $0x10] sm:$0xff]
        %v207 = vld [vmem:[%s179 + $0x18] sm:$0xff]
        %v208 = vld [vmem:[%s179 + $0x20] sm:$0xff]
        %v209 = vld [vmem:[%s179 + $0x28] sm:$0xff]
        %v210 = vld [vmem:[%s179 + $0x30] sm:$0xff]
        %v211 = vld [vmem:[%s179 + $0x38] sm:$0xff]
        %v212 = vld [vmem:[%s1] sm:$0xff]
        %v213 = vld [vmem:[%s1 + $0x8] sm:$0xff]
        %215 = vset.pattern.permute.xlu0 0
        %216 = vperm.xlu0 %215, %v212
        %v217 = vpop.permute.xlu0 %216
        %220 = vset.pattern.permute.xlu0 0
        %221 = vperm.xlu0 %220, %v213
        %v222 = vpop.permute.xlu0 %221
        %v226 = vunpack.c.l.b16 %v202
        %v227 = vunpack.c.l.b16 %v203
        %v228 = vpack.c.b16 %v227, %v226
        %v237 = vunpack.c.l.b16 %v204
        %v238 = vunpack.c.h.b16 %v204
        %v239 = vunpack.c.l.b16 %v205
        %v240 = vunpack.c.h.b16 %v205
        %v241 = vunpack.c.l.b16 %v206
        %v242 = vunpack.c.h.b16 %v206
        %v243 = vunpack.c.l.b16 %v207
        %v244 = vunpack.c.h.b16 %v207
        %v245 = vunpack.c.l.b16 %v208
        %v246 = vunpack.c.h.b16 %v208
        %v247 = vunpack.c.l.b16 %v209
        %v248 = vunpack.c.h.b16 %v209
        %v249 = vunpack.c.l.b16 %v210
        %v250 = vunpack.c.h.b16 %v210
        %v251 = vunpack.c.l.b16 %v211
        %v252 = vunpack.c.h.b16 %v211
        %v253 = vpack.c.b16 %v241, %v237
        %v254 = vpack.c.b16 %v242, %v238
        %v255 = vpack.c.b16 %v243, %v239
        %v256 = vpack.c.b16 %v244, %v240
        %v257 = vpack.c.b16 %v249, %v245
        %v258 = vpack.c.b16 %v250, %v246
        %v259 = vpack.c.b16 %v251, %v247
        %v260 = vpack.c.b16 %v252, %v248
        %vm269 = vcmask 261120
        %v271 = vsel %vm269, %v228, 0
        %273 = vmatprep.subr.bf16.mxu0 0
        %274 = vmatpush1.bf16.msra.mxu0 0
        %275 = vmatprep.subr.bf16.mxu0 0
        %276 = vmatpush1.bf16.msra.mxu0 0
        %277 = vmatprep.subr.bf16.mxu0 0
        %278 = vmatpush1.bf16.msra.mxu0 0
        %279 = vmatprep.subr.bf16.mxu0 0
        %280 = vmatpush1.bf16.msra.mxu0 0
        %281 = vmatprep.subr.bf16.mxu0 0
        %282 = vmatpush1.bf16.msra.mxu0 0
        %283 = vmatprep.subr.bf16.mxu0 0
        %284 = vmatpush1.bf16.msra.mxu0 0
        %285 = vmatprep.subr.bf16.mxu0 %v258
        %286 = vmatpush1.bf16.msra.mxu0 %v257
        %287 = vmatprep.subr.bf16.mxu0 %v254
        %288 = vmatpush1.bf16.msra.mxu0 %v253
        %289 = vmatprep.subr.bf16.mxu0 0
        %290 = vmatpush2.bf16.msra.mxu0 0
        %291 = vmatprep.subr.bf16.mxu0 0
        %292 = vmatpush2.bf16.msra.mxu0 0
        %293 = vmatprep.subr.bf16.mxu0 0
        %294 = vmatpush2.bf16.msra.mxu0 0
        %295 = vmatprep.subr.bf16.mxu0 0
        %296 = vmatpush2.bf16.msra.mxu0 0
        %297 = vmatprep.subr.bf16.mxu0 0
        %298 = vmatpush2.bf16.msra.mxu0 0
        %299 = vmatprep.subr.bf16.mxu0 0
        %300 = vmatpush2.bf16.msra.mxu0 0
        %301 = vmatprep.subr.bf16.mxu0 0
        %302 = vmatpush2.bf16.msra.mxu0 0
        %303 = vmatprep.subr.bf16.mxu0 0
        %304 = vmatpush2.bf16.msra.mxu0 0
        %305 = vmatprep.mubr.bf16.mxu0 0
        %306 = vmatmul.mubr.bf16.gmra.mxu0 %v271
        %v307 = vpop.f32.mrf.mxu0
        %v308 = vadd.f32 %v217, %v307
        %v309 = vpop.f32.mrf.mxu0
        %v310 = vadd.f32 %v217, %v309
        %v311 = vpop.f32.mrf.mxu0
        %v312 = vadd.f32 %v222, %v311
        %v313 = vpop.f32.mrf.mxu0
        %v314 = vadd.f32 %v222, %v313
        %315 = vdwg.mxu0
        %316 = vmatprep.subr.bf16.mxu0 0
        %317 = vmatpush1.bf16.msra.mxu0 0
        %318 = vmatprep.subr.bf16.mxu0 0
        %319 = vmatpush1.bf16.msra.mxu0 0
        %320 = vmatprep.subr.bf16.mxu0 0
        %321 = vmatpush1.bf16.msra.mxu0 0
        %322 = vmatprep.subr.bf16.mxu0 0
        %323 = vmatpush1.bf16.msra.mxu0 0
        %324 = vmatprep.subr.bf16.mxu0 0
        %325 = vmatpush1.bf16.msra.mxu0 0
        %326 = vmatprep.subr.bf16.mxu0 0
        %327 = vmatpush1.bf16.msra.mxu0 0
        %328 = vmatprep.subr.bf16.mxu0 %v260
        %329 = vmatpush1.bf16.msra.mxu0 %v259
        %330 = vmatprep.subr.bf16.mxu0 %v256
        %331 = vmatpush1.bf16.msra.mxu0 %v255
        %332 = vmatprep.subr.bf16.mxu0 0
        %333 = vmatpush2.bf16.msra.mxu0 0
        %334 = vmatprep.subr.bf16.mxu0 0
        %335 = vmatpush2.bf16.msra.mxu0 0
        %336 = vmatprep.subr.bf16.mxu0 0
        %337 = vmatpush2.bf16.msra.mxu0 0
        %338 = vmatprep.subr.bf16.mxu0 0
        %339 = vmatpush2.bf16.msra.mxu0 0
        %340 = vmatprep.subr.bf16.mxu0 0
        %341 = vmatpush2.bf16.msra.mxu0 0
        %342 = vmatprep.subr.bf16.mxu0 0
        %343 = vmatpush2.bf16.msra.mxu0 0
        %344 = vmatprep.subr.bf16.mxu0 0
        %345 = vmatpush2.bf16.msra.mxu0 0
        %346 = vmatprep.subr.bf16.mxu0 0
        %347 = vmatpush2.bf16.msra.mxu0 0
        %348 = vmatprep.mubr.bf16.mxu0 0
        %349 = vmatmul.mubr.bf16.gmra.mxu0 %v271
        %v350 = vpop.f32.mrf.mxu0
        %v351 = vadd.f32 %v217, %v350
        %v352 = vpop.f32.mrf.mxu0
        %v353 = vadd.f32 %v217, %v352
        %v354 = vpop.f32.mrf.mxu0
        %v355 = vadd.f32 %v222, %v354
        %v356 = vpop.f32.mrf.mxu0
        %v357 = vadd.f32 %v222, %v356
        %358 = vdwg.mxu0
        %v359 = vmax.f32 %v308, 0.0
        %v360 = vmax.f32 %v310, 0.0
        %v361 = vmax.f32 %v351, 0.0
        %v362 = vmax.f32 %v353, 0.0
        %v363 = vmax.f32 %v312, 0.0
        %v364 = vmax.f32 %v314, 0.0
        %v365 = vmax.f32 %v355, 0.0
        %v366 = vmax.f32 %v357, 0.0
        %v367 = vpack.c.bf16 %v363, %v359
        %v368 = vpack.c.bf16 %v364, %v360
        %v369 = vpack.c.bf16 %v365, %v361
        %v370 = vpack.c.bf16 %v366, %v362
        %v375 = vunpack.c.l.b16 %v367
        %v376 = vunpack.c.l.b16 %v368
        %v377 = vunpack.c.l.b16 %v369
        %v378 = vunpack.c.l.b16 %v370
        %v379 = vunpack.c.h.b16 %v367
        %v380 = vunpack.c.h.b16 %v368
        %v381 = vunpack.c.h.b16 %v369
        %v382 = vunpack.c.h.b16 %v370
        %v383 = vpack.c.b16 %v376, %v375
        %v384 = vpack.c.b16 %v378, %v377
        %v385 = vpack.c.b16 %v380, %v379
        %v386 = vpack.c.b16 %v382, %v381
        %391 = vst [vmem:[%s198] sm:$0xff] %v383
        %392 = vst [vmem:[%s198 + $0x8] sm:$0xff] %v384
        %393 = vst [vmem:[%s198 + $0x10] sm:$0xff] %v385
        %394 = vst [vmem:[%s198 + $0x18] sm:$0xff] %v386
        %s395 = sand.u32 %s90, 1
        %s396 = sand.u32 %s90, 1
        %s397 = smul.addr %s396, 32
        %s398 = scalar_lea.vmem [#allocation3], %s397
        // Predicated region
        $region56: #{_lambda_.5} parent=50 // pred_check
          %p399 = pneg %p100
        $region57: #{_lambda_.5} parent=50 // pred_check_branch
          %401 = sbr.rel (%p399) target = $region59
        $region58: #{_lambda_.5} parent=50 // pred_region
          %s402 = smul.u32 4, %s14
          %s403 = smul.addr %s402, 4
          %s404 = scalar_lea.vmem %s3, %s403
          // Predicated region
          $region60: #{_lambda_.5} parent=58 // pred_check
            _
          $region61: #{_lambda_.5} parent=58 // pred_check_branch
            %406 = sbr.rel (0) target = $region63
          $region62: #{_lambda_.5} parent=58 // pred_region
            // Predicated region
            $region64: #{_lambda_.5} parent=62 // pred_check
              _
            $region65: #{_lambda_.5} parent=62 // pred_check_branch
              %408 = sbr.rel (0) target = $region67
            $region66: #{_lambda_.5} parent=62 // pred_region
              loop: start=0, step=1, limit=1
              $region68: #{_lambda_.5} parent=66 // loop_pre_header
                _
              $region69: #{_lambda_.5} parent=66 // loop_header
                %s410 = sphi 0, %s414
                %p411 = scmp.ge.s32.totalorder %s410, 1
                %s415 = sphi %s398, %s398
                %s416 = sphi %s404, %s404
              $region70: #{_lambda_.5} parent=66 // loop_header_branch
                %413 = sbr.rel (%p411) target = $region74
              $region71: #{_lambda_.5} parent=66 // loop_body
                %v417 = vld [vmem:[%s415] sm:$0xff]
                %418 = vst [vmem:[%s416] sm:$0xff] %v417
                %v419 = vld [vmem:[%s415 + $0x8] sm:$0xff]
                %420 = vst [vmem:[%s416 + $0x8] sm:$0xff] %v419
                %v421 = vld [vmem:[%s415 + $0x10] sm:$0xff]
                %422 = vst [vmem:[%s416 + $0x40] sm:$0xff] %v421
                %v423 = vld [vmem:[%s415 + $0x18] sm:$0xff]
                %424 = vst [vmem:[%s416 + $0x48] sm:$0xff] %v423
              $region72: #{_lambda_.5} parent=66 // loop_footer
                %s414 = sadd.s32 1, %s410
              $region73: #{_lambda_.5} parent=66 // loop_footer_branch
                %409 = sbr.rel target = $region69
              $region74: #{_lambda_.5} parent=66 // loop_exit
                _
            $region67: #{_lambda_.5} parent=62 // pred_fallthru
              _
            // Predicated region
            $region75: #{_lambda_.5} parent=62 // pred_check
              _
            $region76: #{_lambda_.5} parent=62 // pred_check_branch
              %426 = sbr.rel target = $region78
            $region77: #{_lambda_.5} parent=62 // pred_region
              _
            $region78: #{_lambda_.5} parent=62 // pred_fallthru
              _
          $region63: #{_lambda_.5} parent=58 // pred_fallthru
            _
          %427 = vnop
        $region59: #{_lambda_.5} parent=50 // pred_fallthru
          _
      $region51: #{_lambda_.5} parent=5 // pred_fallthru
        _
      %p428 = scmp.le.s32.totalorder 2, %s9
      // Predicated region
      $region79: #{_lambda_.5} parent=5 // pred_check
        %p429 = pneg %p428
      $region80: #{_lambda_.5} parent=5 // pred_check_branch
        %431 = sbr.rel (%p429) target = $region82
      $region81: #{_lambda_.5} parent=5 // pred_region
        %s432 = ssub.s32 %s9, 2
        // Predicated region
        $region83: #{_lambda_.5} parent=81 // pred_check
          %p433 = pneg %p106
        $region84: #{_lambda_.5} parent=81 // pred_check_branch
          %435 = sbr.rel (%p433) target = $region86
        $region85: #{_lambda_.5} parent=81 // pred_region
          %s436 = sand.u32 %s91, 1
          %s437 = sand.u32 %s91, 1
          %s438 = smul.addr %s437, 32
          %s439 = scalar_lea.vmem [#allocation3], %s438
        $region86: #{_lambda_.5} parent=81 // pred_fallthru
          _
      $region82: #{_lambda_.5} parent=5 // pred_fallthru
        _
    $region6: #{_lambda_.5} parent=1 // loop_footer
      %s13 = sadd.s32 1, %s9
    $region7: #{_lambda_.5} parent=1 // loop_footer_branch
      %8 = sbr.rel target = $region3
    $region8: #{_lambda_.5} parent=1 // loop_exit
      _

// kernel: _lambda_.6
$region0: #{_lambda_.6}
  #allocation0 [shape = 'u32[]', space=smem, size = 0x4, offset = 0x4, fixed_abs, tag = 'smem constant byte address 0x4 - core index']
  #allocation1 [shape = 'u32[144,128]{1,0:T(1,128)}', space=vmem, size = 0x12000, scoped, tag = 'internal scratch']
  %s0 = inlined_call_operand.vmem [shape: bf16[32,144], index: 0, kind: input, shape index: {}]
  %s1 = inlined_call_operand.vmem [shape: f32[32,1], index: 1, kind: input, shape index: {}]
  %s2 = inlined_call_operand.vmem [shape: bf16[144,512], index: 2, kind: input, shape index: {}]
  %s3 = inlined_call_operand.vmem [shape: bf16[32,512], index: 3, kind: output, shape index: {}]
  %s4 = sld [smem:[#allocation0]]
  $region22: #{_lambda_.6} parent=0
    _
  %s6 = ssub.s32 1, %s4
  %s7 = scalar_select 0, %s6, %s4
  // Predicated region
  $region2: #{_lambda_.6} parent=0 // pred_check
    _
  $region3: #{_lambda_.6} parent=0 // pred_check_branch
    %9 = sbr.rel (0) target = $region5
  $region4: #{_lambda_.6} parent=0 // pred_region
    _
  $region5: #{_lambda_.6} parent=0 // pred_fallthru
    _
  // Predicated region
  $region6: #{_lambda_.6} parent=0 // pred_check
    _
  $region7: #{_lambda_.6} parent=0 // pred_check_branch
    %11 = sbr.rel (0) target = $region9
  $region8: #{_lambda_.6} parent=0 // pred_region
    _
  $region9: #{_lambda_.6} parent=0 // pred_fallthru
    _
  // Predicated region
  $region10: #{_lambda_.6} parent=0 // pred_check
    _
  $region11: #{_lambda_.6} parent=0 // pred_check_branch
    %13 = sbr.rel (0) target = $region13
  $region12: #{_lambda_.6} parent=0 // pred_region
    _
  $region13: #{_lambda_.6} parent=0 // pred_fallthru
    _
  %v15 = vld [vmem:[%s0] sm:$0xff]
  %v16 = vld [vmem:[%s0 + $0x8] sm:$0xff]
  %v17 = vld [vmem:[%s0 + $0x10] sm:$0xff]
  %v18 = vld [vmem:[%s0 + $0x18] sm:$0xff]
  %v19 = vld [vmem:[%s2] sm:$0xff]
  %v20 = vld [vmem:[%s2 + $0x8] sm:$0xff]
  %v21 = vld [vmem:[%s2 + $0x10] sm:$0xff]
  %v22 = vld [vmem:[%s2 + $0x18] sm:$0xff]
  %v23 = vld [vmem:[%s2 + $0x20] sm:$0xff]
  %v24 = vld [vmem:[%s2 + $0x28] sm:$0xff]
  %v25 = vld [vmem:[%s2 + $0x30] sm:$0xff]
  %v26 = vld [vmem:[%s2 + $0x38] sm:$0xff]
  %v27 = vld [vmem:[%s2 + $0x40] sm:$0xff]
  %v28 = vld [vmem:[%s2 + $0x48] sm:$0xff]
  %v29 = vld [vmem:[%s2 + $0x50] sm:$0xff]
  %v30 = vld [vmem:[%s2 + $0x58] sm:$0xff]
  %v31 = vld [vmem:[%s2 + $0x60] sm:$0xff]
  %v32 = vld [vmem:[%s2 + $0x68] sm:$0xff]
  %v33 = vld [vmem:[%s2 + $0x70] sm:$0xff]
  %v34 = vld [vmem:[%s2 + $0x78] sm:$0xff]
  %v35 = vld [vmem:[%s2 + $0x80] sm:$0xff]
  %v36 = vld [vmem:[%s2 + $0x88] sm:$0xff]
  %v37 = vld [vmem:[%s2 + $0x90] sm:$0xff]
  %v38 = vld [vmem:[%s2 + $0x98] sm:$0xff]
  %v39 = vld [vmem:[%s2 + $0xa0] sm:$0xff]
  %v40 = vld [vmem:[%s2 + $0xa8] sm:$0xff]
  %v41 = vld [vmem:[%s2 + $0xb0] sm:$0xff]
  %v42 = vld [vmem:[%s2 + $0xb8] sm:$0xff]
  %v43 = vld [vmem:[%s2 + $0xc0] sm:$0xff]
  %v44 = vld [vmem:[%s2 + $0xc8] sm:$0xff]
  %v45 = vld [vmem:[%s2 + $0xd0] sm:$0xff]
  %v46 = vld [vmem:[%s2 + $0xd8] sm:$0xff]
  %v47 = vld [vmem:[%s2 + $0xe0] sm:$0xff]
  %v48 = vld [vmem:[%s2 + $0xe8] sm:$0xff]
  %v49 = vld [vmem:[%s2 + $0xf0] sm:$0xff]
  %v50 = vld [vmem:[%s2 + $0xf8] sm:$0xff]
  %v51 = vld [vmem:[%s2 + $0x100] sm:$0xff]
  %v52 = vld [vmem:[%s2 + $0x108] sm:$0xff]
  %v53 = vld [vmem:[%s2 + $0x110] sm:$0xff]
  %v54 = vld [vmem:[%s2 + $0x118] sm:$0xff]
  %v55 = vld [vmem:[%s1] sm:$0xff]
  %v56 = vld [vmem:[%s1 + $0x8] sm:$0xff]
  %v57 = vld [vmem:[%s1 + $0x10] sm:$0xff]
  %v58 = vld [vmem:[%s1 + $0x18] sm:$0xff]
  %60 = vset.pattern.permute.xlu0 0
  %61 = vperm.xlu0 %60, %v55
  %v62 = vpop.permute.xlu0 %61
  %65 = vset.pattern.permute.xlu0 0
  %66 = vperm.xlu0 %65, %v56
  %v67 = vpop.permute.xlu0 %66
  %70 = vset.pattern.permute.xlu0 0
  %71 = vperm.xlu0 %70, %v57
  %v72 = vpop.permute.xlu0 %71
  %75 = vset.pattern.permute.xlu0 0
  %76 = vperm.xlu0 %75, %v58
  %v77 = vpop.permute.xlu0 %76
  %v83 = vunpack.c.l.b16 %v15
  %v84 = vunpack.c.h.b16 %v15
  %v85 = vunpack.c.l.b16 %v16
  %v86 = vunpack.c.h.b16 %v16
  %v87 = vunpack.c.l.b16 %v17
  %v88 = vunpack.c.h.b16 %v17
  %v89 = vunpack.c.l.b16 %v18
  %v90 = vunpack.c.h.b16 %v18
  %v91 = vpack.c.b16 %v85, %v83
  %v92 = vpack.c.b16 %v86, %v84
  %v93 = vpack.c.b16 %v89, %v87
  %v94 = vpack.c.b16 %v90, %v88
  %v133 = vunpack.c.l.b16 %v19
  %v134 = vunpack.c.h.b16 %v19
  %v135 = vunpack.c.l.b16 %v20
  %v136 = vunpack.c.h.b16 %v20
  %v137 = vunpack.c.l.b16 %v21
  %v138 = vunpack.c.h.b16 %v21
  %v139 = vunpack.c.l.b16 %v22
  %v140 = vunpack.c.h.b16 %v22
  %v141 = vunpack.c.l.b16 %v23
  %v142 = vunpack.c.h.b16 %v23
  %v143 = vunpack.c.l.b16 %v24
  %v144 = vunpack.c.h.b16 %v24
  %v145 = vunpack.c.l.b16 %v25
  %v146 = vunpack.c.h.b16 %v25
  %v147 = vunpack.c.l.b16 %v26
  %v148 = vunpack.c.h.b16 %v26
  %v149 = vunpack.c.l.b16 %v27
  %v150 = vunpack.c.h.b16 %v27
  %v151 = vunpack.c.l.b16 %v28
  %v152 = vunpack.c.h.b16 %v28
  %v153 = vunpack.c.l.b16 %v29
  %v154 = vunpack.c.h.b16 %v29
  %v155 = vunpack.c.l.b16 %v30
  %v156 = vunpack.c.h.b16 %v30
  %v157 = vunpack.c.l.b16 %v31
  %v158 = vunpack.c.h.b16 %v31
  %v159 = vunpack.c.l.b16 %v32
  %v160 = vunpack.c.h.b16 %v32
  %v161 = vunpack.c.l.b16 %v33
  %v162 = vunpack.c.h.b16 %v33
  %v163 = vunpack.c.l.b16 %v34
  %v164 = vunpack.c.h.b16 %v34
  %v165 = vunpack.c.l.b16 %v35
  %v166 = vunpack.c.h.b16 %v35
  %v167 = vunpack.c.l.b16 %v36
  %v168 = vunpack.c.h.b16 %v36
  %v169 = vunpack.c.l.b16 %v37
  %v170 = vunpack.c.h.b16 %v37
  %v171 = vunpack.c.l.b16 %v38
  %v172 = vunpack.c.h.b16 %v38
  %v173 = vunpack.c.l.b16 %v39
  %v174 = vunpack.c.h.b16 %v39
  %v175 = vunpack.c.l.b16 %v40
  %v176 = vunpack.c.h.b16 %v40
  %v177 = vunpack.c.l.b16 %v41
  %v178 = vunpack.c.h.b16 %v41
  %v179 = vunpack.c.l.b16 %v42
  %v180 = vunpack.c.h.b16 %v42
  %v181 = vunpack.c.l.b16 %v43
  %v182 = vunpack.c.h.b16 %v43
  %v183 = vunpack.c.l.b16 %v44
  %v184 = vunpack.c.h.b16 %v44
  %v185 = vunpack.c.l.b16 %v45
  %v186 = vunpack.c.h.b16 %v45
  %v187 = vunpack.c.l.b16 %v46
  %v188 = vunpack.c.h.b16 %v46
  %v189 = vunpack.c.l.b16 %v47
  %v190 = vunpack.c.h.b16 %v47
  %v191 = vunpack.c.l.b16 %v48
  %v192 = vunpack.c.h.b16 %v48
  %v193 = vunpack.c.l.b16 %v49
  %v194 = vunpack.c.h.b16 %v49
  %v195 = vunpack.c.l.b16 %v50
  %v196 = vunpack.c.h.b16 %v50
  %v197 = vunpack.c.l.b16 %v51
  %v198 = vunpack.c.h.b16 %v51
  %v199 = vunpack.c.l.b16 %v52
  %v200 = vunpack.c.h.b16 %v52
  %v201 = vunpack.c.l.b16 %v53
  %v202 = vunpack.c.h.b16 %v53
  %v203 = vunpack.c.l.b16 %v54
  %v204 = vunpack.c.h.b16 %v54
  %v205 = vpack.c.b16 %v137, %v133
  %v206 = vpack.c.b16 %v138, %v134
  %v207 = vpack.c.b16 %v139, %v135
  %v208 = vpack.c.b16 %v140, %v136
  %v209 = vpack.c.b16 %v145, %v141
  %v210 = vpack.c.b16 %v146, %v142
  %v211 = vpack.c.b16 %v147, %v143
  %v212 = vpack.c.b16 %v148, %v144
  %v213 = vpack.c.b16 %v153, %v149
  %v214 = vpack.c.b16 %v154, %v150
  %v215 = vpack.c.b16 %v155, %v151
  %v216 = vpack.c.b16 %v156, %v152
  %v217 = vpack.c.b16 %v161, %v157
  %v218 = vpack.c.b16 %v162, %v158
  %v219 = vpack.c.b16 %v163, %v159
  %v220 = vpack.c.b16 %v164, %v160
  %v221 = vpack.c.b16 %v169, %v165
  %v222 = vpack.c.b16 %v170, %v166
  %v223 = vpack.c.b16 %v171, %v167
  %v224 = vpack.c.b16 %v172, %v168
  %v225 = vpack.c.b16 %v177, %v173
  %v226 = vpack.c.b16 %v178, %v174
  %v227 = vpack.c.b16 %v179, %v175
  %v228 = vpack.c.b16 %v180, %v176
  %v229 = vpack.c.b16 %v185, %v181
  %v230 = vpack.c.b16 %v186, %v182
  %v231 = vpack.c.b16 %v187, %v183
  %v232 = vpack.c.b16 %v188, %v184
  %v233 = vpack.c.b16 %v193, %v189
  %v234 = vpack.c.b16 %v194, %v190
  %v235 = vpack.c.b16 %v195, %v191
  %v236 = vpack.c.b16 %v196, %v192
  %v237 = vpack.c.b16 %v201, %v197
  %v238 = vpack.c.b16 %v202, %v198
  %v239 = vpack.c.b16 %v203, %v199
  %v240 = vpack.c.b16 %v204, %v200
  %vm277 = vcmask 130048
  %v279 = vsel %vm277, %v92, 0
  %v282 = vsel %vm277, %v94, 0
  %284 = vmatprep.subr.bf16.mxu0 %v234
  %285 = vmatpush1.bf16.msra.mxu0 %v233
  %286 = vmatprep.subr.bf16.mxu0 %v230
  %287 = vmatpush1.bf16.msra.mxu0 %v229
  %288 = vmatprep.subr.bf16.mxu0 %v226
  %289 = vmatpush1.bf16.msra.mxu0 %v225
  %290 = vmatprep.subr.bf16.mxu0 %v222
  %291 = vmatpush1.bf16.msra.mxu0 %v221
  %292 = vmatprep.subr.bf16.mxu0 %v218
  %293 = vmatpush1.bf16.msra.mxu0 %v217
  %294 = vmatprep.subr.bf16.mxu0 %v214
  %295 = vmatpush1.bf16.msra.mxu0 %v213
  %296 = vmatprep.subr.bf16.mxu0 %v210
  %297 = vmatpush1.bf16.msra.mxu0 %v209
  %298 = vmatprep.subr.bf16.mxu0 %v206
  %299 = vmatpush1.bf16.msra.mxu0 %v205
  %300 = vmatprep.subr.bf16.mxu0 0
  %301 = vmatpush2.bf16.msra.mxu0 0
  %302 = vmatprep.subr.bf16.mxu0 0
  %303 = vmatpush2.bf16.msra.mxu0 0
  %304 = vmatprep.subr.bf16.mxu0 0
  %305 = vmatpush2.bf16.msra.mxu0 0
  %306 = vmatprep.subr.bf16.mxu0 0
  %307 = vmatpush2.bf16.msra.mxu0 0
  %308 = vmatprep.subr.bf16.mxu0 0
  %309 = vmatpush2.bf16.msra.mxu0 0
  %310 = vmatprep.subr.bf16.mxu0 0
  %311 = vmatpush2.bf16.msra.mxu0 0
  %312 = vmatprep.subr.bf16.mxu0 0
  %313 = vmatpush2.bf16.msra.mxu0 0
  %314 = vmatprep.subr.bf16.mxu0 %v238
  %315 = vmatpush2.bf16.msra.mxu0 %v237
  %316 = vmatprep.mubr.bf16.mxu0 %v279
  %317 = vmatmul.mubr.bf16.gmra.mxu0 %v91
  %v318 = vpop.f32.mrf.mxu0
  %v319 = vadd.f32 %v62, %v318
  %v320 = vpop.f32.mrf.mxu0
  %v321 = vadd.f32 %v62, %v320
  %v322 = vpop.f32.mrf.mxu0
  %v323 = vadd.f32 %v67, %v322
  %v324 = vpop.f32.mrf.mxu0
  %v325 = vadd.f32 %v67, %v324
  %326 = vmatprep.mubr.bf16.mxu0 %v282
  %327 = vmatmul.mubr.bf16.gmra.mxu0 %v93
  %v328 = vpop.f32.mrf.mxu0
  %v329 = vadd.f32 %v72, %v328
  %v330 = vpop.f32.mrf.mxu0
  %v331 = vadd.f32 %v72, %v330
  %v332 = vpop.f32.mrf.mxu0
  %v333 = vadd.f32 %v77, %v332
  %v334 = vpop.f32.mrf.mxu0
  %v335 = vadd.f32 %v77, %v334
  %336 = vdwg.mxu0
  %337 = vmatprep.subr.bf16.mxu0 %v236
  %338 = vmatpush1.bf16.msra.mxu0 %v235
  %339 = vmatprep.subr.bf16.mxu0 %v232
  %340 = vmatpush1.bf16.msra.mxu0 %v231
  %341 = vmatprep.subr.bf16.mxu0 %v228
  %342 = vmatpush1.bf16.msra.mxu0 %v227
  %343 = vmatprep.subr.bf16.mxu0 %v224
  %344 = vmatpush1.bf16.msra.mxu0 %v223
  %345 = vmatprep.subr.bf16.mxu0 %v220
  %346 = vmatpush1.bf16.msra.mxu0 %v219
  %347 = vmatprep.subr.bf16.mxu0 %v216
  %348 = vmatpush1.bf16.msra.mxu0 %v215
  %349 = vmatprep.subr.bf16.mxu0 %v212
  %350 = vmatpush1.bf16.msra.mxu0 %v211
  %351 = vmatprep.subr.bf16.mxu0 %v208
  %352 = vmatpush1.bf16.msra.mxu0 %v207
  %353 = vmatprep.subr.bf16.mxu0 0
  %354 = vmatpush2.bf16.msra.mxu0 0
  %355 = vmatprep.subr.bf16.mxu0 0
  %356 = vmatpush2.bf16.msra.mxu0 0
  %357 = vmatprep.subr.bf16.mxu0 0
  %358 = vmatpush2.bf16.msra.mxu0 0
  %359 = vmatprep.subr.bf16.mxu0 0
  %360 = vmatpush2.bf16.msra.mxu0 0
  %361 = vmatprep.subr.bf16.mxu0 0
  %362 = vmatpush2.bf16.msra.mxu0 0
  %363 = vmatprep.subr.bf16.mxu0 0
  %364 = vmatpush2.bf16.msra.mxu0 0
  %365 = vmatprep.subr.bf16.mxu0 0
  %366 = vmatpush2.bf16.msra.mxu0 0
  %367 = vmatprep.subr.bf16.mxu0 %v240
  %368 = vmatpush2.bf16.msra.mxu0 %v239
  %369 = vmatprep.mubr.bf16.mxu0 %v279
  %370 = vmatmul.mubr.bf16.gmra.mxu0 %v91
  %v371 = vpop.f32.mrf.mxu0
  %v372 = vadd.f32 %v62, %v371
  %v373 = vpop.f32.mrf.mxu0
  %v374 = vadd.f32 %v62, %v373
  %v375 = vpop.f32.mrf.mxu0
  %v376 = vadd.f32 %v67, %v375
  %v377 = vpop.f32.mrf.mxu0
  %v378 = vadd.f32 %v67, %v377
  %379 = vmatprep.mubr.bf16.mxu0 %v282
  %380 = vmatmul.mubr.bf16.gmra.mxu0 %v93
  %v381 = vpop.f32.mrf.mxu0
  %v382 = vadd.f32 %v72, %v381
  %v383 = vpop.f32.mrf.mxu0
  %v384 = vadd.f32 %v72, %v383
  %v385 = vpop.f32.mrf.mxu0
  %v386 = vadd.f32 %v77, %v385
  %v387 = vpop.f32.mrf.mxu0
  %v388 = vadd.f32 %v77, %v387
  %389 = vdwg.mxu0
  %v390 = vmax.f32 %v319, 0.0
  %v391 = vmax.f32 %v321, 0.0
  %v392 = vmax.f32 %v372, 0.0
  %v393 = vmax.f32 %v374, 0.0
  %v394 = vmax.f32 %v323, 0.0
  %v395 = vmax.f32 %v325, 0.0
  %v396 = vmax.f32 %v376, 0.0
  %v397 = vmax.f32 %v378, 0.0
  %v398 = vmax.f32 %v329, 0.0
  %v399 = vmax.f32 %v331, 0.0
  %v400 = vmax.f32 %v382, 0.0
  %v401 = vmax.f32 %v384, 0.0
  %v402 = vmax.f32 %v333, 0.0
  %v403 = vmax.f32 %v335, 0.0
  %v404 = vmax.f32 %v386, 0.0
  %v405 = vmax.f32 %v388, 0.0
  %v406 = vpack.c.bf16 %v394, %v390
  %v407 = vpack.c.bf16 %v395, %v391
  %v408 = vpack.c.bf16 %v396, %v392
  %v409 = vpack.c.bf16 %v397, %v393
  %v410 = vpack.c.bf16 %v402, %v398
  %v411 = vpack.c.bf16 %v403, %v399
  %v412 = vpack.c.bf16 %v404, %v400
  %v413 = vpack.c.bf16 %v405, %v401
  %v422 = vunpack.c.l.b16 %v406
  %v423 = vunpack.c.l.b16 %v407
  %v424 = vunpack.c.l.b16 %v408
  %v425 = vunpack.c.l.b16 %v409
  %v426 = vunpack.c.h.b16 %v406
  %v427 = vunpack.c.h.b16 %v407
  %v428 = vunpack.c.h.b16 %v408
  %v429 = vunpack.c.h.b16 %v409
  %v430 = vunpack.c.l.b16 %v410
  %v431 = vunpack.c.l.b16 %v411
  %v432 = vunpack.c.l.b16 %v412
  %v433 = vunpack.c.l.b16 %v413
  %v434 = vunpack.c.h.b16 %v410
  %v435 = vunpack.c.h.b16 %v411
  %v436 = vunpack.c.h.b16 %v412
  %v437 = vunpack.c.h.b16 %v413
  %v438 = vpack.c.b16 %v423, %v422
  %v439 = vpack.c.b16 %v425, %v424
  %v440 = vpack.c.b16 %v427, %v426
  %v441 = vpack.c.b16 %v429, %v428
  %v442 = vpack.c.b16 %v431, %v430
  %v443 = vpack.c.b16 %v433, %v432
  %v444 = vpack.c.b16 %v435, %v434
  %v445 = vpack.c.b16 %v437, %v436
  %454 = vst [vmem:[%s3] sm:$0xff] %v438
  %455 = vst [vmem:[%s3 + $0x8] sm:$0xff] %v439
  %456 = vst [vmem:[%s3 + $0x10] sm:$0xff] %v440
  %457 = vst [vmem:[%s3 + $0x18] sm:$0xff] %v441
  %458 = vst [vmem:[%s3 + $0x20] sm:$0xff] %v442
  %459 = vst [vmem:[%s3 + $0x28] sm:$0xff] %v443
  %460 = vst [vmem:[%s3 + $0x30] sm:$0xff] %v444
  %461 = vst [vmem:[%s3 + $0x38] sm:$0xff] %v445
  // Predicated region
  $region14: #{_lambda_.6} parent=0 // pred_check
    _
  $region15: #{_lambda_.6} parent=0 // pred_check_branch
    %463 = sbr.rel (0) target = $region17
  $region16: #{_lambda_.6} parent=0 // pred_region
    _
  $region17: #{_lambda_.6} parent=0 // pred_fallthru
    _
  // Predicated region
  $region18: #{_lambda_.6} parent=0 // pred_check
    _
  $region19: #{_lambda_.6} parent=0 // pred_check_branch
    %465 = sbr.rel (0) target = $region21
  $region20: #{_lambda_.6} parent=0 // pred_region
    _
  $region21: #{_lambda_.6} parent=0 // pred_fallthru
    _

// kernel: _lambda_.7
$region0: #{_lambda_.7}
  #allocation0 [shape = 'u32[]', space=smem, size = 0x4, offset = 0x4, fixed_abs, tag = 'smem constant byte address 0x4 - core index']
  #allocation1 [shape = 'u32[144,128]{1,0:T(1,128)}', space=vmem, size = 0x12000, scoped, tag = 'internal scratch']
  %s0 = inlined_call_operand.vmem [shape: bf16[64,288], index: 0, kind: input, shape index: {}]
  %s1 = inlined_call_operand.vmem [shape: f32[64,1], index: 1, kind: input, shape index: {}]
  %s2 = inlined_call_operand.vmem [shape: bf16[288,128], index: 2, kind: input, shape index: {}]
  %s3 = inlined_call_operand.vmem [shape: bf16[64,128], index: 3, kind: output, shape index: {}]
  %s4 = sld [smem:[#allocation0]]
  $region22: #{_lambda_.7} parent=0
    _
  %s6 = ssub.s32 1, %s4
  %s7 = scalar_select 0, %s6, %s4
  // Predicated region
  $region2: #{_lambda_.7} parent=0 // pred_check
    _
  $region3: #{_lambda_.7} parent=0 // pred_check_branch
    %9 = sbr.rel (0) target = $region5
  $region4: #{_lambda_.7} parent=0 // pred_region
    _
  $region5: #{_lambda_.7} parent=0 // pred_fallthru
    _
  // Predicated region
  $region6: #{_lambda_.7} parent=0 // pred_check
    _
  $region7: #{_lambda_.7} parent=0 // pred_check_branch
    %11 = sbr.rel (0) target = $region9
  $region8: #{_lambda_.7} parent=0 // pred_region
    _
  $region9: #{_lambda_.7} parent=0 // pred_fallthru
    _
  // Predicated region
  $region10: #{_lambda_.7} parent=0 // pred_check
    _
  $region11: #{_lambda_.7} parent=0 // pred_check_branch
    %13 = sbr.rel (0) target = $region13
  $region12: #{_lambda_.7} parent=0 // pred_region
    _
  $region13: #{_lambda_.7} parent=0 // pred_fallthru
    _
  %v15 = vld [vmem:[%s0] sm:$0xff]
  %v16 = vld [vmem:[%s0 + $0x8] sm:$0xf]
  %v17 = vld [vmem:[%s0 + $0xc] sm:$0xff]
  %v18 = vld [vmem:[%s0 + $0x14] sm:$0xf]
  %v19 = vld [vmem:[%s0 + $0x18] sm:$0xff]
  %v20 = vld [vmem:[%s0 + $0x20] sm:$0xf]
  %v21 = vld [vmem:[%s0 + $0x24] sm:$0xff]
  %v22 = vld [vmem:[%s0 + $0x2c] sm:$0xf]
  %v23 = vld [vmem:[%s0 + $0x30] sm:$0xff]
  %v24 = vld [vmem:[%s0 + $0x38] sm:$0xf]
  %v25 = vld [vmem:[%s0 + $0x3c] sm:$0xff]
  %v26 = vld [vmem:[%s0 + $0x44] sm:$0xf]
  %v27 = vld [vmem:[%s0 + $0x48] sm:$0xff]
  %v28 = vld [vmem:[%s0 + $0x50] sm:$0xf]
  %v29 = vld [vmem:[%s0 + $0x54] sm:$0xff]
  %v30 = vld [vmem:[%s0 + $0x5c] sm:$0xf]
  %v31 = vld [vmem:[%s2] sm:$0xf]
  %v32 = vld [vmem:[%s2 + $0x4] sm:$0xf]
  %v33 = vld [vmem:[%s2 + $0x8] sm:$0xf]
  %v34 = vld [vmem:[%s2 + $0xc] sm:$0xf]
  %v35 = vld [vmem:[%s2 + $0x10] sm:$0xf]
  %v36 = vld [vmem:[%s2 + $0x14] sm:$0xf]
  %v37 = vld [vmem:[%s2 + $0x18] sm:$0xf]
  %v38 = vld [vmem:[%s2 + $0x1c] sm:$0xf]
  %v39 = vld [vmem:[%s2 + $0x20] sm:$0xf]
  %v40 = vld [vmem:[%s2 + $0x24] sm:$0xf]
  %v41 = vld [vmem:[%s2 + $0x28] sm:$0xf]
  %v42 = vld [vmem:[%s2 + $0x2c] sm:$0xf]
  %v43 = vld [vmem:[%s2 + $0x30] sm:$0xf]
  %v44 = vld [vmem:[%s2 + $0x34] sm:$0xf]
  %v45 = vld [vmem:[%s2 + $0x38] sm:$0xf]
  %v46 = vld [vmem:[%s2 + $0x3c] sm:$0xf]
  %v47 = vld [vmem:[%s2 + $0x40] sm:$0xf]
  %v48 = vld [vmem:[%s2 + $0x44] sm:$0xf]
  %v49 = vld [vmem:[%s2 + $0x48] sm:$0xf]
  %v50 = vld [vmem:[%s2 + $0x4c] sm:$0xf]
  %v51 = vld [vmem:[%s2 + $0x50] sm:$0xf]
  %v52 = vld [vmem:[%s2 + $0x54] sm:$0xf]
  %v53 = vld [vmem:[%s2 + $0x58] sm:$0xf]
  %v54 = vld [vmem:[%s2 + $0x5c] sm:$0xf]
  %v55 = vld [vmem:[%s2 + $0x60] sm:$0xf]
  %v56 = vld [vmem:[%s2 + $0x64] sm:$0xf]
  %v57 = vld [vmem:[%s2 + $0x68] sm:$0xf]
  %v58 = vld [vmem:[%s2 + $0x6c] sm:$0xf]
  %v59 = vld [vmem:[%s2 + $0x70] sm:$0xf]
  %v60 = vld [vmem:[%s2 + $0x74] sm:$0xf]
  %v61 = vld [vmem:[%s2 + $0x78] sm:$0xf]
  %v62 = vld [vmem:[%s2 + $0x7c] sm:$0xf]
  %v63 = vld [vmem:[%s2 + $0x80] sm:$0xf]
  %v64 = vld [vmem:[%s2 + $0x84] sm:$0xf]
  %v65 = vld [vmem:[%s2 + $0x88] sm:$0xf]
  %v66 = vld [vmem:[%s2 + $0x8c] sm:$0xf]
  %v67 = vld [vmem:[%s1] sm:$0xff]
  %v68 = vld [vmem:[%s1 + $0x8] sm:$0xff]
  %v69 = vld [vmem:[%s1 + $0x10] sm:$0xff]
  %v70 = vld [vmem:[%s1 + $0x18] sm:$0xff]
  %v71 = vld [vmem:[%s1 + $0x20] sm:$0xff]
  %v72 = vld [vmem:[%s1 + $0x28] sm:$0xff]
  %v73 = vld [vmem:[%s1 + $0x30] sm:$0xff]
  %v74 = vld [vmem:[%s1 + $0x38] sm:$0xff]
  %76 = vset.pattern.permute.xlu0 0
  %77 = vperm.xlu0 %76, %v67
  %v78 = vpop.permute.xlu0 %77
  %81 = vset.pattern.permute.xlu0 0
  %82 = vperm.xlu0 %81, %v68
  %v83 = vpop.permute.xlu0 %82
  %86 = vset.pattern.permute.xlu0 0
  %87 = vperm.xlu0 %86, %v69
  %v88 = vpop.permute.xlu0 %87
  %91 = vset.pattern.permute.xlu0 0
  %92 = vperm.xlu0 %91, %v70
  %v93 = vpop.permute.xlu0 %92
  %96 = vset.pattern.permute.xlu0 0
  %97 = vperm.xlu0 %96, %v71
  %v98 = vpop.permute.xlu0 %97
  %101 = vset.pattern.permute.xlu0 0
  %102 = vperm.xlu0 %101, %v72
  %v103 = vpop.permute.xlu0 %102
  %106 = vset.pattern.permute.xlu0 0
  %107 = vperm.xlu0 %106, %v73
  %v108 = vpop.permute.xlu0 %107
  %111 = vset.pattern.permute.xlu0 0
  %112 = vperm.xlu0 %111, %v74
  %v113 = vpop.permute.xlu0 %112
  %v131 = vunpack.c.l.b16 %v15
  %v132 = vunpack.c.h.b16 %v15
  %v133 = vunpack.c.l.b16 %v16
  %v134 = vunpack.c.l.b16 %v17
  %v135 = vunpack.c.h.b16 %v17
  %v136 = vunpack.c.l.b16 %v18
  %v137 = vunpack.c.l.b16 %v19
  %v138 = vunpack.c.h.b16 %v19
  %v139 = vunpack.c.l.b16 %v20
  %v140 = vunpack.c.l.b16 %v21
  %v141 = vunpack.c.h.b16 %v21
  %v142 = vunpack.c.l.b16 %v22
  %v143 = vunpack.c.l.b16 %v23
  %v144 = vunpack.c.h.b16 %v23
  %v145 = vunpack.c.l.b16 %v24
  %v146 = vunpack.c.l.b16 %v25
  %v147 = vunpack.c.h.b16 %v25
  %v148 = vunpack.c.l.b16 %v26
  %v149 = vunpack.c.l.b16 %v27
  %v150 = vunpack.c.h.b16 %v27
  %v151 = vunpack.c.l.b16 %v28
  %v152 = vunpack.c.l.b16 %v29
  %v153 = vunpack.c.h.b16 %v29
  %v154 = vunpack.c.l.b16 %v30
  %v155 = vpack.c.b16 %v134, %v131
  %v156 = vpack.c.b16 %v135, %v132
  %v157 = vpack.c.b16 %v136, %v133
  %v158 = vpack.c.b16 %v140, %v137
  %v159 = vpack.c.b16 %v141, %v138
  %v160 = vpack.c.b16 %v142, %v139
  %v161 = vpack.c.b16 %v146, %v143
  %v162 = vpack.c.b16 %v147, %v144
  %v163 = vpack.c.b16 %v148, %v145
  %v164 = vpack.c.b16 %v152, %v149
  %v165 = vpack.c.b16 %v153, %v150
  %v166 = vpack.c.b16 %v154, %v151
  %v211 = vunpack.c.l.b16 %v31
  %v212 = vunpack.c.l.b16 %v32
  %v213 = vunpack.c.l.b16 %v33
  %v214 = vunpack.c.l.b16 %v34
  %v215 = vunpack.c.l.b16 %v35
  %v216 = vunpack.c.l.b16 %v36
  %v217 = vunpack.c.l.b16 %v37
  %v218 = vunpack.c.l.b16 %v38
  %v219 = vunpack.c.l.b16 %v39
  %v220 = vunpack.c.l.b16 %v40
  %v221 = vunpack.c.l.b16 %v41
  %v222 = vunpack.c.l.b16 %v42
  %v223 = vunpack.c.l.b16 %v43
  %v224 = vunpack.c.l.b16 %v44
  %v225 = vunpack.c.l.b16 %v45
  %v226 = vunpack.c.l.b16 %v46
  %v227 = vunpack.c.l.b16 %v47
  %v228 = vunpack.c.l.b16 %v48
  %v229 = vunpack.c.l.b16 %v49
  %v230 = vunpack.c.l.b16 %v50
  %v231 = vunpack.c.l.b16 %v51
  %v232 = vunpack.c.l.b16 %v52
  %v233 = vunpack.c.l.b16 %v53
  %v234 = vunpack.c.l.b16 %v54
  %v235 = vunpack.c.l.b16 %v55
  %v236 = vunpack.c.l.b16 %v56
  %v237 = vunpack.c.l.b16 %v57
  %v238 = vunpack.c.l.b16 %v58
  %v239 = vunpack.c.l.b16 %v59
  %v240 = vunpack.c.l.b16 %v60
  %v241 = vunpack.c.l.b16 %v61
  %v242 = vunpack.c.l.b16 %v62
  %v243 = vunpack.c.l.b16 %v63
  %v244 = vunpack.c.l.b16 %v64
  %v245 = vunpack.c.l.b16 %v65
  %v246 = vunpack.c.l.b16 %v66
  %v247 = vpack.c.b16 %v212, %v211
  %v248 = vpack.c.b16 %v214, %v213
  %v249 = vpack.c.b16 %v216, %v215
  %v250 = vpack.c.b16 %v218, %v217
  %v251 = vpack.c.b16 %v220, %v219
  %v252 = vpack.c.b16 %v222, %v221
  %v253 = vpack.c.b16 %v224, %v223
  %v254 = vpack.c.b16 %v226, %v225
  %v255 = vpack.c.b16 %v228, %v227
  %v256 = vpack.c.b16 %v230, %v229
  %v257 = vpack.c.b16 %v232, %v231
  %v258 = vpack.c.b16 %v234, %v233
  %v259 = vpack.c.b16 %v236, %v235
  %v260 = vpack.c.b16 %v238, %v237
  %v261 = vpack.c.b16 %v240, %v239
  %v262 = vpack.c.b16 %v242, %v241
  %v263 = vpack.c.b16 %v244, %v243
  %v264 = vpack.c.b16 %v246, %v245
  %vm283 = vcmask 261120
  %v285 = vsel %vm283, %v157, 0
  %v288 = vsel %vm283, %v160, 0
  %v291 = vsel %vm283, %v163, 0
  %v294 = vsel %vm283, %v166, 0
  %296 = vmatprep.subr.bf16.mxu0 0
  %297 = vmatpush1.bf16.msra.mxu0 %v254
  %298 = vmatprep.subr.bf16.mxu0 0
  %299 = vmatpush1.bf16.msra.mxu0 %v253
  %300 = vmatprep.subr.bf16.mxu0 0
  %301 = vmatpush1.bf16.msra.mxu0 %v252
  %302 = vmatprep.subr.bf16.mxu0 0
  %303 = vmatpush1.bf16.msra.mxu0 %v251
  %304 = vmatprep.subr.bf16.mxu0 0
  %305 = vmatpush1.bf16.msra.mxu0 %v250
  %306 = vmatprep.subr.bf16.mxu0 0
  %307 = vmatpush1.bf16.msra.mxu0 %v249
  %308 = vmatprep.subr.bf16.mxu0 0
  %309 = vmatpush1.bf16.msra.mxu0 %v248
  %310 = vmatprep.subr.bf16.mxu0 0
  %311 = vmatpush1.bf16.msra.mxu0 %v247
  %312 = vmatprep.subr.bf16.mxu0 0
  %313 = vmatpush2.bf16.msra.mxu0 %v262
  %314 = vmatprep.subr.bf16.mxu0 0
  %315 = vmatpush2.bf16.msra.mxu0 %v261
  %316 = vmatprep.subr.bf16.mxu0 0
  %317 = vmatpush2.bf16.msra.mxu0 %v260
  %318 = vmatprep.subr.bf16.mxu0 0
  %319 = vmatpush2.bf16.msra.mxu0 %v259
  %320 = vmatprep.subr.bf16.mxu0 0
  %321 = vmatpush2.bf16.msra.mxu0 %v258
  %322 = vmatprep.subr.bf16.mxu0 0
  %323 = vmatpush2.bf16.msra.mxu0 %v257
  %324 = vmatprep.subr.bf16.mxu0 0
  %325 = vmatpush2.bf16.msra.mxu0 %v256
  %326 = vmatprep.subr.bf16.mxu0 0
  %327 = vmatpush2.bf16.msra.mxu0 %v255
  %328 = vmatprep.mubr.bf16.mxu0 %v156
  %329 = vmatmul.mubr.bf16.gmra.mxu0 %v155
  %v330 = vpop.f32.mrf.mxu0
  %v331 = vadd.f32 %v78, %v330
  %v332 = vpop.f32.mrf.mxu0
  %v333 = vpop.f32.mrf.mxu0
  %v334 = vadd.f32 %v83, %v333
  %v335 = vpop.f32.mrf.mxu0
  %336 = vmatprep.mubr.bf16.mxu0 %v159
  %337 = vmatmul.mubr.bf16.gmra.mxu0 %v158
  %v338 = vpop.f32.mrf.mxu0
  %v339 = vadd.f32 %v88, %v338
  %v340 = vpop.f32.mrf.mxu0
  %v341 = vpop.f32.mrf.mxu0
  %v342 = vadd.f32 %v93, %v341
  %v343 = vpop.f32.mrf.mxu0
  %344 = vmatprep.mubr.bf16.mxu0 %v162
  %345 = vmatmul.mubr.bf16.gmra.mxu0 %v161
  %v346 = vpop.f32.mrf.mxu0
  %v347 = vadd.f32 %v98, %v346
  %v348 = vpop.f32.mrf.mxu0
  %v349 = vpop.f32.mrf.mxu0
  %v350 = vadd.f32 %v103, %v349
  %v351 = vpop.f32.mrf.mxu0
  %352 = vmatprep.mubr.bf16.mxu0 %v165
  %353 = vmatmul.mubr.bf16.gmra.mxu0 %v164
  %v354 = vpop.f32.mrf.mxu0
  %v355 = vadd.f32 %v108, %v354
  %v356 = vpop.f32.mrf.mxu0
  %v357 = vpop.f32.mrf.mxu0
  %v358 = vadd.f32 %v113, %v357
  %v359 = vpop.f32.mrf.mxu0
  %360 = vdwg.mxu0
  %361 = vmatprep.subr.bf16.mxu0 0
  %362 = vmatpush1.bf16.msra.mxu0 0
  %363 = vmatprep.subr.bf16.mxu0 0
  %364 = vmatpush1.bf16.msra.mxu0 0
  %365 = vmatprep.subr.bf16.mxu0 0
  %366 = vmatpush1.bf16.msra.mxu0 0
  %367 = vmatprep.subr.bf16.mxu0 0
  %368 = vmatpush1.bf16.msra.mxu0 0
  %369 = vmatprep.subr.bf16.mxu0 0
  %370 = vmatpush1.bf16.msra.mxu0 0
  %371 = vmatprep.subr.bf16.mxu0 0
  %372 = vmatpush1.bf16.msra.mxu0 0
  %373 = vmatprep.subr.bf16.mxu0 0
  %374 = vmatpush1.bf16.msra.mxu0 %v264
  %375 = vmatprep.subr.bf16.mxu0 0
  %376 = vmatpush1.bf16.msra.mxu0 %v263
  %377 = vmatprep.subr.bf16.mxu0 0
  %378 = vmatpush2.bf16.msra.mxu0 0
  %379 = vmatprep.subr.bf16.mxu0 0
  %380 = vmatpush2.bf16.msra.mxu0 0
  %381 = vmatprep.subr.bf16.mxu0 0
  %382 = vmatpush2.bf16.msra.mxu0 0
  %383 = vmatprep.subr.bf16.mxu0 0
  %384 = vmatpush2.bf16.msra.mxu0 0
  %385 = vmatprep.subr.bf16.mxu0 0
  %386 = vmatpush2.bf16.msra.mxu0 0
  %387 = vmatprep.subr.bf16.mxu0 0
  %388 = vmatpush2.bf16.msra.mxu0 0
  %389 = vmatprep.subr.bf16.mxu0 0
  %390 = vmatpush2.bf16.msra.mxu0 0
  %391 = vmatprep.subr.bf16.mxu0 0
  %392 = vmatpush2.bf16.msra.mxu0 0
  %393 = vmatprep.mubr.bf16.mxu0 0
  %394 = vmatmul.mubr.bf16.gmra.mxu0 %v285
  %v395 = vpop.f32.mrf.mxu0
  %v396 = vadd.f32 %v331, %v395
  %v397 = vpop.f32.mrf.mxu0
  %v398 = vpop.f32.mrf.mxu0
  %v399 = vadd.f32 %v334, %v398
  %v400 = vpop.f32.mrf.mxu0
  %401 = vmatprep.mubr.bf16.mxu0 0
  %402 = vmatmul.mubr.bf16.gmra.mxu0 %v288
  %v403 = vpop.f32.mrf.mxu0
  %v404 = vadd.f32 %v339, %v403
  %v405 = vpop.f32.mrf.mxu0
  %v406 = vpop.f32.mrf.mxu0
  %v407 = vadd.f32 %v342, %v406
  %v408 = vpop.f32.mrf.mxu0
  %409 = vmatprep.mubr.bf16.mxu0 0
  %410 = vmatmul.mubr.bf16.gmra.mxu0 %v291
  %v411 = vpop.f32.mrf.mxu0
  %v412 = vadd.f32 %v347, %v411
  %v413 = vpop.f32.mrf.mxu0
  %v414 = vpop.f32.mrf.mxu0
  %v415 = vadd.f32 %v350, %v414
  %v416 = vpop.f32.mrf.mxu0
  %417 = vmatprep.mubr.bf16.mxu0 0
  %418 = vmatmul.mubr.bf16.gmra.mxu0 %v294
  %v419 = vpop.f32.mrf.mxu0
  %v420 = vadd.f32 %v355, %v419
  %v421 = vpop.f32.mrf.mxu0
  %v422 = vpop.f32.mrf.mxu0
  %v423 = vadd.f32 %v358, %v422
  %v424 = vpop.f32.mrf.mxu0
  %425 = vdwg.mxu0
  %v426 = vmax.f32 %v396, 0.0
  %v427 = vmax.f32 %v399, 0.0
  %v428 = vmax.f32 %v404, 0.0
  %v429 = vmax.f32 %v407, 0.0
  %v430 = vmax.f32 %v412, 0.0
  %v431 = vmax.f32 %v415, 0.0
  %v432 = vmax.f32 %v420, 0.0
  %v433 = vmax.f32 %v423, 0.0
  %v434 = vpack.c.bf16 %v427, %v426
  %v435 = vpack.c.bf16 %v429, %v428
  %v436 = vpack.c.bf16 %v431, %v430
  %v437 = vpack.c.bf16 %v433, %v432
  %v442 = vunpack.c.l.b16 %v434
  %v443 = vunpack.c.h.b16 %v434
  %v444 = vunpack.c.l.b16 %v435
  %v445 = vunpack.c.h.b16 %v435
  %v446 = vunpack.c.l.b16 %v436
  %v447 = vunpack.c.h.b16 %v436
  %v448 = vunpack.c.l.b16 %v437
  %v449 = vunpack.c.h.b16 %v437
  %v450 = vpack.c.b16 %v442, %v442
  %v451 = vpack.c.b16 %v443, %v443
  %v452 = vpack.c.b16 %v444, %v444
  %v453 = vpack.c.b16 %v445, %v445
  %v454 = vpack.c.b16 %v446, %v446
  %v455 = vpack.c.b16 %v447, %v447
  %v456 = vpack.c.b16 %v448, %v448
  %v457 = vpack.c.b16 %v449, %v449
  %466 = vst [vmem:[%s3] sm:$0xf] %v450
  %467 = vst [vmem:[%s3 + $0x4] sm:$0xf] %v451
  %468 = vst [vmem:[%s3 + $0x8] sm:$0xf] %v452
  %469 = vst [vmem:[%s3 + $0xc] sm:$0xf] %v453
  %470 = vst [vmem:[%s3 + $0x10] sm:$0xf] %v454
  %471 = vst [vmem:[%s3 + $0x14] sm:$0xf] %v455
  %472 = vst [vmem:[%s3 + $0x18] sm:$0xf] %v456
  %473 = vst [vmem:[%s3 + $0x1c] sm:$0xf] %v457
  // Predicated region
  $region14: #{_lambda_.7} parent=0 // pred_check
    _
  $region15: #{_lambda_.7} parent=0 // pred_check_branch
    %475 = sbr.rel (0) target = $region17
  $region16: #{_lambda_.7} parent=0 // pred_region
    _
  $region17: #{_lambda_.7} parent=0 // pred_fallthru
    _
  // Predicated region
  $region18: #{_lambda_.7} parent=0 // pred_check
    _
  $region19: #{_lambda_.7} parent=0 // pred_check_branch
    %477 = sbr.rel (0) target = $region21
  $region20: #{_lambda_.7} parent=0 // pred_region
    _
  $region21: #{_lambda_.7} parent=0 // pred_fallthru
    _

// kernel: _lambda_.8
$region0: #{_lambda_.8}
  #allocation0 [shape = 'u32[]', space=smem, size = 0x4, offset = 0x4, fixed_abs, tag = 'smem constant byte address 0x4 - core index']
  #allocation1 [shape = 'u32[144,128]{1,0:T(1,128)}', space=vmem, size = 0x12000, scoped, tag = 'internal scratch']
  %s0 = inlined_call_operand.vmem [shape: bf16[128,576], index: 0, kind: input, shape index: {}]
  %s1 = inlined_call_operand.vmem [shape: f32[128,1], index: 1, kind: input, shape index: {}]
  %s2 = inlined_call_operand.vmem [shape: bf16[576,32], index: 2, kind: input, shape index: {}]
  %s3 = inlined_call_operand.vmem [shape: bf16[128,32], index: 3, kind: output, shape index: {}]
  %s4 = sld [smem:[#allocation0]]
  $region22: #{_lambda_.8} parent=0
    _
  %s6 = ssub.s32 1, %s4
  %s7 = scalar_select 0, %s6, %s4
  // Predicated region
  $region2: #{_lambda_.8} parent=0 // pred_check
    _
  $region3: #{_lambda_.8} parent=0 // pred_check_branch
    %9 = sbr.rel (0) target = $region5
  $region4: #{_lambda_.8} parent=0 // pred_region
    _
  $region5: #{_lambda_.8} parent=0 // pred_fallthru
    _
  // Predicated region
  $region6: #{_lambda_.8} parent=0 // pred_check
    _
  $region7: #{_lambda_.8} parent=0 // pred_check_branch
    %11 = sbr.rel (0) target = $region9
  $region8: #{_lambda_.8} parent=0 // pred_region
    _
  $region9: #{_lambda_.8} parent=0 // pred_fallthru
    _
  // Predicated region
  $region10: #{_lambda_.8} parent=0 // pred_check
    _
  $region11: #{_lambda_.8} parent=0 // pred_check_branch
    %13 = sbr.rel (0) target = $region13
  $region12: #{_lambda_.8} parent=0 // pred_region
    _
  $region13: #{_lambda_.8} parent=0 // pred_fallthru
    _
  %v15 = vld [vmem:[%s0] sm:$0xff]
  %v16 = vld [vmem:[%s0 + $0x8] sm:$0xff]
  %v17 = vld [vmem:[%s0 + $0x10] sm:$0xf]
  %v18 = vld [vmem:[%s0 + $0x14] sm:$0xff]
  %v19 = vld [vmem:[%s0 + $0x1c] sm:$0xff]
  %v20 = vld [vmem:[%s0 + $0x24] sm:$0xf]
  %v21 = vld [vmem:[%s0 + $0x28] sm:$0xff]
  %v22 = vld [vmem:[%s0 + $0x30] sm:$0xff]
  %v23 = vld [vmem:[%s0 + $0x38] sm:$0xf]
  %v24 = vld [vmem:[%s0 + $0x3c] sm:$0xff]
  %v25 = vld [vmem:[%s0 + $0x44] sm:$0xff]
  %v26 = vld [vmem:[%s0 + $0x4c] sm:$0xf]
  %v27 = vld [vmem:[%s0 + $0x50] sm:$0xff]
  %v28 = vld [vmem:[%s0 + $0x58] sm:$0xff]
  %v29 = vld [vmem:[%s0 + $0x60] sm:$0xf]
  %v30 = vld [vmem:[%s0 + $0x64] sm:$0xff]
  %v31 = vld [vmem:[%s0 + $0x6c] sm:$0xff]
  %v32 = vld [vmem:[%s0 + $0x74] sm:$0xf]
  %v33 = vld [vmem:[%s0 + $0x78] sm:$0xff]
  %v34 = vld [vmem:[%s0 + $0x80] sm:$0xff]
  %v35 = vld [vmem:[%s0 + $0x88] sm:$0xf]
  %v36 = vld [vmem:[%s0 + $0x8c] sm:$0xff]
  %v37 = vld [vmem:[%s0 + $0x94] sm:$0xff]
  %v38 = vld [vmem:[%s0 + $0x9c] sm:$0xf]
  %v39 = vld [vmem:[%s0 + $0xa0] sm:$0xff]
  %v40 = vld [vmem:[%s0 + $0xa8] sm:$0xff]
  %v41 = vld [vmem:[%s0 + $0xb0] sm:$0xf]
  %v42 = vld [vmem:[%s0 + $0xb4] sm:$0xff]
  %v43 = vld [vmem:[%s0 + $0xbc] sm:$0xff]
  %v44 = vld [vmem:[%s0 + $0xc4] sm:$0xf]
  %v45 = vld [vmem:[%s0 + $0xc8] sm:$0xff]
  %v46 = vld [vmem:[%s0 + $0xd0] sm:$0xff]
  %v47 = vld [vmem:[%s0 + $0xd8] sm:$0xf]
  %v48 = vld [vmem:[%s0 + $0xdc] sm:$0xff]
  %v49 = vld [vmem:[%s0 + $0xe4] sm:$0xff]
  %v50 = vld [vmem:[%s0 + $0xec] sm:$0xf]
  %v51 = vld [vmem:[%s0 + $0xf0] sm:$0xff]
  %v52 = vld [vmem:[%s0 + $0xf8] sm:$0xff]
  %v53 = vld [vmem:[%s0 + $0x100] sm:$0xf]
  %v54 = vld [vmem:[%s0 + $0x104] sm:$0xff]
  %v55 = vld [vmem:[%s0 + $0x10c] sm:$0xff]
  %v56 = vld [vmem:[%s0 + $0x114] sm:$0xf]
  %v57 = vld [vmem:[%s0 + $0x118] sm:$0xff]
  %v58 = vld [vmem:[%s0 + $0x120] sm:$0xff]
  %v59 = vld [vmem:[%s0 + $0x128] sm:$0xf]
  %v60 = vld [vmem:[%s0 + $0x12c] sm:$0xff]
  %v61 = vld [vmem:[%s0 + $0x134] sm:$0xff]
  %v62 = vld [vmem:[%s0 + $0x13c] sm:$0xf]
  %v63 = vld [vmem:[%s2] sm:$0xf]
  %v64 = vld [vmem:[%s2 + $0x4] sm:$0xf]
  %v65 = vld [vmem:[%s2 + $0x8] sm:$0xf]
  %v66 = vld [vmem:[%s2 + $0xc] sm:$0xf]
  %v67 = vld [vmem:[%s2 + $0x10] sm:$0xf]
  %v68 = vld [vmem:[%s2 + $0x14] sm:$0xf]
  %v69 = vld [vmem:[%s2 + $0x18] sm:$0xf]
  %v70 = vld [vmem:[%s2 + $0x1c] sm:$0xf]
  %v71 = vld [vmem:[%s2 + $0x20] sm:$0xf]
  %v72 = vld [vmem:[%s2 + $0x24] sm:$0xf]
  %v73 = vld [vmem:[%s2 + $0x28] sm:$0xf]
  %v74 = vld [vmem:[%s2 + $0x2c] sm:$0xf]
  %v75 = vld [vmem:[%s2 + $0x30] sm:$0xf]
  %v76 = vld [vmem:[%s2 + $0x34] sm:$0xf]
  %v77 = vld [vmem:[%s2 + $0x38] sm:$0xf]
  %v78 = vld [vmem:[%s2 + $0x3c] sm:$0xf]
  %v79 = vld [vmem:[%s2 + $0x40] sm:$0xf]
  %v80 = vld [vmem:[%s2 + $0x44] sm:$0xf]
  %v81 = vld [vmem:[%s2 + $0x48] sm:$0xf]
  %v82 = vld [vmem:[%s2 + $0x4c] sm:$0xf]
  %v83 = vld [vmem:[%s2 + $0x50] sm:$0xf]
  %v84 = vld [vmem:[%s2 + $0x54] sm:$0xf]
  %v85 = vld [vmem:[%s2 + $0x58] sm:$0xf]
  %v86 = vld [vmem:[%s2 + $0x5c] sm:$0xf]
  %v87 = vld [vmem:[%s2 + $0x60] sm:$0xf]
  %v88 = vld [vmem:[%s2 + $0x64] sm:$0xf]
  %v89 = vld [vmem:[%s2 + $0x68] sm:$0xf]
  %v90 = vld [vmem:[%s2 + $0x6c] sm:$0xf]
  %v91 = vld [vmem:[%s2 + $0x70] sm:$0xf]
  %v92 = vld [vmem:[%s2 + $0x74] sm:$0xf]
  %v93 = vld [vmem:[%s2 + $0x78] sm:$0xf]
  %v94 = vld [vmem:[%s2 + $0x7c] sm:$0xf]
  %v95 = vld [vmem:[%s2 + $0x80] sm:$0xf]
  %v96 = vld [vmem:[%s2 + $0x84] sm:$0xf]
  %v97 = vld [vmem:[%s2 + $0x88] sm:$0xf]
  %v98 = vld [vmem:[%s2 + $0x8c] sm:$0xf]
  %v99 = vld [vmem:[%s2 + $0x90] sm:$0xf]
  %v100 = vld [vmem:[%s2 + $0x94] sm:$0xf]
  %v101 = vld [vmem:[%s2 + $0x98] sm:$0xf]
  %v102 = vld [vmem:[%s2 + $0x9c] sm:$0xf]
  %v103 = vld [vmem:[%s2 + $0xa0] sm:$0xf]
  %v104 = vld [vmem:[%s2 + $0xa4] sm:$0xf]
  %v105 = vld [vmem:[%s2 + $0xa8] sm:$0xf]
  %v106 = vld [vmem:[%s2 + $0xac] sm:$0xf]
  %v107 = vld [vmem:[%s2 + $0xb0] sm:$0xf]
  %v108 = vld [vmem:[%s2 + $0xb4] sm:$0xf]
  %v109 = vld [vmem:[%s2 + $0xb8] sm:$0xf]
  %v110 = vld [vmem:[%s2 + $0xbc] sm:$0xf]
  %v111 = vld [vmem:[%s2 + $0xc0] sm:$0xf]
  %v112 = vld [vmem:[%s2 + $0xc4] sm:$0xf]
  %v113 = vld [vmem:[%s2 + $0xc8] sm:$0xf]
  %v114 = vld [vmem:[%s2 + $0xcc] sm:$0xf]
  %v115 = vld [vmem:[%s2 + $0xd0] sm:$0xf]
  %v116 = vld [vmem:[%s2 + $0xd4] sm:$0xf]
  %v117 = vld [vmem:[%s2 + $0xd8] sm:$0xf]
  %v118 = vld [vmem:[%s2 + $0xdc] sm:$0xf]
  %v119 = vld [vmem:[%s2 + $0xe0] sm:$0xf]
  %v120 = vld [vmem:[%s2 + $0xe4] sm:$0xf]
  %v121 = vld [vmem:[%s2 + $0xe8] sm:$0xf]
  %v122 = vld [vmem:[%s2 + $0xec] sm:$0xf]
  %v123 = vld [vmem:[%s2 + $0xf0] sm:$0xf]
  %v124 = vld [vmem:[%s2 + $0xf4] sm:$0xf]
  %v125 = vld [vmem:[%s2 + $0xf8] sm:$0xf]
  %v126 = vld [vmem:[%s2 + $0xfc] sm:$0xf]
  %v127 = vld [vmem:[%s2 + $0x100] sm:$0xf]
  %v128 = vld [vmem:[%s2 + $0x104] sm:$0xf]
  %v129 = vld [vmem:[%s2 + $0x108] sm:$0xf]
  %v130 = vld [vmem:[%s2 + $0x10c] sm:$0xf]
  %v131 = vld [vmem:[%s2 + $0x110] sm:$0xf]
  %v132 = vld [vmem:[%s2 + $0x114] sm:$0xf]
  %v133 = vld [vmem:[%s2 + $0x118] sm:$0xf]
  %v134 = vld [vmem:[%s2 + $0x11c] sm:$0xf]
  %v135 = vld [vmem:[%s1] sm:$0xff]
  %v136 = vld [vmem:[%s1 + $0x8] sm:$0xff]
  %v137 = vld [vmem:[%s1 + $0x10] sm:$0xff]
  %v138 = vld [vmem:[%s1 + $0x18] sm:$0xff]
  %v139 = vld [vmem:[%s1 + $0x20] sm:$0xff]
  %v140 = vld [vmem:[%s1 + $0x28] sm:$0xff]
  %v141 = vld [vmem:[%s1 + $0x30] sm:$0xff]
  %v142 = vld [vmem:[%s1 + $0x38] sm:$0xff]
  %v143 = vld [vmem:[%s1 + $0x40] sm:$0xff]
  %v144 = vld [vmem:[%s1 + $0x48] sm:$0xff]
  %v145 = vld [vmem:[%s1 + $0x50] sm:$0xff]
  %v146 = vld [vmem:[%s1 + $0x58] sm:$0xff]
  %v147 = vld [vmem:[%s1 + $0x60] sm:$0xff]
  %v148 = vld [vmem:[%s1 + $0x68] sm:$0xff]
  %v149 = vld [vmem:[%s1 + $0x70] sm:$0xff]
  %v150 = vld [vmem:[%s1 + $0x78] sm:$0xff]
  %152 = vset.pattern.permute.xlu0 0
  %153 = vperm.xlu0 %152, %v135
  %v154 = vpop.permute.xlu0 %153
  %157 = vset.pattern.permute.xlu0 0
  %158 = vperm.xlu0 %157, %v136
  %v159 = vpop.permute.xlu0 %158
  %162 = vset.pattern.permute.xlu0 0
  %163 = vperm.xlu0 %162, %v137
  %v164 = vpop.permute.xlu0 %163
  %167 = vset.pattern.permute.xlu0 0
  %168 = vperm.xlu0 %167, %v138
  %v169 = vpop.permute.xlu0 %168
  %172 = vset.pattern.permute.xlu0 0
  %173 = vperm.xlu0 %172, %v139
  %v174 = vpop.permute.xlu0 %173
  %177 = vset.pattern.permute.xlu0 0
  %178 = vperm.xlu0 %177, %v140
  %v179 = vpop.permute.xlu0 %178
  %182 = vset.pattern.permute.xlu0 0
  %183 = vperm.xlu0 %182, %v141
  %v184 = vpop.permute.xlu0 %183
  %187 = vset.pattern.permute.xlu0 0
  %188 = vperm.xlu0 %187, %v142
  %v189 = vpop.permute.xlu0 %188
  %192 = vset.pattern.permute.xlu0 0
  %193 = vperm.xlu0 %192, %v143
  %v194 = vpop.permute.xlu0 %193
  %197 = vset.pattern.permute.xlu0 0
  %198 = vperm.xlu0 %197, %v144
  %v199 = vpop.permute.xlu0 %198
  %202 = vset.pattern.permute.xlu0 0
  %203 = vperm.xlu0 %202, %v145
  %v204 = vpop.permute.xlu0 %203
  %207 = vset.pattern.permute.xlu0 0
  %208 = vperm.xlu0 %207, %v146
  %v209 = vpop.permute.xlu0 %208
  %212 = vset.pattern.permute.xlu0 0
  %213 = vperm.xlu0 %212, %v147
  %v214 = vpop.permute.xlu0 %213
  %217 = vset.pattern.permute.xlu0 0
  %218 = vperm.xlu0 %217, %v148
  %v219 = vpop.permute.xlu0 %218
  %222 = vset.pattern.permute.xlu0 0
  %223 = vperm.xlu0 %222, %v149
  %v224 = vpop.permute.xlu0 %223
  %227 = vset.pattern.permute.xlu0 0
  %228 = vperm.xlu0 %227, %v150
  %v229 = vpop.permute.xlu0 %228
  %v279 = vunpack.c.l.b16 %v15
  %v280 = vunpack.c.h.b16 %v15
  %v281 = vunpack.c.l.b16 %v16
  %v282 = vunpack.c.h.b16 %v16
  %v283 = vunpack.c.l.b16 %v17
  %v284 = vunpack.c.l.b16 %v18
  %v285 = vunpack.c.h.b16 %v18
  %v286 = vunpack.c.l.b16 %v19
  %v287 = vunpack.c.h.b16 %v19
  %v288 = vunpack.c.l.b16 %v20
  %v289 = vunpack.c.l.b16 %v21
  %v290 = vunpack.c.h.b16 %v21
  %v291 = vunpack.c.l.b16 %v22
  %v292 = vunpack.c.h.b16 %v22
  %v293 = vunpack.c.l.b16 %v23
  %v294 = vunpack.c.l.b16 %v24
  %v295 = vunpack.c.h.b16 %v24
  %v296 = vunpack.c.l.b16 %v25
  %v297 = vunpack.c.h.b16 %v25
  %v298 = vunpack.c.l.b16 %v26
  %v299 = vunpack.c.l.b16 %v27
  %v300 = vunpack.c.h.b16 %v27
  %v301 = vunpack.c.l.b16 %v28
  %v302 = vunpack.c.h.b16 %v28
  %v303 = vunpack.c.l.b16 %v29
  %v304 = vunpack.c.l.b16 %v30
  %v305 = vunpack.c.h.b16 %v30
  %v306 = vunpack.c.l.b16 %v31
  %v307 = vunpack.c.h.b16 %v31
  %v308 = vunpack.c.l.b16 %v32
  %v309 = vunpack.c.l.b16 %v33
  %v310 = vunpack.c.h.b16 %v33
  %v311 = vunpack.c.l.b16 %v34
  %v312 = vunpack.c.h.b16 %v34
  %v313 = vunpack.c.l.b16 %v35
  %v314 = vunpack.c.l.b16 %v36
  %v315 = vunpack.c.h.b16 %v36
  %v316 = vunpack.c.l.b16 %v37
  %v317 = vunpack.c.h.b16 %v37
  %v318 = vunpack.c.l.b16 %v38
  %v319 = vunpack.c.l.b16 %v39
  %v320 = vunpack.c.h.b16 %v39
  %v321 = vunpack.c.l.b16 %v40
  %v322 = vunpack.c.h.b16 %v40
  %v323 = vunpack.c.l.b16 %v41
  %v324 = vunpack.c.l.b16 %v42
  %v325 = vunpack.c.h.b16 %v42
  %v326 = vunpack.c.l.b16 %v43
  %v327 = vunpack.c.h.b16 %v43
  %v328 = vunpack.c.l.b16 %v44
  %v329 = vunpack.c.l.b16 %v45
  %v330 = vunpack.c.h.b16 %v45
  %v331 = vunpack.c.l.b16 %v46
  %v332 = vunpack.c.h.b16 %v46
  %v333 = vunpack.c.l.b16 %v47
  %v334 = vunpack.c.l.b16 %v48
  %v335 = vunpack.c.h.b16 %v48
  %v336 = vunpack.c.l.b16 %v49
  %v337 = vunpack.c.h.b16 %v49
  %v338 = vunpack.c.l.b16 %v50
  %v339 = vunpack.c.l.b16 %v51
  %v340 = vunpack.c.h.b16 %v51
  %v341 = vunpack.c.l.b16 %v52
  %v342 = vunpack.c.h.b16 %v52
  %v343 = vunpack.c.l.b16 %v53
  %v344 = vunpack.c.l.b16 %v54
  %v345 = vunpack.c.h.b16 %v54
  %v346 = vunpack.c.l.b16 %v55
  %v347 = vunpack.c.h.b16 %v55
  %v348 = vunpack.c.l.b16 %v56
  %v349 = vunpack.c.l.b16 %v57
  %v350 = vunpack.c.h.b16 %v57
  %v351 = vunpack.c.l.b16 %v58
  %v352 = vunpack.c.h.b16 %v58
  %v353 = vunpack.c.l.b16 %v59
  %v354 = vunpack.c.l.b16 %v60
  %v355 = vunpack.c.h.b16 %v60
  %v356 = vunpack.c.l.b16 %v61
  %v357 = vunpack.c.h.b16 %v61
  %v358 = vunpack.c.l.b16 %v62
  %v359 = vpack.c.b16 %v284, %v279
  %v360 = vpack.c.b16 %v285, %v280
  %v361 = vpack.c.b16 %v286, %v281
  %v362 = vpack.c.b16 %v287, %v282
  %v363 = vpack.c.b16 %v288, %v283
  %v364 = vpack.c.b16 %v294, %v289
  %v365 = vpack.c.b16 %v295, %v290
  %v366 = vpack.c.b16 %v296, %v291
  %v367 = vpack.c.b16 %v297, %v292
  %v368 = vpack.c.b16 %v298, %v293
  %v369 = vpack.c.b16 %v304, %v299
  %v370 = vpack.c.b16 %v305, %v300
  %v371 = vpack.c.b16 %v306, %v301
  %v372 = vpack.c.b16 %v307, %v302
  %v373 = vpack.c.b16 %v308, %v303
  %v374 = vpack.c.b16 %v314, %v309
  %v375 = vpack.c.b16 %v315, %v310
  %v376 = vpack.c.b16 %v316, %v311
  %v377 = vpack.c.b16 %v317, %v312
  %v378 = vpack.c.b16 %v318, %v313
  %v379 = vpack.c.b16 %v324, %v319
  %v380 = vpack.c.b16 %v325, %v320
  %v381 = vpack.c.b16 %v326, %v321
  %v382 = vpack.c.b16 %v327, %v322
  %v383 = vpack.c.b16 %v328, %v323
  %v384 = vpack.c.b16 %v334, %v329
  %v385 = vpack.c.b16 %v335, %v330
  %v386 = vpack.c.b16 %v336, %v331
  %v387 = vpack.c.b16 %v337, %v332
  %v388 = vpack.c.b16 %v338, %v333
  %v389 = vpack.c.b16 %v344, %v339
  %v390 = vpack.c.b16 %v345, %v340
  %v391 = vpack.c.b16 %v346, %v341
  %v392 = vpack.c.b16 %v347, %v342
  %v393 = vpack.c.b16 %v348, %v343
  %v394 = vpack.c.b16 %v354, %v349
  %v395 = vpack.c.b16 %v355, %v350
  %v396 = vpack.c.b16 %v356, %v351
  %v397 = vpack.c.b16 %v357, %v352
  %v398 = vpack.c.b16 %v358, %v353
  %v503 = vunpack.c.l.b16 %v63
  %v504 = vunpack.c.l.b16 %v64
  %v505 = vunpack.c.l.b16 %v65
  %v506 = vunpack.c.l.b16 %v66
  %v507 = vunpack.c.l.b16 %v67
  %v508 = vunpack.c.l.b16 %v68
  %v509 = vunpack.c.l.b16 %v69
  %v510 = vunpack.c.l.b16 %v70
  %v511 = vunpack.c.l.b16 %v71
  %v512 = vunpack.c.l.b16 %v72
  %v513 = vunpack.c.l.b16 %v73
  %v514 = vunpack.c.l.b16 %v74
  %v515 = vunpack.c.l.b16 %v75
  %v516 = vunpack.c.l.b16 %v76
  %v517 = vunpack.c.l.b16 %v77
  %v518 = vunpack.c.l.b16 %v78
  %v519 = vunpack.c.l.b16 %v79
  %v520 = vunpack.c.l.b16 %v80
  %v521 = vunpack.c.l.b16 %v81
  %v522 = vunpack.c.l.b16 %v82
  %v523 = vunpack.c.l.b16 %v83
  %v524 = vunpack.c.l.b16 %v84
  %v525 = vunpack.c.l.b16 %v85
  %v526 = vunpack.c.l.b16 %v86
  %v527 = vunpack.c.l.b16 %v87
  %v528 = vunpack.c.l.b16 %v88
  %v529 = vunpack.c.l.b16 %v89
  %v530 = vunpack.c.l.b16 %v90
  %v531 = vunpack.c.l.b16 %v91
  %v532 = vunpack.c.l.b16 %v92
  %v533 = vunpack.c.l.b16 %v93
  %v534 = vunpack.c.l.b16 %v94
  %v535 = vunpack.c.l.b16 %v95
  %v536 = vunpack.c.l.b16 %v96
  %v537 = vunpack.c.l.b16 %v97
  %v538 = vunpack.c.l.b16 %v98
  %v539 = vunpack.c.l.b16 %v99
  %v540 = vunpack.c.l.b16 %v100
  %v541 = vunpack.c.l.b16 %v101
  %v542 = vunpack.c.l.b16 %v102
  %v543 = vunpack.c.l.b16 %v103
  %v544 = vunpack.c.l.b16 %v104
  %v545 = vunpack.c.l.b16 %v105
  %v546 = vunpack.c.l.b16 %v106
  %v547 = vunpack.c.l.b16 %v107
  %v548 = vunpack.c.l.b16 %v108
  %v549 = vunpack.c.l.b16 %v109
  %v550 = vunpack.c.l.b16 %v110
  %v551 = vunpack.c.l.b16 %v111
  %v552 = vunpack.c.l.b16 %v112
  %v553 = vunpack.c.l.b16 %v113
  %v554 = vunpack.c.l.b16 %v114
  %v555 = vunpack.c.l.b16 %v115
  %v556 = vunpack.c.l.b16 %v116
  %v557 = vunpack.c.l.b16 %v117
  %v558 = vunpack.c.l.b16 %v118
  %v559 = vunpack.c.l.b16 %v119
  %v560 = vunpack.c.l.b16 %v120
  %v561 = vunpack.c.l.b16 %v121
  %v562 = vunpack.c.l.b16 %v122
  %v563 = vunpack.c.l.b16 %v123
  %v564 = vunpack.c.l.b16 %v124
  %v565 = vunpack.c.l.b16 %v125
  %v566 = vunpack.c.l.b16 %v126
  %v567 = vunpack.c.l.b16 %v127
  %v568 = vunpack.c.l.b16 %v128
  %v569 = vunpack.c.l.b16 %v129
  %v570 = vunpack.c.l.b16 %v130
  %v571 = vunpack.c.l.b16 %v131
  %v572 = vunpack.c.l.b16 %v132
  %v573 = vunpack.c.l.b16 %v133
  %v574 = vunpack.c.l.b16 %v134
  %v575 = vpack.c.b16 %v504, %v503
  %v576 = vpack.c.b16 %v506, %v505
  %v577 = vpack.c.b16 %v508, %v507
  %v578 = vpack.c.b16 %v510, %v509
  %v579 = vpack.c.b16 %v512, %v511
  %v580 = vpack.c.b16 %v514, %v513
  %v581 = vpack.c.b16 %v516, %v515
  %v582 = vpack.c.b16 %v518, %v517
  %v583 = vpack.c.b16 %v520, %v519
  %v584 = vpack.c.b16 %v522, %v521
  %v585 = vpack.c.b16 %v524, %v523
  %v586 = vpack.c.b16 %v526, %v525
  %v587 = vpack.c.b16 %v528, %v527
  %v588 = vpack.c.b16 %v530, %v529
  %v589 = vpack.c.b16 %v532, %v531
  %v590 = vpack.c.b16 %v534, %v533
  %v591 = vpack.c.b16 %v536, %v535
  %v592 = vpack.c.b16 %v538, %v537
  %v593 = vpack.c.b16 %v540, %v539
  %v594 = vpack.c.b16 %v542, %v541
  %v595 = vpack.c.b16 %v544, %v543
  %v596 = vpack.c.b16 %v546, %v545
  %v597 = vpack.c.b16 %v548, %v547
  %v598 = vpack.c.b16 %v550, %v549
  %v599 = vpack.c.b16 %v552, %v551
  %v600 = vpack.c.b16 %v554, %v553
  %v601 = vpack.c.b16 %v556, %v555
  %v602 = vpack.c.b16 %v558, %v557
  %v603 = vpack.c.b16 %v560, %v559
  %v604 = vpack.c.b16 %v562, %v561
  %v605 = vpack.c.b16 %v564, %v563
  %v606 = vpack.c.b16 %v566, %v565
  %v607 = vpack.c.b16 %v568, %v567
  %v608 = vpack.c.b16 %v570, %v569
  %v609 = vpack.c.b16 %v572, %v571
  %v610 = vpack.c.b16 %v574, %v573
  %vm647 = vcmask 523264
  %v649 = vsel %vm647, %v363, 0
  %v652 = vsel %vm647, %v368, 0
  %v655 = vsel %vm647, %v373, 0
  %v658 = vsel %vm647, %v378, 0
  %v661 = vsel %vm647, %v383, 0
  %v664 = vsel %vm647, %v388, 0
  %v667 = vsel %vm647, %v393, 0
  %v670 = vsel %vm647, %v398, 0
  %672 = vmatprep.subr.bf16.mxu0 0
  %673 = vmatpush1.bf16.msra.mxu0 %v582
  %674 = vmatprep.subr.bf16.mxu0 0
  %675 = vmatpush1.bf16.msra.mxu0 %v581
  %676 = vmatprep.subr.bf16.mxu0 0
  %677 = vmatpush1.bf16.msra.mxu0 %v580
  %678 = vmatprep.subr.bf16.mxu0 0
  %679 = vmatpush1.bf16.msra.mxu0 %v579
  %680 = vmatprep.subr.bf16.mxu0 0
  %681 = vmatpush1.bf16.msra.mxu0 %v578
  %682 = vmatprep.subr.bf16.mxu0 0
  %683 = vmatpush1.bf16.msra.mxu0 %v577
  %684 = vmatprep.subr.bf16.mxu0 0
  %685 = vmatpush1.bf16.msra.mxu0 %v576
  %686 = vmatprep.subr.bf16.mxu0 0
  %687 = vmatpush1.bf16.msra.mxu0 %v575
  %688 = vmatprep.subr.bf16.mxu0 0
  %689 = vmatpush2.bf16.msra.mxu0 %v590
  %690 = vmatprep.subr.bf16.mxu0 0
  %691 = vmatpush2.bf16.msra.mxu0 %v589
  %692 = vmatprep.subr.bf16.mxu0 0
  %693 = vmatpush2.bf16.msra.mxu0 %v588
  %694 = vmatprep.subr.bf16.mxu0 0
  %695 = vmatpush2.bf16.msra.mxu0 %v587
  %696 = vmatprep.subr.bf16.mxu0 0
  %697 = vmatpush2.bf16.msra.mxu0 %v586
  %698 = vmatprep.subr.bf16.mxu0 0
  %699 = vmatpush2.bf16.msra.mxu0 %v585
  %700 = vmatprep.subr.bf16.mxu0 0
  %701 = vmatpush2.bf16.msra.mxu0 %v584
  %702 = vmatprep.subr.bf16.mxu0 0
  %703 = vmatpush2.bf16.msra.mxu0 %v583
  %704 = vmatprep.mubr.bf16.mxu0 %v360
  %705 = vmatmul.mubr.bf16.gmra.mxu0 %v359
  %v706 = vpop.f32.mrf.mxu0
  %v707 = vadd.f32 %v154, %v706
  %v708 = vpop.f32.mrf.mxu0
  %v709 = vpop.f32.mrf.mxu0
  %v710 = vadd.f32 %v159, %v709
  %v711 = vpop.f32.mrf.mxu0
  %712 = vmatprep.mubr.bf16.mxu0 %v365
  %713 = vmatmul.mubr.bf16.gmra.mxu0 %v364
  %v714 = vpop.f32.mrf.mxu0
  %v715 = vadd.f32 %v164, %v714
  %v716 = vpop.f32.mrf.mxu0
  %v717 = vpop.f32.mrf.mxu0
  %v718 = vadd.f32 %v169, %v717
  %v719 = vpop.f32.mrf.mxu0
  %720 = vmatprep.mubr.bf16.mxu0 %v370
  %721 = vmatmul.mubr.bf16.gmra.mxu0 %v369
  %v722 = vpop.f32.mrf.mxu0
  %v723 = vadd.f32 %v174, %v722
  %v724 = vpop.f32.mrf.mxu0
  %v725 = vpop.f32.mrf.mxu0
  %v726 = vadd.f32 %v179, %v725
  %v727 = vpop.f32.mrf.mxu0
  %728 = vmatprep.mubr.bf16.mxu0 %v375
  %729 = vmatmul.mubr.bf16.gmra.mxu0 %v374
  %v730 = vpop.f32.mrf.mxu0
  %v731 = vadd.f32 %v184, %v730
  %v732 = vpop.f32.mrf.mxu0
  %v733 = vpop.f32.mrf.mxu0
  %v734 = vadd.f32 %v189, %v733
  %v735 = vpop.f32.mrf.mxu0
  %736 = vmatprep.mubr.bf16.mxu0 %v380
  %737 = vmatmul.mubr.bf16.gmra.mxu0 %v379
  %v738 = vpop.f32.mrf.mxu0
  %v739 = vadd.f32 %v194, %v738
  %v740 = vpop.f32.mrf.mxu0
  %v741 = vpop.f32.mrf.mxu0
  %v742 = vadd.f32 %v199, %v741
  %v743 = vpop.f32.mrf.mxu0
  %744 = vmatprep.mubr.bf16.mxu0 %v385
  %745 = vmatmul.mubr.bf16.gmra.mxu0 %v384
  %v746 = vpop.f32.mrf.mxu0
  %v747 = vadd.f32 %v204, %v746
  %v748 = vpop.f32.mrf.mxu0
  %v749 = vpop.f32.mrf.mxu0
  %v750 = vadd.f32 %v209, %v749
  %v751 = vpop.f32.mrf.mxu0
  %752 = vmatprep.mubr.bf16.mxu0 %v390
  %753 = vmatmul.mubr.bf16.gmra.mxu0 %v389
  %v754 = vpop.f32.mrf.mxu0
  %v755 = vadd.f32 %v214, %v754
  %v756 = vpop.f32.mrf.mxu0
  %v757 = vpop.f32.mrf.mxu0
  %v758 = vadd.f32 %v219, %v757
  %v759 = vpop.f32.mrf.mxu0
  %760 = vmatprep.mubr.bf16.mxu0 %v395
  %761 = vmatmul.mubr.bf16.gmra.mxu0 %v394
  %v762 = vpop.f32.mrf.mxu0
  %v763 = vadd.f32 %v224, %v762
  %v764 = vpop.f32.mrf.mxu0
  %v765 = vpop.f32.mrf.mxu0
  %v766 = vadd.f32 %v229, %v765
  %v767 = vpop.f32.mrf.mxu0
  %768 = vdwg.mxu0
  %769 = vmatprep.subr.bf16.mxu0 0
  %770 = vmatpush1.bf16.msra.mxu0 %v598
  %771 = vmatprep.subr.bf16.mxu0 0
  %772 = vmatpush1.bf16.msra.mxu0 %v597
  %773 = vmatprep.subr.bf16.mxu0 0
  %774 = vmatpush1.bf16.msra.mxu0 %v596
  %775 = vmatprep.subr.bf16.mxu0 0
  %776 = vmatpush1.bf16.msra.mxu0 %v595
  %777 = vmatprep.subr.bf16.mxu0 0
  %778 = vmatpush1.bf16.msra.mxu0 %v594
  %779 = vmatprep.subr.bf16.mxu0 0
  %780 = vmatpush1.bf16.msra.mxu0 %v593
  %781 = vmatprep.subr.bf16.mxu0 0
  %782 = vmatpush1.bf16.msra.mxu0 %v592
  %783 = vmatprep.subr.bf16.mxu0 0
  %784 = vmatpush1.bf16.msra.mxu0 %v591
  %785 = vmatprep.subr.bf16.mxu0 0
  %786 = vmatpush2.bf16.msra.mxu0 %v606
  %787 = vmatprep.subr.bf16.mxu0 0
  %788 = vmatpush2.bf16.msra.mxu0 %v605
  %789 = vmatprep.subr.bf16.mxu0 0
  %790 = vmatpush2.bf16.msra.mxu0 %v604
  %791 = vmatprep.subr.bf16.mxu0 0
  %792 = vmatpush2.bf16.msra.mxu0 %v603
  %793 = vmatprep.subr.bf16.mxu0 0
  %794 = vmatpush2.bf16.msra.mxu0 %v602
  %795 = vmatprep.subr.bf16.mxu0 0
  %796 = vmatpush2.bf16.msra.mxu0 %v601
  %797 = vmatprep.subr.bf16.mxu0 0
  %798 = vmatpush2.bf16.msra.mxu0 %v600
  %799 = vmatprep.subr.bf16.mxu0 0
  %800 = vmatpush2.bf16.msra.mxu0 %v599
  %801 = vmatprep.mubr.bf16.mxu0 %v362
  %802 = vmatmul.mubr.bf16.gmra.mxu0 %v361
  %v803 = vpop.f32.mrf.mxu0
  %v804 = vadd.f32 %v707, %v803
  %v805 = vpop.f32.mrf.mxu0
  %v806 = vpop.f32.mrf.mxu0
  %v807 = vadd.f32 %v710, %v806
  %v808 = vpop.f32.mrf.mxu0
  %809 = vmatprep.mubr.bf16.mxu0 %v367
  %810 = vmatmul.mubr.bf16.gmra.mxu0 %v366
  %v811 = vpop.f32.mrf.mxu0
  %v812 = vadd.f32 %v715, %v811
  %v813 = vpop.f32.mrf.mxu0
  %v814 = vpop.f32.mrf.mxu0
  %v815 = vadd.f32 %v718, %v814
  %v816 = vpop.f32.mrf.mxu0
  %817 = vmatprep.mubr.bf16.mxu0 %v372
  %818 = vmatmul.mubr.bf16.gmra.mxu0 %v371
  %v819 = vpop.f32.mrf.mxu0
  %v820 = vadd.f32 %v723, %v819
  %v821 = vpop.f32.mrf.mxu0
  %v822 = vpop.f32.mrf.mxu0
  %v823 = vadd.f32 %v726, %v822
  %v824 = vpop.f32.mrf.mxu0
  %825 = vmatprep.mubr.bf16.mxu0 %v377
  %826 = vmatmul.mubr.bf16.gmra.mxu0 %v376
  %v827 = vpop.f32.mrf.mxu0
  %v828 = vadd.f32 %v731, %v827
  %v829 = vpop.f32.mrf.mxu0
  %v830 = vpop.f32.mrf.mxu0
  %v831 = vadd.f32 %v734, %v830
  %v832 = vpop.f32.mrf.mxu0
  %833 = vmatprep.mubr.bf16.mxu0 %v382
  %834 = vmatmul.mubr.bf16.gmra.mxu0 %v381
  %v835 = vpop.f32.mrf.mxu0
  %v836 = vadd.f32 %v739, %v835
  %v837 = vpop.f32.mrf.mxu0
  %v838 = vpop.f32.mrf.mxu0
  %v839 = vadd.f32 %v742, %v838
  %v840 = vpop.f32.mrf.mxu0
  %841 = vmatprep.mubr.bf16.mxu0 %v387
  %842 = vmatmul.mubr.bf16.gmra.mxu0 %v386
  %v843 = vpop.f32.mrf.mxu0
  %v844 = vadd.f32 %v747, %v843
  %v845 = vpop.f32.mrf.mxu0
  %v846 = vpop.f32.mrf.mxu0
  %v847 = vadd.f32 %v750, %v846
  %v848 = vpop.f32.mrf.mxu0
  %849 = vmatprep.mubr.bf16.mxu0 %v392
  %850 = vmatmul.mubr.bf16.gmra.mxu0 %v391
  %v851 = vpop.f32.mrf.mxu0
  %v852 = vadd.f32 %v755, %v851
  %v853 = vpop.f32.mrf.mxu0
  %v854 = vpop.f32.mrf.mxu0
  %v855 = vadd.f32 %v758, %v854
  %v856 = vpop.f32.mrf.mxu0
  %857 = vmatprep.mubr.bf16.mxu0 %v397
  %858 = vmatmul.mubr.bf16.gmra.mxu0 %v396
  %v859 = vpop.f32.mrf.mxu0
  %v860 = vadd.f32 %v763, %v859
  %v861 = vpop.f32.mrf.mxu0
  %v862 = vpop.f32.mrf.mxu0
  %v863 = vadd.f32 %v766, %v862
  %v864 = vpop.f32.mrf.mxu0
  %865 = vdwg.mxu0
  %866 = vmatprep.subr.bf16.mxu0 0
  %867 = vmatpush1.bf16.msra.mxu0 0
  %868 = vmatprep.subr.bf16.mxu0 0
  %869 = vmatpush1.bf16.msra.mxu0 0
  %870 = vmatprep.subr.bf16.mxu0 0
  %871 = vmatpush1.bf16.msra.mxu0 0
  %872 = vmatprep.subr.bf16.mxu0 0
  %873 = vmatpush1.bf16.msra.mxu0 0
  %874 = vmatprep.subr.bf16.mxu0 0
  %875 = vmatpush1.bf16.msra.mxu0 %v610
  %876 = vmatprep.subr.bf16.mxu0 0
  %877 = vmatpush1.bf16.msra.mxu0 %v609
  %878 = vmatprep.subr.bf16.mxu0 0
  %879 = vmatpush1.bf16.msra.mxu0 %v608
  %880 = vmatprep.subr.bf16.mxu0 0
  %881 = vmatpush1.bf16.msra.mxu0 %v607
  %882 = vmatprep.subr.bf16.mxu0 0
  %883 = vmatpush2.bf16.msra.mxu0 0
  %884 = vmatprep.subr.bf16.mxu0 0
  %885 = vmatpush2.bf16.msra.mxu0 0
  %886 = vmatprep.subr.bf16.mxu0 0
  %887 = vmatpush2.bf16.msra.mxu0 0
  %888 = vmatprep.subr.bf16.mxu0 0
  %889 = vmatpush2.bf16.msra.mxu0 0
  %890 = vmatprep.subr.bf16.mxu0 0
  %891 = vmatpush2.bf16.msra.mxu0 0
  %892 = vmatprep.subr.bf16.mxu0 0
  %893 = vmatpush2.bf16.msra.mxu0 0
  %894 = vmatprep.subr.bf16.mxu0 0
  %895 = vmatpush2.bf16.msra.mxu0 0
  %896 = vmatprep.subr.bf16.mxu0 0
  %897 = vmatpush2.bf16.msra.mxu0 0
  %898 = vmatprep.mubr.bf16.mxu0 0
  %899 = vmatmul.mubr.bf16.gmra.mxu0 %v649
  %v900 = vpop.f32.mrf.mxu0
  %v901 = vadd.f32 %v804, %v900
  %v902 = vpop.f32.mrf.mxu0
  %v903 = vpop.f32.mrf.mxu0
  %v904 = vadd.f32 %v807, %v903
  %v905 = vpop.f32.mrf.mxu0
  %906 = vmatprep.mubr.bf16.mxu0 0
  %907 = vmatmul.mubr.bf16.gmra.mxu0 %v652
  %v908 = vpop.f32.mrf.mxu0
  %v909 = vadd.f32 %v812, %v908
  %v910 = vpop.f32.mrf.mxu0
  %v911 = vpop.f32.mrf.mxu0
  %v912 = vadd.f32 %v815, %v911
  %v913 = vpop.f32.mrf.mxu0
  %914 = vmatprep.mubr.bf16.mxu0 0
  %915 = vmatmul.mubr.bf16.gmra.mxu0 %v655
  %v916 = vpop.f32.mrf.mxu0
  %v917 = vadd.f32 %v820, %v916
  %v918 = vpop.f32.mrf.mxu0
  %v919 = vpop.f32.mrf.mxu0
  %v920 = vadd.f32 %v823, %v919
  %v921 = vpop.f32.mrf.mxu0
  %922 = vmatprep.mubr.bf16.mxu0 0
  %923 = vmatmul.mubr.bf16.gmra.mxu0 %v658
  %v924 = vpop.f32.mrf.mxu0
  %v925 = vadd.f32 %v828, %v924
  %v926 = vpop.f32.mrf.mxu0
  %v927 = vpop.f32.mrf.mxu0
  %v928 = vadd.f32 %v831, %v927
  %v929 = vpop.f32.mrf.mxu0
  %930 = vmatprep.mubr.bf16.mxu0 0
  %931 = vmatmul.mubr.bf16.gmra.mxu0 %v661
  %v932 = vpop.f32.mrf.mxu0
  %v933 = vadd.f32 %v836, %v932
  %v934 = vpop.f32.mrf.mxu0
  %v935 = vpop.f32.mrf.mxu0
  %v936 = vadd.f32 %v839, %v935
  %v937 = vpop.f32.mrf.mxu0
  %938 = vmatprep.mubr.bf16.mxu0 0
  %939 = vmatmul.mubr.bf16.gmra.mxu0 %v664
  %v940 = vpop.f32.mrf.mxu0
  %v941 = vadd.f32 %v844, %v940
  %v942 = vpop.f32.mrf.mxu0
  %v943 = vpop.f32.mrf.mxu0
  %v944 = vadd.f32 %v847, %v943
  %v945 = vpop.f32.mrf.mxu0
  %946 = vmatprep.mubr.bf16.mxu0 0
  %947 = vmatmul.mubr.bf16.gmra.mxu0 %v667
  %v948 = vpop.f32.mrf.mxu0
  %v949 = vadd.f32 %v852, %v948
  %v950 = vpop.f32.mrf.mxu0
  %v951 = vpop.f32.mrf.mxu0
  %v952 = vadd.f32 %v855, %v951
  %v953 = vpop.f32.mrf.mxu0
  %954 = vmatprep.mubr.bf16.mxu0 0
  %955 = vmatmul.mubr.bf16.gmra.mxu0 %v670
  %v956 = vpop.f32.mrf.mxu0
  %v957 = vadd.f32 %v860, %v956
  %v958 = vpop.f32.mrf.mxu0
  %v959 = vpop.f32.mrf.mxu0
  %v960 = vadd.f32 %v863, %v959
  %v961 = vpop.f32.mrf.mxu0
  %962 = vdwg.mxu0
  %v963 = vmax.f32 %v901, 0.0
  %v964 = vmax.f32 %v904, 0.0
  %v965 = vmax.f32 %v909, 0.0
  %v966 = vmax.f32 %v912, 0.0
  %v967 = vmax.f32 %v917, 0.0
  %v968 = vmax.f32 %v920, 0.0
  %v969 = vmax.f32 %v925, 0.0
  %v970 = vmax.f32 %v928, 0.0
  %v971 = vmax.f32 %v933, 0.0
  %v972 = vmax.f32 %v936, 0.0
  %v973 = vmax.f32 %v941, 0.0
  %v974 = vmax.f32 %v944, 0.0
  %v975 = vmax.f32 %v949, 0.0
  %v976 = vmax.f32 %v952, 0.0
  %v977 = vmax.f32 %v957, 0.0
  %v978 = vmax.f32 %v960, 0.0
  %v979 = vpack.c.bf16 %v964, %v963
  %v980 = vpack.c.bf16 %v966, %v965
  %v981 = vpack.c.bf16 %v968, %v967
  %v982 = vpack.c.bf16 %v970, %v969
  %v983 = vpack.c.bf16 %v972, %v971
  %v984 = vpack.c.bf16 %v974, %v973
  %v985 = vpack.c.bf16 %v976, %v975
  %v986 = vpack.c.bf16 %v978, %v977
  %v995 = vunpack.c.l.b16 %v979
  %v996 = vunpack.c.h.b16 %v979
  %v997 = vunpack.c.l.b16 %v980
  %v998 = vunpack.c.h.b16 %v980
  %v999 = vunpack.c.l.b16 %v981
  %v1000 = vunpack.c.h.b16 %v981
  %v1001 = vunpack.c.l.b16 %v982
  %v1002 = vunpack.c.h.b16 %v982
  %v1003 = vunpack.c.l.b16 %v983
  %v1004 = vunpack.c.h.b16 %v983
  %v1005 = vunpack.c.l.b16 %v984
  %v1006 = vunpack.c.h.b16 %v984
  %v1007 = vunpack.c.l.b16 %v985
  %v1008 = vunpack.c.h.b16 %v985
  %v1009 = vunpack.c.l.b16 %v986
  %v1010 = vunpack.c.h.b16 %v986
  %v1011 = vpack.c.b16 %v995, %v995
  %v1012 = vpack.c.b16 %v996, %v996
  %v1013 = vpack.c.b16 %v997, %v997
  %v1014 = vpack.c.b16 %v998, %v998
  %v1015 = vpack.c.b16 %v999, %v999
  %v1016 = vpack.c.b16 %v1000, %v1000
  %v1017 = vpack.c.b16 %v1001, %v1001
  %v1018 = vpack.c.b16 %v1002, %v1002
  %v1019 = vpack.c.b16 %v1003, %v1003
  %v1020 = vpack.c.b16 %v1004, %v1004
  %v1021 = vpack.c.b16 %v1005, %v1005
  %v1022 = vpack.c.b16 %v1006, %v1006
  %v1023 = vpack.c.b16 %v1007, %v1007
  %v1024 = vpack.c.b16 %v1008, %v1008
  %v1025 = vpack.c.b16 %v1009, %v1009
  %v1026 = vpack.c.b16 %v1010, %v1010
  %vm1043 = vcmask 257024
  %1044 = vst.msk [vmem:[%s3] sm:$0xf] %vm1043, %v1011
  %1045 = vst.msk [vmem:[%s3 + $0x4] sm:$0xf] %vm1043, %v1012
  %1046 = vst.msk [vmem:[%s3 + $0x8] sm:$0xf] %vm1043, %v1013
  %1047 = vst.msk [vmem:[%s3 + $0xc] sm:$0xf] %vm1043, %v1014
  %1048 = vst.msk [vmem:[%s3 + $0x10] sm:$0xf] %vm1043, %v1015
  %1049 = vst.msk [vmem:[%s3 + $0x14] sm:$0xf] %vm1043, %v1016
  %1050 = vst.msk [vmem:[%s3 + $0x18] sm:$0xf] %vm1043, %v1017
  %1051 = vst.msk [vmem:[%s3 + $0x1c] sm:$0xf] %vm1043, %v1018
  %1052 = vst.msk [vmem:[%s3 + $0x20] sm:$0xf] %vm1043, %v1019
  %1053 = vst.msk [vmem:[%s3 + $0x24] sm:$0xf] %vm1043, %v1020
  %1054 = vst.msk [vmem:[%s3 + $0x28] sm:$0xf] %vm1043, %v1021
  %1055 = vst.msk [vmem:[%s3 + $0x2c] sm:$0xf] %vm1043, %v1022
  %1056 = vst.msk [vmem:[%s3 + $0x30] sm:$0xf] %vm1043, %v1023
  %1057 = vst.msk [vmem:[%s3 + $0x34] sm:$0xf] %vm1043, %v1024
  %1058 = vst.msk [vmem:[%s3 + $0x38] sm:$0xf] %vm1043, %v1025
  %1059 = vst.msk [vmem:[%s3 + $0x3c] sm:$0xf] %vm1043, %v1026
  // Predicated region
  $region14: #{_lambda_.8} parent=0 // pred_check
    _
  $region15: #{_lambda_.8} parent=0 // pred_check_branch
    %1061 = sbr.rel (0) target = $region17
  $region16: #{_lambda_.8} parent=0 // pred_region
    _
  $region17: #{_lambda_.8} parent=0 // pred_fallthru
    _
  // Predicated region
  $region18: #{_lambda_.8} parent=0 // pred_check
    _
  $region19: #{_lambda_.8} parent=0 // pred_check_branch
    %1063 = sbr.rel (0) target = $region21
  $region20: #{_lambda_.8} parent=0 // pred_region
    _
  $region21: #{_lambda_.8} parent=0 // pred_fallthru
    _

// kernel: _lambda_.9
$region0: #{_lambda_.9}
  #allocation0 [shape = 'u32[]', space=smem, size = 0x4, offset = 0x4, fixed_abs, tag = 'smem constant byte address 0x4 - core index']
  #allocation1 [shape = 'u32[144,128]{1,0:T(1,128)}', space=vmem, size = 0x12000, scoped, tag = 'internal scratch']
  %s0 = inlined_call_operand.vmem [shape: bf16[256,1152], index: 0, kind: input, shape index: {}]
  %s1 = inlined_call_operand.vmem [shape: f32[256,1], index: 1, kind: input, shape index: {}]
  %s2 = inlined_call_operand.vmem [shape: bf16[1152,8], index: 2, kind: input, shape index: {}]
  %s3 = inlined_call_operand.vmem [shape: bf16[256,8], index: 3, kind: output, shape index: {}]
  %s4 = sld [smem:[#allocation0]]
  $region22: #{_lambda_.9} parent=0
    _
  %s6 = ssub.s32 1, %s4
  %s7 = scalar_select 0, %s6, %s4
  // Predicated region
  $region2: #{_lambda_.9} parent=0 // pred_check
    _
  $region3: #{_lambda_.9} parent=0 // pred_check_branch
    %9 = sbr.rel (0) target = $region5
  $region4: #{_lambda_.9} parent=0 // pred_region
    _
  $region5: #{_lambda_.9} parent=0 // pred_fallthru
    _
  // Predicated region
  $region6: #{_lambda_.9} parent=0 // pred_check
    _
  $region7: #{_lambda_.9} parent=0 // pred_check_branch
    %11 = sbr.rel (0) target = $region9
  $region8: #{_lambda_.9} parent=0 // pred_region
    _
  $region9: #{_lambda_.9} parent=0 // pred_fallthru
    _
  // Predicated region
  $region10: #{_lambda_.9} parent=0 // pred_check
    _
  $region11: #{_lambda_.9} parent=0 // pred_check_branch
    %13 = sbr.rel (0) target = $region13
  $region12: #{_lambda_.9} parent=0 // pred_region
    _
  $region13: #{_lambda_.9} parent=0 // pred_fallthru
    _
  %v15 = vld [vmem:[%s0] sm:$0xff]
  %v16 = vld [vmem:[%s0 + $0x8] sm:$0xff]
  %v17 = vld [vmem:[%s0 + $0x10] sm:$0xff]
  %v18 = vld [vmem:[%s0 + $0x18] sm:$0xff]
  %v19 = vld [vmem:[%s0 + $0x20] sm:$0xf]
  %v20 = vld [vmem:[%s0 + $0x24] sm:$0xff]
  %v21 = vld [vmem:[%s0 + $0x2c] sm:$0xff]
  %v22 = vld [vmem:[%s0 + $0x34] sm:$0xff]
  %v23 = vld [vmem:[%s0 + $0x3c] sm:$0xff]
  %v24 = vld [vmem:[%s0 + $0x44] sm:$0xf]
  %v25 = vld [vmem:[%s0 + $0x48] sm:$0xff]
  %v26 = vld [vmem:[%s0 + $0x50] sm:$0xff]
  %v27 = vld [vmem:[%s0 + $0x58] sm:$0xff]
  %v28 = vld [vmem:[%s0 + $0x60] sm:$0xff]
  %v29 = vld [vmem:[%s0 + $0x68] sm:$0xf]
  %v30 = vld [vmem:[%s0 + $0x6c] sm:$0xff]
  %v31 = vld [vmem:[%s0 + $0x74] sm:$0xff]
  %v32 = vld [vmem:[%s0 + $0x7c] sm:$0xff]
  %v33 = vld [vmem:[%s0 + $0x84] sm:$0xff]
  %v34 = vld [vmem:[%s0 + $0x8c] sm:$0xf]
  %v35 = vld [vmem:[%s0 + $0x90] sm:$0xff]
  %v36 = vld [vmem:[%s0 + $0x98] sm:$0xff]
  %v37 = vld [vmem:[%s0 + $0xa0] sm:$0xff]
  %v38 = vld [vmem:[%s0 + $0xa8] sm:$0xff]
  %v39 = vld [vmem:[%s0 + $0xb0] sm:$0xf]
  %v40 = vld [vmem:[%s0 + $0xb4] sm:$0xff]
  %v41 = vld [vmem:[%s0 + $0xbc] sm:$0xff]
  %v42 = vld [vmem:[%s0 + $0xc4] sm:$0xff]
  %v43 = vld [vmem:[%s0 + $0xcc] sm:$0xff]
  %v44 = vld [vmem:[%s0 + $0xd4] sm:$0xf]
  %v45 = vld [vmem:[%s0 + $0xd8] sm:$0xff]
  %v46 = vld [vmem:[%s0 + $0xe0] sm:$0xff]
  %v47 = vld [vmem:[%s0 + $0xe8] sm:$0xff]
  %v48 = vld [vmem:[%s0 + $0xf0] sm:$0xff]
  %v49 = vld [vmem:[%s0 + $0xf8] sm:$0xf]
  %v50 = vld [vmem:[%s0 + $0xfc] sm:$0xff]
  %v51 = vld [vmem:[%s0 + $0x104] sm:$0xff]
  %v52 = vld [vmem:[%s0 + $0x10c] sm:$0xff]
  %v53 = vld [vmem:[%s0 + $0x114] sm:$0xff]
  %v54 = vld [vmem:[%s0 + $0x11c] sm:$0xf]
  %v55 = vld [vmem:[%s0 + $0x120] sm:$0xff]
  %v56 = vld [vmem:[%s0 + $0x128] sm:$0xff]
  %v57 = vld [vmem:[%s0 + $0x130] sm:$0xff]
  %v58 = vld [vmem:[%s0 + $0x138] sm:$0xff]
  %v59 = vld [vmem:[%s0 + $0x140] sm:$0xf]
  %v60 = vld [vmem:[%s0 + $0x144] sm:$0xff]
  %v61 = vld [vmem:[%s0 + $0x14c] sm:$0xff]
  %v62 = vld [vmem:[%s0 + $0x154] sm:$0xff]
  %v63 = vld [vmem:[%s0 + $0x15c] sm:$0xff]
  %v64 = vld [vmem:[%s0 + $0x164] sm:$0xf]
  %v65 = vld [vmem:[%s0 + $0x168] sm:$0xff]
  %v66 = vld [vmem:[%s0 + $0x170] sm:$0xff]
  %v67 = vld [vmem:[%s0 + $0x178] sm:$0xff]
  %v68 = vld [vmem:[%s0 + $0x180] sm:$0xff]
  %v69 = vld [vmem:[%s0 + $0x188] sm:$0xf]
  %v70 = vld [vmem:[%s0 + $0x18c] sm:$0xff]
  %v71 = vld [vmem:[%s0 + $0x194] sm:$0xff]
  %v72 = vld [vmem:[%s0 + $0x19c] sm:$0xff]
  %v73 = vld [vmem:[%s0 + $0x1a4] sm:$0xff]
  %v74 = vld [vmem:[%s0 + $0x1ac] sm:$0xf]
  %v75 = vld [vmem:[%s0 + $0x1b0] sm:$0xff]
  %v76 = vld [vmem:[%s0 + $0x1b8] sm:$0xff]
  %v77 = vld [vmem:[%s0 + $0x1c0] sm:$0xff]
  %v78 = vld [vmem:[%s0 + $0x1c8] sm:$0xff]
  %v79 = vld [vmem:[%s0 + $0x1d0] sm:$0xf]
  %v80 = vld [vmem:[%s0 + $0x1d4] sm:$0xff]
  %v81 = vld [vmem:[%s0 + $0x1dc] sm:$0xff]
  %v82 = vld [vmem:[%s0 + $0x1e4] sm:$0xff]
  %v83 = vld [vmem:[%s0 + $0x1ec] sm:$0xff]
  %v84 = vld [vmem:[%s0 + $0x1f4] sm:$0xf]
  %v85 = vld [vmem:[%s0 + $0x1f8] sm:$0xff]
  %v86 = vld [vmem:[%s0 + $0x200] sm:$0xff]
  %v87 = vld [vmem:[%s0 + $0x208] sm:$0xff]
  %v88 = vld [vmem:[%s0 + $0x210] sm:$0xff]
  %v89 = vld [vmem:[%s0 + $0x218] sm:$0xf]
  %v90 = vld [vmem:[%s0 + $0x21c] sm:$0xff]
  %v91 = vld [vmem:[%s0 + $0x224] sm:$0xff]
  %v92 = vld [vmem:[%s0 + $0x22c] sm:$0xff]
  %v93 = vld [vmem:[%s0 + $0x234] sm:$0xff]
  %v94 = vld [vmem:[%s0 + $0x23c] sm:$0xf]
  %v95 = vld [vmem:[%s0 + $0x240] sm:$0xff]
  %v96 = vld [vmem:[%s0 + $0x248] sm:$0xff]
  %v97 = vld [vmem:[%s0 + $0x250] sm:$0xff]
  %v98 = vld [vmem:[%s0 + $0x258] sm:$0xff]
  %v99 = vld [vmem:[%s0 + $0x260] sm:$0xf]
  %v100 = vld [vmem:[%s0 + $0x264] sm:$0xff]
  %v101 = vld [vmem:[%s0 + $0x26c] sm:$0xff]
  %v102 = vld [vmem:[%s0 + $0x274] sm:$0xff]
  %v103 = vld [vmem:[%s0 + $0x27c] sm:$0xff]
  %v104 = vld [vmem:[%s0 + $0x284] sm:$0xf]
  %v105 = vld [vmem:[%s0 + $0x288] sm:$0xff]
  %v106 = vld [vmem:[%s0 + $0x290] sm:$0xff]
  %v107 = vld [vmem:[%s0 + $0x298] sm:$0xff]
  %v108 = vld [vmem:[%s0 + $0x2a0] sm:$0xff]
  %v109 = vld [vmem:[%s0 + $0x2a8] sm:$0xf]
  %v110 = vld [vmem:[%s0 + $0x2ac] sm:$0xff]
  %v111 = vld [vmem:[%s0 + $0x2b4] sm:$0xff]
  %v112 = vld [vmem:[%s0 + $0x2bc] sm:$0xff]
  %v113 = vld [vmem:[%s0 + $0x2c4] sm:$0xff]
  %v114 = vld [vmem:[%s0 + $0x2cc] sm:$0xf]
  %v115 = vld [vmem:[%s0 + $0x2d0] sm:$0xff]
  %v116 = vld [vmem:[%s0 + $0x2d8] sm:$0xff]
  %v117 = vld [vmem:[%s0 + $0x2e0] sm:$0xff]
  %v118 = vld [vmem:[%s0 + $0x2e8] sm:$0xff]
  %v119 = vld [vmem:[%s0 + $0x2f0] sm:$0xf]
  %v120 = vld [vmem:[%s0 + $0x2f4] sm:$0xff]
  %v121 = vld [vmem:[%s0 + $0x2fc] sm:$0xff]
  %v122 = vld [vmem:[%s0 + $0x304] sm:$0xff]
  %v123 = vld [vmem:[%s0 + $0x30c] sm:$0xff]
  %v124 = vld [vmem:[%s0 + $0x314] sm:$0xf]
  %v125 = vld [vmem:[%s0 + $0x318] sm:$0xff]
  %v126 = vld [vmem:[%s0 + $0x320] sm:$0xff]
  %v127 = vld [vmem:[%s0 + $0x328] sm:$0xff]
  %v128 = vld [vmem:[%s0 + $0x330] sm:$0xff]
  %v129 = vld [vmem:[%s0 + $0x338] sm:$0xf]
  %v130 = vld [vmem:[%s0 + $0x33c] sm:$0xff]
  %v131 = vld [vmem:[%s0 + $0x344] sm:$0xff]
  %v132 = vld [vmem:[%s0 + $0x34c] sm:$0xff]
  %v133 = vld [vmem:[%s0 + $0x354] sm:$0xff]
  %v134 = vld [vmem:[%s0 + $0x35c] sm:$0xf]
  %v135 = vld [vmem:[%s0 + $0x360] sm:$0xff]
  %v136 = vld [vmem:[%s0 + $0x368] sm:$0xff]
  %v137 = vld [vmem:[%s0 + $0x370] sm:$0xff]
  %v138 = vld [vmem:[%s0 + $0x378] sm:$0xff]
  %v139 = vld [vmem:[%s0 + $0x380] sm:$0xf]
  %v140 = vld [vmem:[%s0 + $0x384] sm:$0xff]
  %v141 = vld [vmem:[%s0 + $0x38c] sm:$0xff]
  %v142 = vld [vmem:[%s0 + $0x394] sm:$0xff]
  %v143 = vld [vmem:[%s0 + $0x39c] sm:$0xff]
  %v144 = vld [vmem:[%s0 + $0x3a4] sm:$0xf]
  %v145 = vld [vmem:[%s0 + $0x3a8] sm:$0xff]
  %v146 = vld [vmem:[%s0 + $0x3b0] sm:$0xff]
  %v147 = vld [vmem:[%s0 + $0x3b8] sm:$0xff]
  %v148 = vld [vmem:[%s0 + $0x3c0] sm:$0xff]
  %v149 = vld [vmem:[%s0 + $0x3c8] sm:$0xf]
  %v150 = vld [vmem:[%s0 + $0x3cc] sm:$0xff]
  %v151 = vld [vmem:[%s0 + $0x3d4] sm:$0xff]
  %v152 = vld [vmem:[%s0 + $0x3dc] sm:$0xff]
  %v153 = vld [vmem:[%s0 + $0x3e4] sm:$0xff]
  %v154 = vld [vmem:[%s0 + $0x3ec] sm:$0xf]
  %v155 = vld [vmem:[%s0 + $0x3f0] sm:$0xff]
  %v156 = vld [vmem:[%s0 + $0x3f8] sm:$0xff]
  %v157 = vld [vmem:[%s0 + $0x400] sm:$0xff]
  %v158 = vld [vmem:[%s0 + $0x408] sm:$0xff]
  %v159 = vld [vmem:[%s0 + $0x410] sm:$0xf]
  %v160 = vld [vmem:[%s0 + $0x414] sm:$0xff]
  %v161 = vld [vmem:[%s0 + $0x41c] sm:$0xff]
  %v162 = vld [vmem:[%s0 + $0x424] sm:$0xff]
  %v163 = vld [vmem:[%s0 + $0x42c] sm:$0xff]
  %v164 = vld [vmem:[%s0 + $0x434] sm:$0xf]
  %v165 = vld [vmem:[%s0 + $0x438] sm:$0xff]
  %v166 = vld [vmem:[%s0 + $0x440] sm:$0xff]
  %v167 = vld [vmem:[%s0 + $0x448] sm:$0xff]
  %v168 = vld [vmem:[%s0 + $0x450] sm:$0xff]
  %v169 = vld [vmem:[%s0 + $0x458] sm:$0xf]
  %v170 = vld [vmem:[%s0 + $0x45c] sm:$0xff]
  %v171 = vld [vmem:[%s0 + $0x464] sm:$0xff]
  %v172 = vld [vmem:[%s0 + $0x46c] sm:$0xff]
  %v173 = vld [vmem:[%s0 + $0x474] sm:$0xff]
  %v174 = vld [vmem:[%s0 + $0x47c] sm:$0xf]
  %v175 = vld [vmem:[%s2] sm:$0xf]
  %v176 = vld [vmem:[%s2 + $0x4] sm:$0xf]
  %v177 = vld [vmem:[%s2 + $0x8] sm:$0xf]
  %v178 = vld [vmem:[%s2 + $0xc] sm:$0xf]
  %v179 = vld [vmem:[%s2 + $0x10] sm:$0xf]
  %v180 = vld [vmem:[%s2 + $0x14] sm:$0xf]
  %v181 = vld [vmem:[%s2 + $0x18] sm:$0xf]
  %v182 = vld [vmem:[%s2 + $0x1c] sm:$0xf]
  %v183 = vld [vmem:[%s2 + $0x20] sm:$0xf]
  %v184 = vld [vmem:[%s2 + $0x24] sm:$0xf]
  %v185 = vld [vmem:[%s2 + $0x28] sm:$0xf]
  %v186 = vld [vmem:[%s2 + $0x2c] sm:$0xf]
  %v187 = vld [vmem:[%s2 + $0x30] sm:$0xf]
  %v188 = vld [vmem:[%s2 + $0x34] sm:$0xf]
  %v189 = vld [vmem:[%s2 + $0x38] sm:$0xf]
  %v190 = vld [vmem:[%s2 + $0x3c] sm:$0xf]
  %v191 = vld [vmem:[%s2 + $0x40] sm:$0xf]
  %v192 = vld [vmem:[%s2 + $0x44] sm:$0xf]
  %v193 = vld [vmem:[%s2 + $0x48] sm:$0xf]
  %v194 = vld [vmem:[%s2 + $0x4c] sm:$0xf]
  %v195 = vld [vmem:[%s2 + $0x50] sm:$0xf]
  %v196 = vld [vmem:[%s2 + $0x54] sm:$0xf]
  %v197 = vld [vmem:[%s2 + $0x58] sm:$0xf]
  %v198 = vld [vmem:[%s2 + $0x5c] sm:$0xf]
  %v199 = vld [vmem:[%s2 + $0x60] sm:$0xf]
  %v200 = vld [vmem:[%s2 + $0x64] sm:$0xf]
  %v201 = vld [vmem:[%s2 + $0x68] sm:$0xf]
  %v202 = vld [vmem:[%s2 + $0x6c] sm:$0xf]
  %v203 = vld [vmem:[%s2 + $0x70] sm:$0xf]
  %v204 = vld [vmem:[%s2 + $0x74] sm:$0xf]
  %v205 = vld [vmem:[%s2 + $0x78] sm:$0xf]
  %v206 = vld [vmem:[%s2 + $0x7c] sm:$0xf]
  %v207 = vld [vmem:[%s2 + $0x80] sm:$0xf]
  %v208 = vld [vmem:[%s2 + $0x84] sm:$0xf]
  %v209 = vld [vmem:[%s2 + $0x88] sm:$0xf]
  %v210 = vld [vmem:[%s2 + $0x8c] sm:$0xf]
  %v211 = vld [vmem:[%s2 + $0x90] sm:$0xf]
  %v212 = vld [vmem:[%s2 + $0x94] sm:$0xf]
  %v213 = vld [vmem:[%s2 + $0x98] sm:$0xf]
  %v214 = vld [vmem:[%s2 + $0x9c] sm:$0xf]
  %v215 = vld [vmem:[%s2 + $0xa0] sm:$0xf]
  %v216 = vld [vmem:[%s2 + $0xa4] sm:$0xf]
  %v217 = vld [vmem:[%s2 + $0xa8] sm:$0xf]
  %v218 = vld [vmem:[%s2 + $0xac] sm:$0xf]
  %v219 = vld [vmem:[%s2 + $0xb0] sm:$0xf]
  %v220 = vld [vmem:[%s2 + $0xb4] sm:$0xf]
  %v221 = vld [vmem:[%s2 + $0xb8] sm:$0xf]
  %v222 = vld [vmem:[%s2 + $0xbc] sm:$0xf]
  %v223 = vld [vmem:[%s2 + $0xc0] sm:$0xf]
  %v224 = vld [vmem:[%s2 + $0xc4] sm:$0xf]
  %v225 = vld [vmem:[%s2 + $0xc8] sm:$0xf]
  %v226 = vld [vmem:[%s2 + $0xcc] sm:$0xf]
  %v227 = vld [vmem:[%s2 + $0xd0] sm:$0xf]
  %v228 = vld [vmem:[%s2 + $0xd4] sm:$0xf]
  %v229 = vld [vmem:[%s2 + $0xd8] sm:$0xf]
  %v230 = vld [vmem:[%s2 + $0xdc] sm:$0xf]
  %v231 = vld [vmem:[%s2 + $0xe0] sm:$0xf]
  %v232 = vld [vmem:[%s2 + $0xe4] sm:$0xf]
  %v233 = vld [vmem:[%s2 + $0xe8] sm:$0xf]
  %v234 = vld [vmem:[%s2 + $0xec] sm:$0xf]
  %v235 = vld [vmem:[%s2 + $0xf0] sm:$0xf]
  %v236 = vld [vmem:[%s2 + $0xf4] sm:$0xf]
  %v237 = vld [vmem:[%s2 + $0xf8] sm:$0xf]
  %v238 = vld [vmem:[%s2 + $0xfc] sm:$0xf]
  %v239 = vld [vmem:[%s2 + $0x100] sm:$0xf]
  %v240 = vld [vmem:[%s2 + $0x104] sm:$0xf]
  %v241 = vld [vmem:[%s2 + $0x108] sm:$0xf]
  %v242 = vld [vmem:[%s2 + $0x10c] sm:$0xf]
  %v243 = vld [vmem:[%s2 + $0x110] sm:$0xf]
  %v244 = vld [vmem:[%s2 + $0x114] sm:$0xf]
  %v245 = vld [vmem:[%s2 + $0x118] sm:$0xf]
  %v246 = vld [vmem:[%s2 + $0x11c] sm:$0xf]
  %v247 = vld [vmem:[%s2 + $0x120] sm:$0xf]
  %v248 = vld [vmem:[%s2 + $0x124] sm:$0xf]
  %v249 = vld [vmem:[%s2 + $0x128] sm:$0xf]
  %v250 = vld [vmem:[%s2 + $0x12c] sm:$0xf]
  %v251 = vld [vmem:[%s2 + $0x130] sm:$0xf]
  %v252 = vld [vmem:[%s2 + $0x134] sm:$0xf]
  %v253 = vld [vmem:[%s2 + $0x138] sm:$0xf]
  %v254 = vld [vmem:[%s2 + $0x13c] sm:$0xf]
  %v255 = vld [vmem:[%s2 + $0x140] sm:$0xf]
  %v256 = vld [vmem:[%s2 + $0x144] sm:$0xf]
  %v257 = vld [vmem:[%s2 + $0x148] sm:$0xf]
  %v258 = vld [vmem:[%s2 + $0x14c] sm:$0xf]
  %v259 = vld [vmem:[%s2 + $0x150] sm:$0xf]
  %v260 = vld [vmem:[%s2 + $0x154] sm:$0xf]
  %v261 = vld [vmem:[%s2 + $0x158] sm:$0xf]
  %v262 = vld [vmem:[%s2 + $0x15c] sm:$0xf]
  %v263 = vld [vmem:[%s2 + $0x160] sm:$0xf]
  %v264 = vld [vmem:[%s2 + $0x164] sm:$0xf]
  %v265 = vld [vmem:[%s2 + $0x168] sm:$0xf]
  %v266 = vld [vmem:[%s2 + $0x16c] sm:$0xf]
  %v267 = vld [vmem:[%s2 + $0x170] sm:$0xf]
  %v268 = vld [vmem:[%s2 + $0x174] sm:$0xf]
  %v269 = vld [vmem:[%s2 + $0x178] sm:$0xf]
  %v270 = vld [vmem:[%s2 + $0x17c] sm:$0xf]
  %v271 = vld [vmem:[%s2 + $0x180] sm:$0xf]
  %v272 = vld [vmem:[%s2 + $0x184] sm:$0xf]
  %v273 = vld [vmem:[%s2 + $0x188] sm:$0xf]
  %v274 = vld [vmem:[%s2 + $0x18c] sm:$0xf]
  %v275 = vld [vmem:[%s2 + $0x190] sm:$0xf]
  %v276 = vld [vmem:[%s2 + $0x194] sm:$0xf]
  %v277 = vld [vmem:[%s2 + $0x198] sm:$0xf]
  %v278 = vld [vmem:[%s2 + $0x19c] sm:$0xf]
  %v279 = vld [vmem:[%s2 + $0x1a0] sm:$0xf]
  %v280 = vld [vmem:[%s2 + $0x1a4] sm:$0xf]
  %v281 = vld [vmem:[%s2 + $0x1a8] sm:$0xf]
  %v282 = vld [vmem:[%s2 + $0x1ac] sm:$0xf]
  %v283 = vld [vmem:[%s2 + $0x1b0] sm:$0xf]
  %v284 = vld [vmem:[%s2 + $0x1b4] sm:$0xf]
  %v285 = vld [vmem:[%s2 + $0x1b8] sm:$0xf]
  %v286 = vld [vmem:[%s2 + $0x1bc] sm:$0xf]
  %v287 = vld [vmem:[%s2 + $0x1c0] sm:$0xf]
  %v288 = vld [vmem:[%s2 + $0x1c4] sm:$0xf]
  %v289 = vld [vmem:[%s2 + $0x1c8] sm:$0xf]
  %v290 = vld [vmem:[%s2 + $0x1cc] sm:$0xf]
  %v291 = vld [vmem:[%s2 + $0x1d0] sm:$0xf]
  %v292 = vld [vmem:[%s2 + $0x1d4] sm:$0xf]
  %v293 = vld [vmem:[%s2 + $0x1d8] sm:$0xf]
  %v294 = vld [vmem:[%s2 + $0x1dc] sm:$0xf]
  %v295 = vld [vmem:[%s2 + $0x1e0] sm:$0xf]
  %v296 = vld [vmem:[%s2 + $0x1e4] sm:$0xf]
  %v297 = vld [vmem:[%s2 + $0x1e8] sm:$0xf]
  %v298 = vld [vmem:[%s2 + $0x1ec] sm:$0xf]
  %v299 = vld [vmem:[%s2 + $0x1f0] sm:$0xf]
  %v300 = vld [vmem:[%s2 + $0x1f4] sm:$0xf]
  %v301 = vld [vmem:[%s2 + $0x1f8] sm:$0xf]
  %v302 = vld [vmem:[%s2 + $0x1fc] sm:$0xf]
  %v303 = vld [vmem:[%s2 + $0x200] sm:$0xf]
  %v304 = vld [vmem:[%s2 + $0x204] sm:$0xf]
  %v305 = vld [vmem:[%s2 + $0x208] sm:$0xf]
  %v306 = vld [vmem:[%s2 + $0x20c] sm:$0xf]
  %v307 = vld [vmem:[%s2 + $0x210] sm:$0xf]
  %v308 = vld [vmem:[%s2 + $0x214] sm:$0xf]
  %v309 = vld [vmem:[%s2 + $0x218] sm:$0xf]
  %v310 = vld [vmem:[%s2 + $0x21c] sm:$0xf]
  %v311 = vld [vmem:[%s2 + $0x220] sm:$0xf]
  %v312 = vld [vmem:[%s2 + $0x224] sm:$0xf]
  %v313 = vld [vmem:[%s2 + $0x228] sm:$0xf]
  %v314 = vld [vmem:[%s2 + $0x22c] sm:$0xf]
  %v315 = vld [vmem:[%s2 + $0x230] sm:$0xf]
  %v316 = vld [vmem:[%s2 + $0x234] sm:$0xf]
  %v317 = vld [vmem:[%s2 + $0x238] sm:$0xf]
  %v318 = vld [vmem:[%s2 + $0x23c] sm:$0xf]
  %v319 = vld [vmem:[%s1] sm:$0xff]
  %v320 = vld [vmem:[%s1 + $0x8] sm:$0xff]
  %v321 = vld [vmem:[%s1 + $0x10] sm:$0xff]
  %v322 = vld [vmem:[%s1 + $0x18] sm:$0xff]
  %v323 = vld [vmem:[%s1 + $0x20] sm:$0xff]
  %v324 = vld [vmem:[%s1 + $0x28] sm:$0xff]
  %v325 = vld [vmem:[%s1 + $0x30] sm:$0xff]
  %v326 = vld [vmem:[%s1 + $0x38] sm:$0xff]
  %v327 = vld [vmem:[%s1 + $0x40] sm:$0xff]
  %v328 = vld [vmem:[%s1 + $0x48] sm:$0xff]
  %v329 = vld [vmem:[%s1 + $0x50] sm:$0xff]
  %v330 = vld [vmem:[%s1 + $0x58] sm:$0xff]
  %v331 = vld [vmem:[%s1 + $0x60] sm:$0xff]
  %v332 = vld [vmem:[%s1 + $0x68] sm:$0xff]
  %v333 = vld [vmem:[%s1 + $0x70] sm:$0xff]
  %v334 = vld [vmem:[%s1 + $0x78] sm:$0xff]
  %v335 = vld [vmem:[%s1 + $0x80] sm:$0xff]
  %v336 = vld [vmem:[%s1 + $0x88] sm:$0xff]
  %v337 = vld [vmem:[%s1 + $0x90] sm:$0xff]
  %v338 = vld [vmem:[%s1 + $0x98] sm:$0xff]
  %v339 = vld [vmem:[%s1 + $0xa0] sm:$0xff]
  %v340 = vld [vmem:[%s1 + $0xa8] sm:$0xff]
  %v341 = vld [vmem:[%s1 + $0xb0] sm:$0xff]
  %v342 = vld [vmem:[%s1 + $0xb8] sm:$0xff]
  %v343 = vld [vmem:[%s1 + $0xc0] sm:$0xff]
  %v344 = vld [vmem:[%s1 + $0xc8] sm:$0xff]
  %v345 = vld [vmem:[%s1 + $0xd0] sm:$0xff]
  %v346 = vld [vmem:[%s1 + $0xd8] sm:$0xff]
  %v347 = vld [vmem:[%s1 + $0xe0] sm:$0xff]
  %v348 = vld [vmem:[%s1 + $0xe8] sm:$0xff]
  %v349 = vld [vmem:[%s1 + $0xf0] sm:$0xff]
  %v350 = vld [vmem:[%s1 + $0xf8] sm:$0xff]
  %352 = vset.pattern.permute.xlu0 0
  %353 = vperm.xlu0 %352, %v319
  %v354 = vpop.permute.xlu0 %353
  %357 = vset.pattern.permute.xlu0 0
  %358 = vperm.xlu0 %357, %v320
  %v359 = vpop.permute.xlu0 %358
  %362 = vset.pattern.permute.xlu0 0
  %363 = vperm.xlu0 %362, %v321
  %v364 = vpop.permute.xlu0 %363
  %367 = vset.pattern.permute.xlu0 0
  %368 = vperm.xlu0 %367, %v322
  %v369 = vpop.permute.xlu0 %368
  %372 = vset.pattern.permute.xlu0 0
  %373 = vperm.xlu0 %372, %v323
  %v374 = vpop.permute.xlu0 %373
  %377 = vset.pattern.permute.xlu0 0
  %378 = vperm.xlu0 %377, %v324
  %v379 = vpop.permute.xlu0 %378
  %382 = vset.pattern.permute.xlu0 0
  %383 = vperm.xlu0 %382, %v325
  %v384 = vpop.permute.xlu0 %383
  %387 = vset.pattern.permute.xlu0 0
  %388 = vperm.xlu0 %387, %v326
  %v389 = vpop.permute.xlu0 %388
  %392 = vset.pattern.permute.xlu0 0
  %393 = vperm.xlu0 %392, %v327
  %v394 = vpop.permute.xlu0 %393
  %397 = vset.pattern.permute.xlu0 0
  %398 = vperm.xlu0 %397, %v328
  %v399 = vpop.permute.xlu0 %398
  %402 = vset.pattern.permute.xlu0 0
  %403 = vperm.xlu0 %402, %v329
  %v404 = vpop.permute.xlu0 %403
  %407 = vset.pattern.permute.xlu0 0
  %408 = vperm.xlu0 %407, %v330
  %v409 = vpop.permute.xlu0 %408
  %412 = vset.pattern.permute.xlu0 0
  %413 = vperm.xlu0 %412, %v331
  %v414 = vpop.permute.xlu0 %413
  %417 = vset.pattern.permute.xlu0 0
  %418 = vperm.xlu0 %417, %v332
  %v419 = vpop.permute.xlu0 %418
  %422 = vset.pattern.permute.xlu0 0
  %423 = vperm.xlu0 %422, %v333
  %v424 = vpop.permute.xlu0 %423
  %427 = vset.pattern.permute.xlu0 0
  %428 = vperm.xlu0 %427, %v334
  %v429 = vpop.permute.xlu0 %428
  %432 = vset.pattern.permute.xlu0 0
  %433 = vperm.xlu0 %432, %v335
  %v434 = vpop.permute.xlu0 %433
  %437 = vset.pattern.permute.xlu0 0
  %438 = vperm.xlu0 %437, %v336
  %v439 = vpop.permute.xlu0 %438
  %442 = vset.pattern.permute.xlu0 0
  %443 = vperm.xlu0 %442, %v337
  %v444 = vpop.permute.xlu0 %443
  %447 = vset.pattern.permute.xlu0 0
  %448 = vperm.xlu0 %447, %v338
  %v449 = vpop.permute.xlu0 %448
  %452 = vset.pattern.permute.xlu0 0
  %453 = vperm.xlu0 %452, %v339
  %v454 = vpop.permute.xlu0 %453
  %457 = vset.pattern.permute.xlu0 0
  %458 = vperm.xlu0 %457, %v340
  %v459 = vpop.permute.xlu0 %458
  %462 = vset.pattern.permute.xlu0 0
  %463 = vperm.xlu0 %462, %v341
  %v464 = vpop.permute.xlu0 %463
  %467 = vset.pattern.permute.xlu0 0
  %468 = vperm.xlu0 %467, %v342
  %v469 = vpop.permute.xlu0 %468
  %472 = vset.pattern.permute.xlu0 0
  %473 = vperm.xlu0 %472, %v343
  %v474 = vpop.permute.xlu0 %473
  %477 = vset.pattern.permute.xlu0 0
  %478 = vperm.xlu0 %477, %v344
  %v479 = vpop.permute.xlu0 %478
  %482 = vset.pattern.permute.xlu0 0
  %483 = vperm.xlu0 %482, %v345
  %v484 = vpop.permute.xlu0 %483
  %487 = vset.pattern.permute.xlu0 0
  %488 = vperm.xlu0 %487, %v346
  %v489 = vpop.permute.xlu0 %488
  %492 = vset.pattern.permute.xlu0 0
  %493 = vperm.xlu0 %492, %v347
  %v494 = vpop.permute.xlu0 %493
  %497 = vset.pattern.permute.xlu0 0
  %498 = vperm.xlu0 %497, %v348
  %v499 = vpop.permute.xlu0 %498
  %502 = vset.pattern.permute.xlu0 0
  %503 = vperm.xlu0 %502, %v349
  %v504 = vpop.permute.xlu0 %503
  %507 = vset.pattern.permute.xlu0 0
  %508 = vperm.xlu0 %507, %v350
  %v509 = vpop.permute.xlu0 %508
  %v671 = vunpack.c.l.b16 %v15
  %v672 = vunpack.c.h.b16 %v15
  %v673 = vunpack.c.l.b16 %v16
  %v674 = vunpack.c.h.b16 %v16
  %v675 = vunpack.c.l.b16 %v17
  %v676 = vunpack.c.h.b16 %v17
  %v677 = vunpack.c.l.b16 %v18
  %v678 = vunpack.c.h.b16 %v18
  %v679 = vunpack.c.l.b16 %v19
  %v680 = vunpack.c.l.b16 %v20
  %v681 = vunpack.c.h.b16 %v20
  %v682 = vunpack.c.l.b16 %v21
  %v683 = vunpack.c.h.b16 %v21
  %v684 = vunpack.c.l.b16 %v22
  %v685 = vunpack.c.h.b16 %v22
  %v686 = vunpack.c.l.b16 %v23
  %v687 = vunpack.c.h.b16 %v23
  %v688 = vunpack.c.l.b16 %v24
  %v689 = vunpack.c.l.b16 %v25
  %v690 = vunpack.c.h.b16 %v25
  %v691 = vunpack.c.l.b16 %v26
  %v692 = vunpack.c.h.b16 %v26
  %v693 = vunpack.c.l.b16 %v27
  %v694 = vunpack.c.h.b16 %v27
  %v695 = vunpack.c.l.b16 %v28
  %v696 = vunpack.c.h.b16 %v28
  %v697 = vunpack.c.l.b16 %v29
  %v698 = vunpack.c.l.b16 %v30
  %v699 = vunpack.c.h.b16 %v30
  %v700 = vunpack.c.l.b16 %v31
  %v701 = vunpack.c.h.b16 %v31
  %v702 = vunpack.c.l.b16 %v32
  %v703 = vunpack.c.h.b16 %v32
  %v704 = vunpack.c.l.b16 %v33
  %v705 = vunpack.c.h.b16 %v33
  %v706 = vunpack.c.l.b16 %v34
  %v707 = vunpack.c.l.b16 %v35
  %v708 = vunpack.c.h.b16 %v35
  %v709 = vunpack.c.l.b16 %v36
  %v710 = vunpack.c.h.b16 %v36
  %v711 = vunpack.c.l.b16 %v37
  %v712 = vunpack.c.h.b16 %v37
  %v713 = vunpack.c.l.b16 %v38
  %v714 = vunpack.c.h.b16 %v38
  %v715 = vunpack.c.l.b16 %v39
  %v716 = vunpack.c.l.b16 %v40
  %v717 = vunpack.c.h.b16 %v40
  %v718 = vunpack.c.l.b16 %v41
  %v719 = vunpack.c.h.b16 %v41
  %v720 = vunpack.c.l.b16 %v42
  %v721 = vunpack.c.h.b16 %v42
  %v722 = vunpack.c.l.b16 %v43
  %v723 = vunpack.c.h.b16 %v43
  %v724 = vunpack.c.l.b16 %v44
  %v725 = vunpack.c.l.b16 %v45
  %v726 = vunpack.c.h.b16 %v45
  %v727 = vunpack.c.l.b16 %v46
  %v728 = vunpack.c.h.b16 %v46
  %v729 = vunpack.c.l.b16 %v47
  %v730 = vunpack.c.h.b16 %v47
  %v731 = vunpack.c.l.b16 %v48
  %v732 = vunpack.c.h.b16 %v48
  %v733 = vunpack.c.l.b16 %v49
  %v734 = vunpack.c.l.b16 %v50
  %v735 = vunpack.c.h.b16 %v50
  %v736 = vunpack.c.l.b16 %v51
  %v737 = vunpack.c.h.b16 %v51
  %v738 = vunpack.c.l.b16 %v52
  %v739 = vunpack.c.h.b16 %v52
  %v740 = vunpack.c.l.b16 %v53
  %v741 = vunpack.c.h.b16 %v53
  %v742 = vunpack.c.l.b16 %v54
  %v743 = vunpack.c.l.b16 %v55
  %v744 = vunpack.c.h.b16 %v55
  %v745 = vunpack.c.l.b16 %v56
  %v746 = vunpack.c.h.b16 %v56
  %v747 = vunpack.c.l.b16 %v57
  %v748 = vunpack.c.h.b16 %v57
  %v749 = vunpack.c.l.b16 %v58
  %v750 = vunpack.c.h.b16 %v58
  %v751 = vunpack.c.l.b16 %v59
  %v752 = vunpack.c.l.b16 %v60
  %v753 = vunpack.c.h.b16 %v60
  %v754 = vunpack.c.l.b16 %v61
  %v755 = vunpack.c.h.b16 %v61
  %v756 = vunpack.c.l.b16 %v62
  %v757 = vunpack.c.h.b16 %v62
  %v758 = vunpack.c.l.b16 %v63
  %v759 = vunpack.c.h.b16 %v63
  %v760 = vunpack.c.l.b16 %v64
  %v761 = vunpack.c.l.b16 %v65
  %v762 = vunpack.c.h.b16 %v65
  %v763 = vunpack.c.l.b16 %v66
  %v764 = vunpack.c.h.b16 %v66
  %v765 = vunpack.c.l.b16 %v67
  %v766 = vunpack.c.h.b16 %v67
  %v767 = vunpack.c.l.b16 %v68
  %v768 = vunpack.c.h.b16 %v68
  %v769 = vunpack.c.l.b16 %v69
  %v770 = vunpack.c.l.b16 %v70
  %v771 = vunpack.c.h.b16 %v70
  %v772 = vunpack.c.l.b16 %v71
  %v773 = vunpack.c.h.b16 %v71
  %v774 = vunpack.c.l.b16 %v72
  %v775 = vunpack.c.h.b16 %v72
  %v776 = vunpack.c.l.b16 %v73
  %v777 = vunpack.c.h.b16 %v73
  %v778 = vunpack.c.l.b16 %v74
  %v779 = vunpack.c.l.b16 %v75
  %v780 = vunpack.c.h.b16 %v75
  %v781 = vunpack.c.l.b16 %v76
  %v782 = vunpack.c.h.b16 %v76
  %v783 = vunpack.c.l.b16 %v77
  %v784 = vunpack.c.h.b16 %v77
  %v785 = vunpack.c.l.b16 %v78
  %v786 = vunpack.c.h.b16 %v78
  %v787 = vunpack.c.l.b16 %v79
  %v788 = vunpack.c.l.b16 %v80
  %v789 = vunpack.c.h.b16 %v80
  %v790 = vunpack.c.l.b16 %v81
  %v791 = vunpack.c.h.b16 %v81
  %v792 = vunpack.c.l.b16 %v82
  %v793 = vunpack.c.h.b16 %v82
  %v794 = vunpack.c.l.b16 %v83
  %v795 = vunpack.c.h.b16 %v83
  %v796 = vunpack.c.l.b16 %v84
  %v797 = vunpack.c.l.b16 %v85
  %v798 = vunpack.c.h.b16 %v85
  %v799 = vunpack.c.l.b16 %v86
  %v800 = vunpack.c.h.b16 %v86
  %v801 = vunpack.c.l.b16 %v87
  %v802 = vunpack.c.h.b16 %v87
  %v803 = vunpack.c.l.b16 %v88
  %v804 = vunpack.c.h.b16 %v88
  %v805 = vunpack.c.l.b16 %v89
  %v806 = vunpack.c.l.b16 %v90
  %v807 = vunpack.c.h.b16 %v90
  %v808 = vunpack.c.l.b16 %v91
  %v809 = vunpack.c.h.b16 %v91
  %v810 = vunpack.c.l.b16 %v92
  %v811 = vunpack.c.h.b16 %v92
  %v812 = vunpack.c.l.b16 %v93
  %v813 = vunpack.c.h.b16 %v93
  %v814 = vunpack.c.l.b16 %v94
  %v815 = vunpack.c.l.b16 %v95
  %v816 = vunpack.c.h.b16 %v95
  %v817 = vunpack.c.l.b16 %v96
  %v818 = vunpack.c.h.b16 %v96
  %v819 = vunpack.c.l.b16 %v97
  %v820 = vunpack.c.h.b16 %v97
  %v821 = vunpack.c.l.b16 %v98
  %v822 = vunpack.c.h.b16 %v98
  %v823 = vunpack.c.l.b16 %v99
  %v824 = vunpack.c.l.b16 %v100
  %v825 = vunpack.c.h.b16 %v100
  %v826 = vunpack.c.l.b16 %v101
  %v827 = vunpack.c.h.b16 %v101
  %v828 = vunpack.c.l.b16 %v102
  %v829 = vunpack.c.h.b16 %v102
  %v830 = vunpack.c.l.b16 %v103
  %v831 = vunpack.c.h.b16 %v103
  %v832 = vunpack.c.l.b16 %v104
  %v833 = vunpack.c.l.b16 %v105
  %v834 = vunpack.c.h.b16 %v105
  %v835 = vunpack.c.l.b16 %v106
  %v836 = vunpack.c.h.b16 %v106
  %v837 = vunpack.c.l.b16 %v107
  %v838 = vunpack.c.h.b16 %v107
  %v839 = vunpack.c.l.b16 %v108
  %v840 = vunpack.c.h.b16 %v108
  %v841 = vunpack.c.l.b16 %v109
  %v842 = vunpack.c.l.b16 %v110
  %v843 = vunpack.c.h.b16 %v110
  %v844 = vunpack.c.l.b16 %v111
  %v845 = vunpack.c.h.b16 %v111
  %v846 = vunpack.c.l.b16 %v112
  %v847 = vunpack.c.h.b16 %v112
  %v848 = vunpack.c.l.b16 %v113
  %v849 = vunpack.c.h.b16 %v113
  %v850 = vunpack.c.l.b16 %v114
  %v851 = vunpack.c.l.b16 %v115
  %v852 = vunpack.c.h.b16 %v115
  %v853 = vunpack.c.l.b16 %v116
  %v854 = vunpack.c.h.b16 %v116
  %v855 = vunpack.c.l.b16 %v117
  %v856 = vunpack.c.h.b16 %v117
  %v857 = vunpack.c.l.b16 %v118
  %v858 = vunpack.c.h.b16 %v118
  %v859 = vunpack.c.l.b16 %v119
  %v860 = vunpack.c.l.b16 %v120
  %v861 = vunpack.c.h.b16 %v120
  %v862 = vunpack.c.l.b16 %v121
  %v863 = vunpack.c.h.b16 %v121
  %v864 = vunpack.c.l.b16 %v122
  %v865 = vunpack.c.h.b16 %v122
  %v866 = vunpack.c.l.b16 %v123
  %v867 = vunpack.c.h.b16 %v123
  %v868 = vunpack.c.l.b16 %v124
  %v869 = vunpack.c.l.b16 %v125
  %v870 = vunpack.c.h.b16 %v125
  %v871 = vunpack.c.l.b16 %v126
  %v872 = vunpack.c.h.b16 %v126
  %v873 = vunpack.c.l.b16 %v127
  %v874 = vunpack.c.h.b16 %v127
  %v875 = vunpack.c.l.b16 %v128
  %v876 = vunpack.c.h.b16 %v128
  %v877 = vunpack.c.l.b16 %v129
  %v878 = vunpack.c.l.b16 %v130
  %v879 = vunpack.c.h.b16 %v130
  %v880 = vunpack.c.l.b16 %v131
  %v881 = vunpack.c.h.b16 %v131
  %v882 = vunpack.c.l.b16 %v132
  %v883 = vunpack.c.h.b16 %v132
  %v884 = vunpack.c.l.b16 %v133
  %v885 = vunpack.c.h.b16 %v133
  %v886 = vunpack.c.l.b16 %v134
  %v887 = vunpack.c.l.b16 %v135
  %v888 = vunpack.c.h.b16 %v135
  %v889 = vunpack.c.l.b16 %v136
  %v890 = vunpack.c.h.b16 %v136
  %v891 = vunpack.c.l.b16 %v137
  %v892 = vunpack.c.h.b16 %v137
  %v893 = vunpack.c.l.b16 %v138
  %v894 = vunpack.c.h.b16 %v138
  %v895 = vunpack.c.l.b16 %v139
  %v896 = vunpack.c.l.b16 %v140
  %v897 = vunpack.c.h.b16 %v140
  %v898 = vunpack.c.l.b16 %v141
  %v899 = vunpack.c.h.b16 %v141
  %v900 = vunpack.c.l.b16 %v142
  %v901 = vunpack.c.h.b16 %v142
  %v902 = vunpack.c.l.b16 %v143
  %v903 = vunpack.c.h.b16 %v143
  %v904 = vunpack.c.l.b16 %v144
  %v905 = vunpack.c.l.b16 %v145
  %v906 = vunpack.c.h.b16 %v145
  %v907 = vunpack.c.l.b16 %v146
  %v908 = vunpack.c.h.b16 %v146
  %v909 = vunpack.c.l.b16 %v147
  %v910 = vunpack.c.h.b16 %v147
  %v911 = vunpack.c.l.b16 %v148
  %v912 = vunpack.c.h.b16 %v148
  %v913 = vunpack.c.l.b16 %v149
  %v914 = vunpack.c.l.b16 %v150
  %v915 = vunpack.c.h.b16 %v150
  %v916 = vunpack.c.l.b16 %v151
  %v917 = vunpack.c.h.b16 %v151
  %v918 = vunpack.c.l.b16 %v152
  %v919 = vunpack.c.h.b16 %v152
  %v920 = vunpack.c.l.b16 %v153
  %v921 = vunpack.c.h.b16 %v153
  %v922 = vunpack.c.l.b16 %v154
  %v923 = vunpack.c.l.b16 %v155
  %v924 = vunpack.c.h.b16 %v155
  %v925 = vunpack.c.l.b16 %v156
  %v926 = vunpack.c.h.b16 %v156
  %v927 = vunpack.c.l.b16 %v157
  %v928 = vunpack.c.h.b16 %v157
  %v929 = vunpack.c.l.b16 %v158
  %v930 = vunpack.c.h.b16 %v158
  %v931 = vunpack.c.l.b16 %v159
  %v932 = vunpack.c.l.b16 %v160
  %v933 = vunpack.c.h.b16 %v160
  %v934 = vunpack.c.l.b16 %v161
  %v935 = vunpack.c.h.b16 %v161
  %v936 = vunpack.c.l.b16 %v162
  %v937 = vunpack.c.h.b16 %v162
  %v938 = vunpack.c.l.b16 %v163
  %v939 = vunpack.c.h.b16 %v163
  %v940 = vunpack.c.l.b16 %v164
  %v941 = vunpack.c.l.b16 %v165
  %v942 = vunpack.c.h.b16 %v165
  %v943 = vunpack.c.l.b16 %v166
  %v944 = vunpack.c.h.b16 %v166
  %v945 = vunpack.c.l.b16 %v167
  %v946 = vunpack.c.h.b16 %v167
  %v947 = vunpack.c.l.b16 %v168
  %v948 = vunpack.c.h.b16 %v168
  %v949 = vunpack.c.l.b16 %v169
  %v950 = vunpack.c.l.b16 %v170
  %v951 = vunpack.c.h.b16 %v170
  %v952 = vunpack.c.l.b16 %v171
  %v953 = vunpack.c.h.b16 %v171
  %v954 = vunpack.c.l.b16 %v172
  %v955 = vunpack.c.h.b16 %v172
  %v956 = vunpack.c.l.b16 %v173
  %v957 = vunpack.c.h.b16 %v173
  %v958 = vunpack.c.l.b16 %v174
  %v959 = vpack.c.b16 %v680, %v671
  %v960 = vpack.c.b16 %v681, %v672
  %v961 = vpack.c.b16 %v682, %v673
  %v962 = vpack.c.b16 %v683, %v674
  %v963 = vpack.c.b16 %v684, %v675
  %v964 = vpack.c.b16 %v685, %v676
  %v965 = vpack.c.b16 %v686, %v677
  %v966 = vpack.c.b16 %v687, %v678
  %v967 = vpack.c.b16 %v688, %v679
  %v968 = vpack.c.b16 %v698, %v689
  %v969 = vpack.c.b16 %v699, %v690
  %v970 = vpack.c.b16 %v700, %v691
  %v971 = vpack.c.b16 %v701, %v692
  %v972 = vpack.c.b16 %v702, %v693
  %v973 = vpack.c.b16 %v703, %v694
  %v974 = vpack.c.b16 %v704, %v695
  %v975 = vpack.c.b16 %v705, %v696
  %v976 = vpack.c.b16 %v706, %v697
  %v977 = vpack.c.b16 %v716, %v707
  %v978 = vpack.c.b16 %v717, %v708
  %v979 = vpack.c.b16 %v718, %v709
  %v980 = vpack.c.b16 %v719, %v710
  %v981 = vpack.c.b16 %v720, %v711
  %v982 = vpack.c.b16 %v721, %v712
  %v983 = vpack.c.b16 %v722, %v713
  %v984 = vpack.c.b16 %v723, %v714
  %v985 = vpack.c.b16 %v724, %v715
  %v986 = vpack.c.b16 %v734, %v725
  %v987 = vpack.c.b16 %v735, %v726
  %v988 = vpack.c.b16 %v736, %v727
  %v989 = vpack.c.b16 %v737, %v728
  %v990 = vpack.c.b16 %v738, %v729
  %v991 = vpack.c.b16 %v739, %v730
  %v992 = vpack.c.b16 %v740, %v731
  %v993 = vpack.c.b16 %v741, %v732
  %v994 = vpack.c.b16 %v742, %v733
  %v995 = vpack.c.b16 %v752, %v743
  %v996 = vpack.c.b16 %v753, %v744
  %v997 = vpack.c.b16 %v754, %v745
  %v998 = vpack.c.b16 %v755, %v746
  %v999 = vpack.c.b16 %v756, %v747
  %v1000 = vpack.c.b16 %v757, %v748
  %v1001 = vpack.c.b16 %v758, %v749
  %v1002 = vpack.c.b16 %v759, %v750
  %v1003 = vpack.c.b16 %v760, %v751
  %v1004 = vpack.c.b16 %v770, %v761
  %v1005 = vpack.c.b16 %v771, %v762
  %v1006 = vpack.c.b16 %v772, %v763
  %v1007 = vpack.c.b16 %v773, %v764
  %v1008 = vpack.c.b16 %v774, %v765
  %v1009 = vpack.c.b16 %v775, %v766
  %v1010 = vpack.c.b16 %v776, %v767
  %v1011 = vpack.c.b16 %v777, %v768
  %v1012 = vpack.c.b16 %v778, %v769
  %v1013 = vpack.c.b16 %v788, %v779
  %v1014 = vpack.c.b16 %v789, %v780
  %v1015 = vpack.c.b16 %v790, %v781
  %v1016 = vpack.c.b16 %v791, %v782
  %v1017 = vpack.c.b16 %v792, %v783
  %v1018 = vpack.c.b16 %v793, %v784
  %v1019 = vpack.c.b16 %v794, %v785
  %v1020 = vpack.c.b16 %v795, %v786
  %v1021 = vpack.c.b16 %v796, %v787
  %v1022 = vpack.c.b16 %v806, %v797
  %v1023 = vpack.c.b16 %v807, %v798
  %v1024 = vpack.c.b16 %v808, %v799
  %v1025 = vpack.c.b16 %v809, %v800
  %v1026 = vpack.c.b16 %v810, %v801
  %v1027 = vpack.c.b16 %v811, %v802
  %v1028 = vpack.c.b16 %v812, %v803
  %v1029 = vpack.c.b16 %v813, %v804
  %v1030 = vpack.c.b16 %v814, %v805
  %v1031 = vpack.c.b16 %v824, %v815
  %v1032 = vpack.c.b16 %v825, %v816
  %v1033 = vpack.c.b16 %v826, %v817
  %v1034 = vpack.c.b16 %v827, %v818
  %v1035 = vpack.c.b16 %v828, %v819
  %v1036 = vpack.c.b16 %v829, %v820
  %v1037 = vpack.c.b16 %v830, %v821
  %v1038 = vpack.c.b16 %v831, %v822
  %v1039 = vpack.c.b16 %v832, %v823
  %v1040 = vpack.c.b16 %v842, %v833
  %v1041 = vpack.c.b16 %v843, %v834
  %v1042 = vpack.c.b16 %v844, %v835
  %v1043 = vpack.c.b16 %v845, %v836
  %v1044 = vpack.c.b16 %v846, %v837
  %v1045 = vpack.c.b16 %v847, %v838
  %v1046 = vpack.c.b16 %v848, %v839
  %v1047 = vpack.c.b16 %v849, %v840
  %v1048 = vpack.c.b16 %v850, %v841
  %v1049 = vpack.c.b16 %v860, %v851
  %v1050 = vpack.c.b16 %v861, %v852
  %v1051 = vpack.c.b16 %v862, %v853
  %v1052 = vpack.c.b16 %v863, %v854
  %v1053 = vpack.c.b16 %v864, %v855
  %v1054 = vpack.c.b16 %v865, %v856
  %v1055 = vpack.c.b16 %v866, %v857
  %v1056 = vpack.c.b16 %v867, %v858
  %v1057 = vpack.c.b16 %v868, %v859
  %v1058 = vpack.c.b16 %v878, %v869
  %v1059 = vpack.c.b16 %v879, %v870
  %v1060 = vpack.c.b16 %v880, %v871
  %v1061 = vpack.c.b16 %v881, %v872
  %v1062 = vpack.c.b16 %v882, %v873
  %v1063 = vpack.c.b16 %v883, %v874
  %v1064 = vpack.c.b16 %v884, %v875
  %v1065 = vpack.c.b16 %v885, %v876
  %v1066 = vpack.c.b16 %v886, %v877
  %v1067 = vpack.c.b16 %v896, %v887
  %v1068 = vpack.c.b16 %v897, %v888
  %v1069 = vpack.c.b16 %v898, %v889
  %v1070 = vpack.c.b16 %v899, %v890
  %v1071 = vpack.c.b16 %v900, %v891
  %v1072 = vpack.c.b16 %v901, %v892
  %v1073 = vpack.c.b16 %v902, %v893
  %v1074 = vpack.c.b16 %v903, %v894
  %v1075 = vpack.c.b16 %v904, %v895
  %v1076 = vpack.c.b16 %v914, %v905
  %v1077 = vpack.c.b16 %v915, %v906
  %v1078 = vpack.c.b16 %v916, %v907
  %v1079 = vpack.c.b16 %v917, %v908
  %v1080 = vpack.c.b16 %v918, %v909
  %v1081 = vpack.c.b16 %v919, %v910
  %v1082 = vpack.c.b16 %v920, %v911
  %v1083 = vpack.c.b16 %v921, %v912
  %v1084 = vpack.c.b16 %v922, %v913
  %v1085 = vpack.c.b16 %v932, %v923
  %v1086 = vpack.c.b16 %v933, %v924
  %v1087 = vpack.c.b16 %v934, %v925
  %v1088 = vpack.c.b16 %v935, %v926
  %v1089 = vpack.c.b16 %v936, %v927
  %v1090 = vpack.c.b16 %v937, %v928
  %v1091 = vpack.c.b16 %v938, %v929
  %v1092 = vpack.c.b16 %v939, %v930
  %v1093 = vpack.c.b16 %v940, %v931
  %v1094 = vpack.c.b16 %v950, %v941
  %v1095 = vpack.c.b16 %v951, %v942
  %v1096 = vpack.c.b16 %v952, %v943
  %v1097 = vpack.c.b16 %v953, %v944
  %v1098 = vpack.c.b16 %v954, %v945
  %v1099 = vpack.c.b16 %v955, %v946
  %v1100 = vpack.c.b16 %v956, %v947
  %v1101 = vpack.c.b16 %v957, %v948
  %v1102 = vpack.c.b16 %v958, %v949
  %v1391 = vunpack.c.l.b16 %v175
  %v1392 = vunpack.c.l.b16 %v176
  %v1393 = vunpack.c.l.b16 %v177
  %v1394 = vunpack.c.l.b16 %v178
  %v1395 = vunpack.c.l.b16 %v179
  %v1396 = vunpack.c.l.b16 %v180
  %v1397 = vunpack.c.l.b16 %v181
  %v1398 = vunpack.c.l.b16 %v182
  %v1399 = vunpack.c.l.b16 %v183
  %v1400 = vunpack.c.l.b16 %v184
  %v1401 = vunpack.c.l.b16 %v185
  %v1402 = vunpack.c.l.b16 %v186
  %v1403 = vunpack.c.l.b16 %v187
  %v1404 = vunpack.c.l.b16 %v188
  %v1405 = vunpack.c.l.b16 %v189
  %v1406 = vunpack.c.l.b16 %v190
  %v1407 = vunpack.c.l.b16 %v191
  %v1408 = vunpack.c.l.b16 %v192
  %v1409 = vunpack.c.l.b16 %v193
  %v1410 = vunpack.c.l.b16 %v194
  %v1411 = vunpack.c.l.b16 %v195
  %v1412 = vunpack.c.l.b16 %v196
  %v1413 = vunpack.c.l.b16 %v197
  %v1414 = vunpack.c.l.b16 %v198
  %v1415 = vunpack.c.l.b16 %v199
  %v1416 = vunpack.c.l.b16 %v200
  %v1417 = vunpack.c.l.b16 %v201
  %v1418 = vunpack.c.l.b16 %v202
  %v1419 = vunpack.c.l.b16 %v203
  %v1420 = vunpack.c.l.b16 %v204
  %v1421 = vunpack.c.l.b16 %v205
  %v1422 = vunpack.c.l.b16 %v206
  %v1423 = vunpack.c.l.b16 %v207
  %v1424 = vunpack.c.l.b16 %v208
  %v1425 = vunpack.c.l.b16 %v209
  %v1426 = vunpack.c.l.b16 %v210
  %v1427 = vunpack.c.l.b16 %v211
  %v1428 = vunpack.c.l.b16 %v212
  %v1429 = vunpack.c.l.b16 %v213
  %v1430 = vunpack.c.l.b16 %v214
  %v1431 = vunpack.c.l.b16 %v215
  %v1432 = vunpack.c.l.b16 %v216
  %v1433 = vunpack.c.l.b16 %v217
  %v1434 = vunpack.c.l.b16 %v218
  %v1435 = vunpack.c.l.b16 %v219
  %v1436 = vunpack.c.l.b16 %v220
  %v1437 = vunpack.c.l.b16 %v221
  %v1438 = vunpack.c.l.b16 %v222
  %v1439 = vunpack.c.l.b16 %v223
  %v1440 = vunpack.c.l.b16 %v224
  %v1441 = vunpack.c.l.b16 %v225
  %v1442 = vunpack.c.l.b16 %v226
  %v1443 = vunpack.c.l.b16 %v227
  %v1444 = vunpack.c.l.b16 %v228
  %v1445 = vunpack.c.l.b16 %v229
  %v1446 = vunpack.c.l.b16 %v230
  %v1447 = vunpack.c.l.b16 %v231
  %v1448 = vunpack.c.l.b16 %v232
  %v1449 = vunpack.c.l.b16 %v233
  %v1450 = vunpack.c.l.b16 %v234
  %v1451 = vunpack.c.l.b16 %v235
  %v1452 = vunpack.c.l.b16 %v236
  %v1453 = vunpack.c.l.b16 %v237
  %v1454 = vunpack.c.l.b16 %v238
  %v1455 = vunpack.c.l.b16 %v239
  %v1456 = vunpack.c.l.b16 %v240
  %v1457 = vunpack.c.l.b16 %v241
  %v1458 = vunpack.c.l.b16 %v242
  %v1459 = vunpack.c.l.b16 %v243
  %v1460 = vunpack.c.l.b16 %v244
  %v1461 = vunpack.c.l.b16 %v245
  %v1462 = vunpack.c.l.b16 %v246
  %v1463 = vunpack.c.l.b16 %v247
  %v1464 = vunpack.c.l.b16 %v248
  %v1465 = vunpack.c.l.b16 %v249
  %v1466 = vunpack.c.l.b16 %v250
  %v1467 = vunpack.c.l.b16 %v251
  %v1468 = vunpack.c.l.b16 %v252
  %v1469 = vunpack.c.l.b16 %v253
  %v1470 = vunpack.c.l.b16 %v254
  %v1471 = vunpack.c.l.b16 %v255
  %v1472 = vunpack.c.l.b16 %v256
  %v1473 = vunpack.c.l.b16 %v257
  %v1474 = vunpack.c.l.b16 %v258
  %v1475 = vunpack.c.l.b16 %v259
  %v1476 = vunpack.c.l.b16 %v260
  %v1477 = vunpack.c.l.b16 %v261
  %v1478 = vunpack.c.l.b16 %v262
  %v1479 = vunpack.c.l.b16 %v263
  %v1480 = vunpack.c.l.b16 %v264
  %v1481 = vunpack.c.l.b16 %v265
  %v1482 = vunpack.c.l.b16 %v266
  %v1483 = vunpack.c.l.b16 %v267
  %v1484 = vunpack.c.l.b16 %v268
  %v1485 = vunpack.c.l.b16 %v269
  %v1486 = vunpack.c.l.b16 %v270
  %v1487 = vunpack.c.l.b16 %v271
  %v1488 = vunpack.c.l.b16 %v272
  %v1489 = vunpack.c.l.b16 %v273
  %v1490 = vunpack.c.l.b16 %v274
  %v1491 = vunpack.c.l.b16 %v275
  %v1492 = vunpack.c.l.b16 %v276
  %v1493 = vunpack.c.l.b16 %v277
  %v1494 = vunpack.c.l.b16 %v278
  %v1495 = vunpack.c.l.b16 %v279
  %v1496 = vunpack.c.l.b16 %v280
  %v1497 = vunpack.c.l.b16 %v281
  %v1498 = vunpack.c.l.b16 %v282
  %v1499 = vunpack.c.l.b16 %v283
  %v1500 = vunpack.c.l.b16 %v284
  %v1501 = vunpack.c.l.b16 %v285
  %v1502 = vunpack.c.l.b16 %v286
  %v1503 = vunpack.c.l.b16 %v287
  %v1504 = vunpack.c.l.b16 %v288
  %v1505 = vunpack.c.l.b16 %v289
  %v1506 = vunpack.c.l.b16 %v290
  %v1507 = vunpack.c.l.b16 %v291
  %v1508 = vunpack.c.l.b16 %v292
  %v1509 = vunpack.c.l.b16 %v293
  %v1510 = vunpack.c.l.b16 %v294
  %v1511 = vunpack.c.l.b16 %v295
  %v1512 = vunpack.c.l.b16 %v296
  %v1513 = vunpack.c.l.b16 %v297
  %v1514 = vunpack.c.l.b16 %v298
  %v1515 = vunpack.c.l.b16 %v299
  %v1516 = vunpack.c.l.b16 %v300
  %v1517 = vunpack.c.l.b16 %v301
  %v1518 = vunpack.c.l.b16 %v302
  %v1519 = vunpack.c.l.b16 %v303
  %v1520 = vunpack.c.l.b16 %v304
  %v1521 = vunpack.c.l.b16 %v305
  %v1522 = vunpack.c.l.b16 %v306
  %v1523 = vunpack.c.l.b16 %v307
  %v1524 = vunpack.c.l.b16 %v308
  %v1525 = vunpack.c.l.b16 %v309
  %v1526 = vunpack.c.l.b16 %v310
  %v1527 = vunpack.c.l.b16 %v311
  %v1528 = vunpack.c.l.b16 %v312
  %v1529 = vunpack.c.l.b16 %v313
  %v1530 = vunpack.c.l.b16 %v314
  %v1531 = vunpack.c.l.b16 %v315
  %v1532 = vunpack.c.l.b16 %v316
  %v1533 = vunpack.c.l.b16 %v317
  %v1534 = vunpack.c.l.b16 %v318
  %v1535 = vpack.c.b16 %v1392, %v1391
  %v1536 = vpack.c.b16 %v1394, %v1393
  %v1537 = vpack.c.b16 %v1396, %v1395
  %v1538 = vpack.c.b16 %v1398, %v1397
  %v1539 = vpack.c.b16 %v1400, %v1399
  %v1540 = vpack.c.b16 %v1402, %v1401
  %v1541 = vpack.c.b16 %v1404, %v1403
  %v1542 = vpack.c.b16 %v1406, %v1405
  %v1543 = vpack.c.b16 %v1408, %v1407
  %v1544 = vpack.c.b16 %v1410, %v1409
  %v1545 = vpack.c.b16 %v1412, %v1411
  %v1546 = vpack.c.b16 %v1414, %v1413
  %v1547 = vpack.c.b16 %v1416, %v1415
  %v1548 = vpack.c.b16 %v1418, %v1417
  %v1549 = vpack.c.b16 %v1420, %v1419
  %v1550 = vpack.c.b16 %v1422, %v1421
  %v1551 = vpack.c.b16 %v1424, %v1423
  %v1552 = vpack.c.b16 %v1426, %v1425
  %v1553 = vpack.c.b16 %v1428, %v1427
  %v1554 = vpack.c.b16 %v1430, %v1429
  %v1555 = vpack.c.b16 %v1432, %v1431
  %v1556 = vpack.c.b16 %v1434, %v1433
  %v1557 = vpack.c.b16 %v1436, %v1435
  %v1558 = vpack.c.b16 %v1438, %v1437
  %v1559 = vpack.c.b16 %v1440, %v1439
  %v1560 = vpack.c.b16 %v1442, %v1441
  %v1561 = vpack.c.b16 %v1444, %v1443
  %v1562 = vpack.c.b16 %v1446, %v1445
  %v1563 = vpack.c.b16 %v1448, %v1447
  %v1564 = vpack.c.b16 %v1450, %v1449
  %v1565 = vpack.c.b16 %v1452, %v1451
  %v1566 = vpack.c.b16 %v1454, %v1453
  %v1567 = vpack.c.b16 %v1456, %v1455
  %v1568 = vpack.c.b16 %v1458, %v1457
  %v1569 = vpack.c.b16 %v1460, %v1459
  %v1570 = vpack.c.b16 %v1462, %v1461
  %v1571 = vpack.c.b16 %v1464, %v1463
  %v1572 = vpack.c.b16 %v1466, %v1465
  %v1573 = vpack.c.b16 %v1468, %v1467
  %v1574 = vpack.c.b16 %v1470, %v1469
  %v1575 = vpack.c.b16 %v1472, %v1471
  %v1576 = vpack.c.b16 %v1474, %v1473
  %v1577 = vpack.c.b16 %v1476, %v1475
  %v1578 = vpack.c.b16 %v1478, %v1477
  %v1579 = vpack.c.b16 %v1480, %v1479
  %v1580 = vpack.c.b16 %v1482, %v1481
  %v1581 = vpack.c.b16 %v1484, %v1483
  %v1582 = vpack.c.b16 %v1486, %v1485
  %v1583 = vpack.c.b16 %v1488, %v1487
  %v1584 = vpack.c.b16 %v1490, %v1489
  %v1585 = vpack.c.b16 %v1492, %v1491
  %v1586 = vpack.c.b16 %v1494, %v1493
  %v1587 = vpack.c.b16 %v1496, %v1495
  %v1588 = vpack.c.b16 %v1498, %v1497
  %v1589 = vpack.c.b16 %v1500, %v1499
  %v1590 = vpack.c.b16 %v1502, %v1501
  %v1591 = vpack.c.b16 %v1504, %v1503
  %v1592 = vpack.c.b16 %v1506, %v1505
  %v1593 = vpack.c.b16 %v1508, %v1507
  %v1594 = vpack.c.b16 %v1510, %v1509
  %v1595 = vpack.c.b16 %v1512, %v1511
  %v1596 = vpack.c.b16 %v1514, %v1513
  %v1597 = vpack.c.b16 %v1516, %v1515
  %v1598 = vpack.c.b16 %v1518, %v1517
  %v1599 = vpack.c.b16 %v1520, %v1519
  %v1600 = vpack.c.b16 %v1522, %v1521
  %v1601 = vpack.c.b16 %v1524, %v1523
  %v1602 = vpack.c.b16 %v1526, %v1525
  %v1603 = vpack.c.b16 %v1528, %v1527
  %v1604 = vpack.c.b16 %v1530, %v1529
  %v1605 = vpack.c.b16 %v1532, %v1531
  %v1606 = vpack.c.b16 %v1534, %v1533
  %1679 = vmatprep.subr.bf16.mxu0 0
  %1680 = vmatpush1.bf16.msra.mxu0 %v1542
  %1681 = vmatprep.subr.bf16.mxu0 0
  %1682 = vmatpush1.bf16.msra.mxu0 %v1541
  %1683 = vmatprep.subr.bf16.mxu0 0
  %1684 = vmatpush1.bf16.msra.mxu0 %v1540
  %1685 = vmatprep.subr.bf16.mxu0 0
  %1686 = vmatpush1.bf16.msra.mxu0 %v1539
  %1687 = vmatprep.subr.bf16.mxu0 0
  %1688 = vmatpush1.bf16.msra.mxu0 %v1538
  %1689 = vmatprep.subr.bf16.mxu0 0
  %1690 = vmatpush1.bf16.msra.mxu0 %v1537
  %1691 = vmatprep.subr.bf16.mxu0 0
  %1692 = vmatpush1.bf16.msra.mxu0 %v1536
  %1693 = vmatprep.subr.bf16.mxu0 0
  %1694 = vmatpush1.bf16.msra.mxu0 %v1535
  %1695 = vmatprep.subr.bf16.mxu0 0
  %1696 = vmatpush2.bf16.msra.mxu0 %v1550
  %1697 = vmatprep.subr.bf16.mxu0 0
  %1698 = vmatpush2.bf16.msra.mxu0 %v1549
  %1699 = vmatprep.subr.bf16.mxu0 0
  %1700 = vmatpush2.bf16.msra.mxu0 %v1548
  %1701 = vmatprep.subr.bf16.mxu0 0
  %1702 = vmatpush2.bf16.msra.mxu0 %v1547
  %1703 = vmatprep.subr.bf16.mxu0 0
  %1704 = vmatpush2.bf16.msra.mxu0 %v1546
  %1705 = vmatprep.subr.bf16.mxu0 0
  %1706 = vmatpush2.bf16.msra.mxu0 %v1545
  %1707 = vmatprep.subr.bf16.mxu0 0
  %1708 = vmatpush2.bf16.msra.mxu0 %v1544
  %1709 = vmatprep.subr.bf16.mxu0 0
  %1710 = vmatpush2.bf16.msra.mxu0 %v1543
  %1711 = vmatprep.mubr.bf16.mxu0 %v960
  %1712 = vmatmul.mubr.bf16.gmra.mxu0 %v959
  %v1713 = vpop.f32.mrf.mxu0
  %v1714 = vadd.f32 %v354, %v1713
  %v1715 = vpop.f32.mrf.mxu0
  %v1716 = vpop.f32.mrf.mxu0
  %v1717 = vadd.f32 %v359, %v1716
  %v1718 = vpop.f32.mrf.mxu0
  %1719 = vmatprep.mubr.bf16.mxu0 %v969
  %1720 = vmatmul.mubr.bf16.gmra.mxu0 %v968
  %v1721 = vpop.f32.mrf.mxu0
  %v1722 = vadd.f32 %v364, %v1721
  %v1723 = vpop.f32.mrf.mxu0
  %v1724 = vpop.f32.mrf.mxu0
  %v1725 = vadd.f32 %v369, %v1724
  %v1726 = vpop.f32.mrf.mxu0
  %1727 = vmatprep.mubr.bf16.mxu0 %v978
  %1728 = vmatmul.mubr.bf16.gmra.mxu0 %v977
  %v1729 = vpop.f32.mrf.mxu0
  %v1730 = vadd.f32 %v374, %v1729
  %v1731 = vpop.f32.mrf.mxu0
  %v1732 = vpop.f32.mrf.mxu0
  %v1733 = vadd.f32 %v379, %v1732
  %v1734 = vpop.f32.mrf.mxu0
  %1735 = vmatprep.mubr.bf16.mxu0 %v987
  %1736 = vmatmul.mubr.bf16.gmra.mxu0 %v986
  %v1737 = vpop.f32.mrf.mxu0
  %v1738 = vadd.f32 %v384, %v1737
  %v1739 = vpop.f32.mrf.mxu0
  %v1740 = vpop.f32.mrf.mxu0
  %v1741 = vadd.f32 %v389, %v1740
  %v1742 = vpop.f32.mrf.mxu0
  %1743 = vmatprep.mubr.bf16.mxu0 %v996
  %1744 = vmatmul.mubr.bf16.gmra.mxu0 %v995
  %v1745 = vpop.f32.mrf.mxu0
  %v1746 = vadd.f32 %v394, %v1745
  %v1747 = vpop.f32.mrf.mxu0
  %v1748 = vpop.f32.mrf.mxu0
  %v1749 = vadd.f32 %v399, %v1748
  %v1750 = vpop.f32.mrf.mxu0
  %1751 = vmatprep.mubr.bf16.mxu0 %v1005
  %1752 = vmatmul.mubr.bf16.gmra.mxu0 %v1004
  %v1753 = vpop.f32.mrf.mxu0
  %v1754 = vadd.f32 %v404, %v1753
  %v1755 = vpop.f32.mrf.mxu0
  %v1756 = vpop.f32.mrf.mxu0
  %v1757 = vadd.f32 %v409, %v1756
  %v1758 = vpop.f32.mrf.mxu0
  %1759 = vmatprep.mubr.bf16.mxu0 %v1014
  %1760 = vmatmul.mubr.bf16.gmra.mxu0 %v1013
  %v1761 = vpop.f32.mrf.mxu0
  %v1762 = vadd.f32 %v414, %v1761
  %v1763 = vpop.f32.mrf.mxu0
  %v1764 = vpop.f32.mrf.mxu0
  %v1765 = vadd.f32 %v419, %v1764
  %v1766 = vpop.f32.mrf.mxu0
  %1767 = vmatprep.mubr.bf16.mxu0 %v1023
  %1768 = vmatmul.mubr.bf16.gmra.mxu0 %v1022
  %v1769 = vpop.f32.mrf.mxu0
  %v1770 = vadd.f32 %v424, %v1769
  %v1771 = vpop.f32.mrf.mxu0
  %v1772 = vpop.f32.mrf.mxu0
  %v1773 = vadd.f32 %v429, %v1772
  %v1774 = vpop.f32.mrf.mxu0
  %1775 = vmatprep.mubr.bf16.mxu0 %v1032
  %1776 = vmatmul.mubr.bf16.gmra.mxu0 %v1031
  %v1777 = vpop.f32.mrf.mxu0
  %v1778 = vadd.f32 %v434, %v1777
  %v1779 = vpop.f32.mrf.mxu0
  %v1780 = vpop.f32.mrf.mxu0
  %v1781 = vadd.f32 %v439, %v1780
  %v1782 = vpop.f32.mrf.mxu0
  %1783 = vmatprep.mubr.bf16.mxu0 %v1041
  %1784 = vmatmul.mubr.bf16.gmra.mxu0 %v1040
  %v1785 = vpop.f32.mrf.mxu0
  %v1786 = vadd.f32 %v444, %v1785
  %v1787 = vpop.f32.mrf.mxu0
  %v1788 = vpop.f32.mrf.mxu0
  %v1789 = vadd.f32 %v449, %v1788
  %v1790 = vpop.f32.mrf.mxu0
  %1791 = vmatprep.mubr.bf16.mxu0 %v1050
  %1792 = vmatmul.mubr.bf16.gmra.mxu0 %v1049
  %v1793 = vpop.f32.mrf.mxu0
  %v1794 = vadd.f32 %v454, %v1793
  %v1795 = vpop.f32.mrf.mxu0
  %v1796 = vpop.f32.mrf.mxu0
  %v1797 = vadd.f32 %v459, %v1796
  %v1798 = vpop.f32.mrf.mxu0
  %1799 = vmatprep.mubr.bf16.mxu0 %v1059
  %1800 = vmatmul.mubr.bf16.gmra.mxu0 %v1058
  %v1801 = vpop.f32.mrf.mxu0
  %v1802 = vadd.f32 %v464, %v1801
  %v1803 = vpop.f32.mrf.mxu0
  %v1804 = vpop.f32.mrf.mxu0
  %v1805 = vadd.f32 %v469, %v1804
  %v1806 = vpop.f32.mrf.mxu0
  %1807 = vmatprep.mubr.bf16.mxu0 %v1068
  %1808 = vmatmul.mubr.bf16.gmra.mxu0 %v1067
  %v1809 = vpop.f32.mrf.mxu0
  %v1810 = vadd.f32 %v474, %v1809
  %v1811 = vpop.f32.mrf.mxu0
  %v1812 = vpop.f32.mrf.mxu0
  %v1813 = vadd.f32 %v479, %v1812
  %v1814 = vpop.f32.mrf.mxu0
  %1815 = vmatprep.mubr.bf16.mxu0 %v1077
  %1816 = vmatmul.mubr.bf16.gmra.mxu0 %v1076
  %v1817 = vpop.f32.mrf.mxu0
  %v1818 = vadd.f32 %v484, %v1817
  %v1819 = vpop.f32.mrf.mxu0
  %v1820 = vpop.f32.mrf.mxu0
  %v1821 = vadd.f32 %v489, %v1820
  %v1822 = vpop.f32.mrf.mxu0
  %1823 = vmatprep.mubr.bf16.mxu0 %v1086
  %1824 = vmatmul.mubr.bf16.gmra.mxu0 %v1085
  %v1825 = vpop.f32.mrf.mxu0
  %v1826 = vadd.f32 %v494, %v1825
  %v1827 = vpop.f32.mrf.mxu0
  %v1828 = vpop.f32.mrf.mxu0
  %v1829 = vadd.f32 %v499, %v1828
  %v1830 = vpop.f32.mrf.mxu0
  %1831 = vmatprep.mubr.bf16.mxu0 %v1095
  %1832 = vmatmul.mubr.bf16.gmra.mxu0 %v1094
  %v1833 = vpop.f32.mrf.mxu0
  %v1834 = vadd.f32 %v504, %v1833
  %v1835 = vpop.f32.mrf.mxu0
  %v1836 = vpop.f32.mrf.mxu0
  %v1837 = vadd.f32 %v509, %v1836
  %v1838 = vpop.f32.mrf.mxu0
  %1839 = vdwg.mxu0
  %1840 = vmatprep.subr.bf16.mxu0 0
  %1841 = vmatpush1.bf16.msra.mxu0 %v1558
  %1842 = vmatprep.subr.bf16.mxu0 0
  %1843 = vmatpush1.bf16.msra.mxu0 %v1557
  %1844 = vmatprep.subr.bf16.mxu0 0
  %1845 = vmatpush1.bf16.msra.mxu0 %v1556
  %1846 = vmatprep.subr.bf16.mxu0 0
  %1847 = vmatpush1.bf16.msra.mxu0 %v1555
  %1848 = vmatprep.subr.bf16.mxu0 0
  %1849 = vmatpush1.bf16.msra.mxu0 %v1554
  %1850 = vmatprep.subr.bf16.mxu0 0
  %1851 = vmatpush1.bf16.msra.mxu0 %v1553
  %1852 = vmatprep.subr.bf16.mxu0 0
  %1853 = vmatpush1.bf16.msra.mxu0 %v1552
  %1854 = vmatprep.subr.bf16.mxu0 0
  %1855 = vmatpush1.bf16.msra.mxu0 %v1551
  %1856 = vmatprep.subr.bf16.mxu0 0
  %1857 = vmatpush2.bf16.msra.mxu0 %v1566
  %1858 = vmatprep.subr.bf16.mxu0 0
  %1859 = vmatpush2.bf16.msra.mxu0 %v1565
  %1860 = vmatprep.subr.bf16.mxu0 0
  %1861 = vmatpush2.bf16.msra.mxu0 %v1564
  %1862 = vmatprep.subr.bf16.mxu0 0
  %1863 = vmatpush2.bf16.msra.mxu0 %v1563
  %1864 = vmatprep.subr.bf16.mxu0 0
  %1865 = vmatpush2.bf16.msra.mxu0 %v1562
  %1866 = vmatprep.subr.bf16.mxu0 0
  %1867 = vmatpush2.bf16.msra.mxu0 %v1561
  %1868 = vmatprep.subr.bf16.mxu0 0
  %1869 = vmatpush2.bf16.msra.mxu0 %v1560
  %1870 = vmatprep.subr.bf16.mxu0 0
  %1871 = vmatpush2.bf16.msra.mxu0 %v1559
  %1872 = vmatprep.mubr.bf16.mxu0 %v962
  %1873 = vmatmul.mubr.bf16.gmra.mxu0 %v961
  %v1874 = vpop.f32.mrf.mxu0
  %v1875 = vadd.f32 %v1714, %v1874
  %v1876 = vpop.f32.mrf.mxu0
  %v1877 = vpop.f32.mrf.mxu0
  %v1878 = vadd.f32 %v1717, %v1877
  %v1879 = vpop.f32.mrf.mxu0
  %1880 = vmatprep.mubr.bf16.mxu0 %v971
  %1881 = vmatmul.mubr.bf16.gmra.mxu0 %v970
  %v1882 = vpop.f32.mrf.mxu0
  %v1883 = vadd.f32 %v1722, %v1882
  %v1884 = vpop.f32.mrf.mxu0
  %v1885 = vpop.f32.mrf.mxu0
  %v1886 = vadd.f32 %v1725, %v1885
  %v1887 = vpop.f32.mrf.mxu0
  %1888 = vmatprep.mubr.bf16.mxu0 %v980
  %1889 = vmatmul.mubr.bf16.gmra.mxu0 %v979
  %v1890 = vpop.f32.mrf.mxu0
  %v1891 = vadd.f32 %v1730, %v1890
  %v1892 = vpop.f32.mrf.mxu0
  %v1893 = vpop.f32.mrf.mxu0
  %v1894 = vadd.f32 %v1733, %v1893
  %v1895 = vpop.f32.mrf.mxu0
  %1896 = vmatprep.mubr.bf16.mxu0 %v989
  %1897 = vmatmul.mubr.bf16.gmra.mxu0 %v988
  %v1898 = vpop.f32.mrf.mxu0
  %v1899 = vadd.f32 %v1738, %v1898
  %v1900 = vpop.f32.mrf.mxu0
  %v1901 = vpop.f32.mrf.mxu0
  %v1902 = vadd.f32 %v1741, %v1901
  %v1903 = vpop.f32.mrf.mxu0
  %1904 = vmatprep.mubr.bf16.mxu0 %v998
  %1905 = vmatmul.mubr.bf16.gmra.mxu0 %v997
  %v1906 = vpop.f32.mrf.mxu0
  %v1907 = vadd.f32 %v1746, %v1906
  %v1908 = vpop.f32.mrf.mxu0
  %v1909 = vpop.f32.mrf.mxu0
  %v1910 = vadd.f32 %v1749, %v1909
  %v1911 = vpop.f32.mrf.mxu0
  %1912 = vmatprep.mubr.bf16.mxu0 %v1007
  %1913 = vmatmul.mubr.bf16.gmra.mxu0 %v1006
  %v1914 = vpop.f32.mrf.mxu0
  %v1915 = vadd.f32 %v1754, %v1914
  %v1916 = vpop.f32.mrf.mxu0
  %v1917 = vpop.f32.mrf.mxu0
  %v1918 = vadd.f32 %v1757, %v1917
  %v1919 = vpop.f32.mrf.mxu0
  %1920 = vmatprep.mubr.bf16.mxu0 %v1016
  %1921 = vmatmul.mubr.bf16.gmra.mxu0 %v1015
  %v1922 = vpop.f32.mrf.mxu0
  %v1923 = vadd.f32 %v1762, %v1922
  %v1924 = vpop.f32.mrf.mxu0
  %v1925 = vpop.f32.mrf.mxu0
  %v1926 = vadd.f32 %v1765, %v1925
  %v1927 = vpop.f32.mrf.mxu0
  %1928 = vmatprep.mubr.bf16.mxu0 %v1025
  %1929 = vmatmul.mubr.bf16.gmra.mxu0 %v1024
  %v1930 = vpop.f32.mrf.mxu0
  %v1931 = vadd.f32 %v1770, %v1930
  %v1932 = vpop.f32.mrf.mxu0
  %v1933 = vpop.f32.mrf.mxu0
  %v1934 = vadd.f32 %v1773, %v1933
  %v1935 = vpop.f32.mrf.mxu0
  %1936 = vmatprep.mubr.bf16.mxu0 %v1034
  %1937 = vmatmul.mubr.bf16.gmra.mxu0 %v1033
  %v1938 = vpop.f32.mrf.mxu0
  %v1939 = vadd.f32 %v1778, %v1938
  %v1940 = vpop.f32.mrf.mxu0
  %v1941 = vpop.f32.mrf.mxu0
  %v1942 = vadd.f32 %v1781, %v1941
  %v1943 = vpop.f32.mrf.mxu0
  %1944 = vmatprep.mubr.bf16.mxu0 %v1043
  %1945 = vmatmul.mubr.bf16.gmra.mxu0 %v1042
  %v1946 = vpop.f32.mrf.mxu0
  %v1947 = vadd.f32 %v1786, %v1946
  %v1948 = vpop.f32.mrf.mxu0
  %v1949 = vpop.f32.mrf.mxu0
  %v1950 = vadd.f32 %v1789, %v1949
  %v1951 = vpop.f32.mrf.mxu0
  %1952 = vmatprep.mubr.bf16.mxu0 %v1052
  %1953 = vmatmul.mubr.bf16.gmra.mxu0 %v1051
  %v1954 = vpop.f32.mrf.mxu0
  %v1955 = vadd.f32 %v1794, %v1954
  %v1956 = vpop.f32.mrf.mxu0
  %v1957 = vpop.f32.mrf.mxu0
  %v1958 = vadd.f32 %v1797, %v1957
  %v1959 = vpop.f32.mrf.mxu0
  %1960 = vmatprep.mubr.bf16.mxu0 %v1061
  %1961 = vmatmul.mubr.bf16.gmra.mxu0 %v1060
  %v1962 = vpop.f32.mrf.mxu0
  %v1963 = vadd.f32 %v1802, %v1962
  %v1964 = vpop.f32.mrf.mxu0
  %v1965 = vpop.f32.mrf.mxu0
  %v1966 = vadd.f32 %v1805, %v1965
  %v1967 = vpop.f32.mrf.mxu0
  %1968 = vmatprep.mubr.bf16.mxu0 %v1070
  %1969 = vmatmul.mubr.bf16.gmra.mxu0 %v1069
  %v1970 = vpop.f32.mrf.mxu0
  %v1971 = vadd.f32 %v1810, %v1970
  %v1972 = vpop.f32.mrf.mxu0
  %v1973 = vpop.f32.mrf.mxu0
  %v1974 = vadd.f32 %v1813, %v1973
  %v1975 = vpop.f32.mrf.mxu0
  %1976 = vmatprep.mubr.bf16.mxu0 %v1079
  %1977 = vmatmul.mubr.bf16.gmra.mxu0 %v1078
  %v1978 = vpop.f32.mrf.mxu0
  %v1979 = vadd.f32 %v1818, %v1978
  %v1980 = vpop.f32.mrf.mxu0
  %v1981 = vpop.f32.mrf.mxu0
  %v1982 = vadd.f32 %v1821, %v1981
  %v1983 = vpop.f32.mrf.mxu0
  %1984 = vmatprep.mubr.bf16.mxu0 %v1088
  %1985 = vmatmul.mubr.bf16.gmra.mxu0 %v1087
  %v1986 = vpop.f32.mrf.mxu0
  %v1987 = vadd.f32 %v1826, %v1986
  %v1988 = vpop.f32.mrf.mxu0
  %v1989 = vpop.f32.mrf.mxu0
  %v1990 = vadd.f32 %v1829, %v1989
  %v1991 = vpop.f32.mrf.mxu0
  %1992 = vmatprep.mubr.bf16.mxu0 %v1097
  %1993 = vmatmul.mubr.bf16.gmra.mxu0 %v1096
  %v1994 = vpop.f32.mrf.mxu0
  %v1995 = vadd.f32 %v1834, %v1994
  %v1996 = vpop.f32.mrf.mxu0
  %v1997 = vpop.f32.mrf.mxu0
  %v1998 = vadd.f32 %v1837, %v1997
  %v1999 = vpop.f32.mrf.mxu0
  %2000 = vdwg.mxu0
  %2001 = vmatprep.subr.bf16.mxu0 0
  %2002 = vmatpush1.bf16.msra.mxu0 %v1574
  %2003 = vmatprep.subr.bf16.mxu0 0
  %2004 = vmatpush1.bf16.msra.mxu0 %v1573
  %2005 = vmatprep.subr.bf16.mxu0 0
  %2006 = vmatpush1.bf16.msra.mxu0 %v1572
  %2007 = vmatprep.subr.bf16.mxu0 0
  %2008 = vmatpush1.bf16.msra.mxu0 %v1571
  %2009 = vmatprep.subr.bf16.mxu0 0
  %2010 = vmatpush1.bf16.msra.mxu0 %v1570
  %2011 = vmatprep.subr.bf16.mxu0 0
  %2012 = vmatpush1.bf16.msra.mxu0 %v1569
  %2013 = vmatprep.subr.bf16.mxu0 0
  %2014 = vmatpush1.bf16.msra.mxu0 %v1568
  %2015 = vmatprep.subr.bf16.mxu0 0
  %2016 = vmatpush1.bf16.msra.mxu0 %v1567
  %2017 = vmatprep.subr.bf16.mxu0 0
  %2018 = vmatpush2.bf16.msra.mxu0 %v1582
  %2019 = vmatprep.subr.bf16.mxu0 0
  %2020 = vmatpush2.bf16.msra.mxu0 %v1581
  %2021 = vmatprep.subr.bf16.mxu0 0
  %2022 = vmatpush2.bf16.msra.mxu0 %v1580
  %2023 = vmatprep.subr.bf16.mxu0 0
  %2024 = vmatpush2.bf16.msra.mxu0 %v1579
  %2025 = vmatprep.subr.bf16.mxu0 0
  %2026 = vmatpush2.bf16.msra.mxu0 %v1578
  %2027 = vmatprep.subr.bf16.mxu0 0
  %2028 = vmatpush2.bf16.msra.mxu0 %v1577
  %2029 = vmatprep.subr.bf16.mxu0 0
  %2030 = vmatpush2.bf16.msra.mxu0 %v1576
  %2031 = vmatprep.subr.bf16.mxu0 0
  %2032 = vmatpush2.bf16.msra.mxu0 %v1575
  %2033 = vmatprep.mubr.bf16.mxu0 %v964
  %2034 = vmatmul.mubr.bf16.gmra.mxu0 %v963
  %v2035 = vpop.f32.mrf.mxu0
  %v2036 = vadd.f32 %v1875, %v2035
  %v2037 = vpop.f32.mrf.mxu0
  %v2038 = vpop.f32.mrf.mxu0
  %v2039 = vadd.f32 %v1878, %v2038
  %v2040 = vpop.f32.mrf.mxu0
  %2041 = vmatprep.mubr.bf16.mxu0 %v973
  %2042 = vmatmul.mubr.bf16.gmra.mxu0 %v972
  %v2043 = vpop.f32.mrf.mxu0
  %v2044 = vadd.f32 %v1883, %v2043
  %v2045 = vpop.f32.mrf.mxu0
  %v2046 = vpop.f32.mrf.mxu0
  %v2047 = vadd.f32 %v1886, %v2046
  %v2048 = vpop.f32.mrf.mxu0
  %2049 = vmatprep.mubr.bf16.mxu0 %v982
  %2050 = vmatmul.mubr.bf16.gmra.mxu0 %v981
  %v2051 = vpop.f32.mrf.mxu0
  %v2052 = vadd.f32 %v1891, %v2051
  %v2053 = vpop.f32.mrf.mxu0
  %v2054 = vpop.f32.mrf.mxu0
  %v2055 = vadd.f32 %v1894, %v2054
  %v2056 = vpop.f32.mrf.mxu0
  %2057 = vmatprep.mubr.bf16.mxu0 %v991
  %2058 = vmatmul.mubr.bf16.gmra.mxu0 %v990
  %v2059 = vpop.f32.mrf.mxu0
  %v2060 = vadd.f32 %v1899, %v2059
  %v2061 = vpop.f32.mrf.mxu0
  %v2062 = vpop.f32.mrf.mxu0
  %v2063 = vadd.f32 %v1902, %v2062
  %v2064 = vpop.f32.mrf.mxu0
  %2065 = vmatprep.mubr.bf16.mxu0 %v1000
  %2066 = vmatmul.mubr.bf16.gmra.mxu0 %v999
  %v2067 = vpop.f32.mrf.mxu0
  %v2068 = vadd.f32 %v1907, %v2067
  %v2069 = vpop.f32.mrf.mxu0
  %v2070 = vpop.f32.mrf.mxu0
  %v2071 = vadd.f32 %v1910, %v2070
  %v2072 = vpop.f32.mrf.mxu0
  %2073 = vmatprep.mubr.bf16.mxu0 %v1009
  %2074 = vmatmul.mubr.bf16.gmra.mxu0 %v1008
  %v2075 = vpop.f32.mrf.mxu0
  %v2076 = vadd.f32 %v1915, %v2075
  %v2077 = vpop.f32.mrf.mxu0
  %v2078 = vpop.f32.mrf.mxu0
  %v2079 = vadd.f32 %v1918, %v2078
  %v2080 = vpop.f32.mrf.mxu0
  %2081 = vmatprep.mubr.bf16.mxu0 %v1018
  %2082 = vmatmul.mubr.bf16.gmra.mxu0 %v1017
  %v2083 = vpop.f32.mrf.mxu0
  %v2084 = vadd.f32 %v1923, %v2083
  %v2085 = vpop.f32.mrf.mxu0
  %v2086 = vpop.f32.mrf.mxu0
  %v2087 = vadd.f32 %v1926, %v2086
  %v2088 = vpop.f32.mrf.mxu0
  %2089 = vmatprep.mubr.bf16.mxu0 %v1027
  %2090 = vmatmul.mubr.bf16.gmra.mxu0 %v1026
  %v2091 = vpop.f32.mrf.mxu0
  %v2092 = vadd.f32 %v1931, %v2091
  %v2093 = vpop.f32.mrf.mxu0
  %v2094 = vpop.f32.mrf.mxu0
  %v2095 = vadd.f32 %v1934, %v2094
  %v2096 = vpop.f32.mrf.mxu0
  %2097 = vmatprep.mubr.bf16.mxu0 %v1036
  %2098 = vmatmul.mubr.bf16.gmra.mxu0 %v1035
  %v2099 = vpop.f32.mrf.mxu0
  %v2100 = vadd.f32 %v1939, %v2099
  %v2101 = vpop.f32.mrf.mxu0
  %v2102 = vpop.f32.mrf.mxu0
  %v2103 = vadd.f32 %v1942, %v2102
  %v2104 = vpop.f32.mrf.mxu0
  %2105 = vmatprep.mubr.bf16.mxu0 %v1045
  %2106 = vmatmul.mubr.bf16.gmra.mxu0 %v1044
  %v2107 = vpop.f32.mrf.mxu0
  %v2108 = vadd.f32 %v1947, %v2107
  %v2109 = vpop.f32.mrf.mxu0
  %v2110 = vpop.f32.mrf.mxu0
  %v2111 = vadd.f32 %v1950, %v2110
  %v2112 = vpop.f32.mrf.mxu0
  %2113 = vmatprep.mubr.bf16.mxu0 %v1054
  %2114 = vmatmul.mubr.bf16.gmra.mxu0 %v1053
  %v2115 = vpop.f32.mrf.mxu0
  %v2116 = vadd.f32 %v1955, %v2115
  %v2117 = vpop.f32.mrf.mxu0
  %v2118 = vpop.f32.mrf.mxu0
  %v2119 = vadd.f32 %v1958, %v2118
  %v2120 = vpop.f32.mrf.mxu0
  %2121 = vmatprep.mubr.bf16.mxu0 %v1063
  %2122 = vmatmul.mubr.bf16.gmra.mxu0 %v1062
  %v2123 = vpop.f32.mrf.mxu0
  %v2124 = vadd.f32 %v1963, %v2123
  %v2125 = vpop.f32.mrf.mxu0
  %v2126 = vpop.f32.mrf.mxu0
  %v2127 = vadd.f32 %v1966, %v2126
  %v2128 = vpop.f32.mrf.mxu0
  %2129 = vmatprep.mubr.bf16.mxu0 %v1072
  %2130 = vmatmul.mubr.bf16.gmra.mxu0 %v1071
  %v2131 = vpop.f32.mrf.mxu0
  %v2132 = vadd.f32 %v1971, %v2131
  %v2133 = vpop.f32.mrf.mxu0
  %v2134 = vpop.f32.mrf.mxu0
  %v2135 = vadd.f32 %v1974, %v2134
  %v2136 = vpop.f32.mrf.mxu0
  %2137 = vmatprep.mubr.bf16.mxu0 %v1081
  %2138 = vmatmul.mubr.bf16.gmra.mxu0 %v1080
  %v2139 = vpop.f32.mrf.mxu0
  %v2140 = vadd.f32 %v1979, %v2139
  %v2141 = vpop.f32.mrf.mxu0
  %v2142 = vpop.f32.mrf.mxu0
  %v2143 = vadd.f32 %v1982, %v2142
  %v2144 = vpop.f32.mrf.mxu0
  %2145 = vmatprep.mubr.bf16.mxu0 %v1090
  %2146 = vmatmul.mubr.bf16.gmra.mxu0 %v1089
  %v2147 = vpop.f32.mrf.mxu0
  %v2148 = vadd.f32 %v1987, %v2147
  %v2149 = vpop.f32.mrf.mxu0
  %v2150 = vpop.f32.mrf.mxu0
  %v2151 = vadd.f32 %v1990, %v2150
  %v2152 = vpop.f32.mrf.mxu0
  %2153 = vmatprep.mubr.bf16.mxu0 %v1099
  %2154 = vmatmul.mubr.bf16.gmra.mxu0 %v1098
  %v2155 = vpop.f32.mrf.mxu0
  %v2156 = vadd.f32 %v1995, %v2155
  %v2157 = vpop.f32.mrf.mxu0
  %v2158 = vpop.f32.mrf.mxu0
  %v2159 = vadd.f32 %v1998, %v2158
  %v2160 = vpop.f32.mrf.mxu0
  %2161 = vdwg.mxu0
  %2162 = vmatprep.subr.bf16.mxu0 0
  %2163 = vmatpush1.bf16.msra.mxu0 %v1590
  %2164 = vmatprep.subr.bf16.mxu0 0
  %2165 = vmatpush1.bf16.msra.mxu0 %v1589
  %2166 = vmatprep.subr.bf16.mxu0 0
  %2167 = vmatpush1.bf16.msra.mxu0 %v1588
  %2168 = vmatprep.subr.bf16.mxu0 0
  %2169 = vmatpush1.bf16.msra.mxu0 %v1587
  %2170 = vmatprep.subr.bf16.mxu0 0
  %2171 = vmatpush1.bf16.msra.mxu0 %v1586
  %2172 = vmatprep.subr.bf16.mxu0 0
  %2173 = vmatpush1.bf16.msra.mxu0 %v1585
  %2174 = vmatprep.subr.bf16.mxu0 0
  %2175 = vmatpush1.bf16.msra.mxu0 %v1584
  %2176 = vmatprep.subr.bf16.mxu0 0
  %2177 = vmatpush1.bf16.msra.mxu0 %v1583
  %2178 = vmatprep.subr.bf16.mxu0 0
  %2179 = vmatpush2.bf16.msra.mxu0 %v1598
  %2180 = vmatprep.subr.bf16.mxu0 0
  %2181 = vmatpush2.bf16.msra.mxu0 %v1597
  %2182 = vmatprep.subr.bf16.mxu0 0
  %2183 = vmatpush2.bf16.msra.mxu0 %v1596
  %2184 = vmatprep.subr.bf16.mxu0 0
  %2185 = vmatpush2.bf16.msra.mxu0 %v1595
  %2186 = vmatprep.subr.bf16.mxu0 0
  %2187 = vmatpush2.bf16.msra.mxu0 %v1594
  %2188 = vmatprep.subr.bf16.mxu0 0
  %2189 = vmatpush2.bf16.msra.mxu0 %v1593
  %2190 = vmatprep.subr.bf16.mxu0 0
  %2191 = vmatpush2.bf16.msra.mxu0 %v1592
  %2192 = vmatprep.subr.bf16.mxu0 0
  %2193 = vmatpush2.bf16.msra.mxu0 %v1591
  %2194 = vmatprep.mubr.bf16.mxu0 %v966
  %2195 = vmatmul.mubr.bf16.gmra.mxu0 %v965
  %v2196 = vpop.f32.mrf.mxu0
  %v2197 = vadd.f32 %v2036, %v2196
  %v2198 = vpop.f32.mrf.mxu0
  %v2199 = vpop.f32.mrf.mxu0
  %v2200 = vadd.f32 %v2039, %v2199
  %v2201 = vpop.f32.mrf.mxu0
  %2202 = vmatprep.mubr.bf16.mxu0 %v975
  %2203 = vmatmul.mubr.bf16.gmra.mxu0 %v974
  %v2204 = vpop.f32.mrf.mxu0
  %v2205 = vadd.f32 %v2044, %v2204
  %v2206 = vpop.f32.mrf.mxu0
  %v2207 = vpop.f32.mrf.mxu0
  %v2208 = vadd.f32 %v2047, %v2207
  %v2209 = vpop.f32.mrf.mxu0
  %2210 = vmatprep.mubr.bf16.mxu0 %v984
  %2211 = vmatmul.mubr.bf16.gmra.mxu0 %v983
  %v2212 = vpop.f32.mrf.mxu0
  %v2213 = vadd.f32 %v2052, %v2212
  %v2214 = vpop.f32.mrf.mxu0
  %v2215 = vpop.f32.mrf.mxu0
  %v2216 = vadd.f32 %v2055, %v2215
  %v2217 = vpop.f32.mrf.mxu0
  %2218 = vmatprep.mubr.bf16.mxu0 %v993
  %2219 = vmatmul.mubr.bf16.gmra.mxu0 %v992
  %v2220 = vpop.f32.mrf.mxu0
  %v2221 = vadd.f32 %v2060, %v2220
  %v2222 = vpop.f32.mrf.mxu0
  %v2223 = vpop.f32.mrf.mxu0
  %v2224 = vadd.f32 %v2063, %v2223
  %v2225 = vpop.f32.mrf.mxu0
  %2226 = vmatprep.mubr.bf16.mxu0 %v1002
  %2227 = vmatmul.mubr.bf16.gmra.mxu0 %v1001
  %v2228 = vpop.f32.mrf.mxu0
  %v2229 = vadd.f32 %v2068, %v2228
  %v2230 = vpop.f32.mrf.mxu0
  %v2231 = vpop.f32.mrf.mxu0
  %v2232 = vadd.f32 %v2071, %v2231
  %v2233 = vpop.f32.mrf.mxu0
  %2234 = vmatprep.mubr.bf16.mxu0 %v1011
  %2235 = vmatmul.mubr.bf16.gmra.mxu0 %v1010
  %v2236 = vpop.f32.mrf.mxu0
  %v2237 = vadd.f32 %v2076, %v2236
  %v2238 = vpop.f32.mrf.mxu0
  %v2239 = vpop.f32.mrf.mxu0
  %v2240 = vadd.f32 %v2079, %v2239
  %v2241 = vpop.f32.mrf.mxu0
  %2242 = vmatprep.mubr.bf16.mxu0 %v1020
  %2243 = vmatmul.mubr.bf16.gmra.mxu0 %v1019
  %v2244 = vpop.f32.mrf.mxu0
  %v2245 = vadd.f32 %v2084, %v2244
  %v2246 = vpop.f32.mrf.mxu0
  %v2247 = vpop.f32.mrf.mxu0
  %v2248 = vadd.f32 %v2087, %v2247
  %v2249 = vpop.f32.mrf.mxu0
  %2250 = vmatprep.mubr.bf16.mxu0 %v1029
  %2251 = vmatmul.mubr.bf16.gmra.mxu0 %v1028
  %v2252 = vpop.f32.mrf.mxu0
  %v2253 = vadd.f32 %v2092, %v2252
  %v2254 = vpop.f32.mrf.mxu0
  %v2255 = vpop.f32.mrf.mxu0
  %v2256 = vadd.f32 %v2095, %v2255
  %v2257 = vpop.f32.mrf.mxu0
  %2258 = vmatprep.mubr.bf16.mxu0 %v1038
  %2259 = vmatmul.mubr.bf16.gmra.mxu0 %v1037
  %v2260 = vpop.f32.mrf.mxu0
  %v2261 = vadd.f32 %v2100, %v2260
  %v2262 = vpop.f32.mrf.mxu0
  %v2263 = vpop.f32.mrf.mxu0
  %v2264 = vadd.f32 %v2103, %v2263
  %v2265 = vpop.f32.mrf.mxu0
  %2266 = vmatprep.mubr.bf16.mxu0 %v1047
  %2267 = vmatmul.mubr.bf16.gmra.mxu0 %v1046
  %v2268 = vpop.f32.mrf.mxu0
  %v2269 = vadd.f32 %v2108, %v2268
  %v2270 = vpop.f32.mrf.mxu0
  %v2271 = vpop.f32.mrf.mxu0
  %v2272 = vadd.f32 %v2111, %v2271
  %v2273 = vpop.f32.mrf.mxu0
  %2274 = vmatprep.mubr.bf16.mxu0 %v1056
  %2275 = vmatmul.mubr.bf16.gmra.mxu0 %v1055
  %v2276 = vpop.f32.mrf.mxu0
  %v2277 = vadd.f32 %v2116, %v2276
  %v2278 = vpop.f32.mrf.mxu0
  %v2279 = vpop.f32.mrf.mxu0
  %v2280 = vadd.f32 %v2119, %v2279
  %v2281 = vpop.f32.mrf.mxu0
  %2282 = vmatprep.mubr.bf16.mxu0 %v1065
  %2283 = vmatmul.mubr.bf16.gmra.mxu0 %v1064
  %v2284 = vpop.f32.mrf.mxu0
  %v2285 = vadd.f32 %v2124, %v2284
  %v2286 = vpop.f32.mrf.mxu0
  %v2287 = vpop.f32.mrf.mxu0
  %v2288 = vadd.f32 %v2127, %v2287
  %v2289 = vpop.f32.mrf.mxu0
  %2290 = vmatprep.mubr.bf16.mxu0 %v1074
  %2291 = vmatmul.mubr.bf16.gmra.mxu0 %v1073
  %v2292 = vpop.f32.mrf.mxu0
  %v2293 = vadd.f32 %v2132, %v2292
  %v2294 = vpop.f32.mrf.mxu0
  %v2295 = vpop.f32.mrf.mxu0
  %v2296 = vadd.f32 %v2135, %v2295
  %v2297 = vpop.f32.mrf.mxu0
  %2298 = vmatprep.mubr.bf16.mxu0 %v1083
  %2299 = vmatmul.mubr.bf16.gmra.mxu0 %v1082
  %v2300 = vpop.f32.mrf.mxu0
  %v2301 = vadd.f32 %v2140, %v2300
  %v2302 = vpop.f32.mrf.mxu0
  %v2303 = vpop.f32.mrf.mxu0
  %v2304 = vadd.f32 %v2143, %v2303
  %v2305 = vpop.f32.mrf.mxu0
  %2306 = vmatprep.mubr.bf16.mxu0 %v1092
  %2307 = vmatmul.mubr.bf16.gmra.mxu0 %v1091
  %v2308 = vpop.f32.mrf.mxu0
  %v2309 = vadd.f32 %v2148, %v2308
  %v2310 = vpop.f32.mrf.mxu0
  %v2311 = vpop.f32.mrf.mxu0
  %v2312 = vadd.f32 %v2151, %v2311
  %v2313 = vpop.f32.mrf.mxu0
  %2314 = vmatprep.mubr.bf16.mxu0 %v1101
  %2315 = vmatmul.mubr.bf16.gmra.mxu0 %v1100
  %v2316 = vpop.f32.mrf.mxu0
  %v2317 = vadd.f32 %v2156, %v2316
  %v2318 = vpop.f32.mrf.mxu0
  %v2319 = vpop.f32.mrf.mxu0
  %v2320 = vadd.f32 %v2159, %v2319
  %v2321 = vpop.f32.mrf.mxu0
  %2322 = vdwg.mxu0
  %2323 = vmatprep.subr.bf16.mxu0 0
  %2324 = vmatpush1.bf16.msra.mxu0 %v1606
  %2325 = vmatprep.subr.bf16.mxu0 0
  %2326 = vmatpush1.bf16.msra.mxu0 %v1605
  %2327 = vmatprep.subr.bf16.mxu0 0
  %2328 = vmatpush1.bf16.msra.mxu0 %v1604
  %2329 = vmatprep.subr.bf16.mxu0 0
  %2330 = vmatpush1.bf16.msra.mxu0 %v1603
  %2331 = vmatprep.subr.bf16.mxu0 0
  %2332 = vmatpush1.bf16.msra.mxu0 %v1602
  %2333 = vmatprep.subr.bf16.mxu0 0
  %2334 = vmatpush1.bf16.msra.mxu0 %v1601
  %2335 = vmatprep.subr.bf16.mxu0 0
  %2336 = vmatpush1.bf16.msra.mxu0 %v1600
  %2337 = vmatprep.subr.bf16.mxu0 0
  %2338 = vmatpush1.bf16.msra.mxu0 %v1599
  %2339 = vmatprep.subr.bf16.mxu0 0
  %2340 = vmatpush2.bf16.msra.mxu0 0
  %2341 = vmatprep.subr.bf16.mxu0 0
  %2342 = vmatpush2.bf16.msra.mxu0 0
  %2343 = vmatprep.subr.bf16.mxu0 0
  %2344 = vmatpush2.bf16.msra.mxu0 0
  %2345 = vmatprep.subr.bf16.mxu0 0
  %2346 = vmatpush2.bf16.msra.mxu0 0
  %2347 = vmatprep.subr.bf16.mxu0 0
  %2348 = vmatpush2.bf16.msra.mxu0 0
  %2349 = vmatprep.subr.bf16.mxu0 0
  %2350 = vmatpush2.bf16.msra.mxu0 0
  %2351 = vmatprep.subr.bf16.mxu0 0
  %2352 = vmatpush2.bf16.msra.mxu0 0
  %2353 = vmatprep.subr.bf16.mxu0 0
  %2354 = vmatpush2.bf16.msra.mxu0 0
  %2355 = vmatprep.mubr.bf16.mxu0 0
  %2356 = vmatmul.mubr.bf16.gmra.mxu0 %v967
  %v2357 = vpop.f32.mrf.mxu0
  %v2358 = vadd.f32 %v2197, %v2357
  %v2359 = vpop.f32.mrf.mxu0
  %v2360 = vpop.f32.mrf.mxu0
  %v2361 = vadd.f32 %v2200, %v2360
  %v2362 = vpop.f32.mrf.mxu0
  %2363 = vmatprep.mubr.bf16.mxu0 0
  %2364 = vmatmul.mubr.bf16.gmra.mxu0 %v976
  %v2365 = vpop.f32.mrf.mxu0
  %v2366 = vadd.f32 %v2205, %v2365
  %v2367 = vpop.f32.mrf.mxu0
  %v2368 = vpop.f32.mrf.mxu0
  %v2369 = vadd.f32 %v2208, %v2368
  %v2370 = vpop.f32.mrf.mxu0
  %2371 = vmatprep.mubr.bf16.mxu0 0
  %2372 = vmatmul.mubr.bf16.gmra.mxu0 %v985
  %v2373 = vpop.f32.mrf.mxu0
  %v2374 = vadd.f32 %v2213, %v2373
  %v2375 = vpop.f32.mrf.mxu0
  %v2376 = vpop.f32.mrf.mxu0
  %v2377 = vadd.f32 %v2216, %v2376
  %v2378 = vpop.f32.mrf.mxu0
  %2379 = vmatprep.mubr.bf16.mxu0 0
  %2380 = vmatmul.mubr.bf16.gmra.mxu0 %v994
  %v2381 = vpop.f32.mrf.mxu0
  %v2382 = vadd.f32 %v2221, %v2381
  %v2383 = vpop.f32.mrf.mxu0
  %v2384 = vpop.f32.mrf.mxu0
  %v2385 = vadd.f32 %v2224, %v2384
  %v2386 = vpop.f32.mrf.mxu0
  %2387 = vmatprep.mubr.bf16.mxu0 0
  %2388 = vmatmul.mubr.bf16.gmra.mxu0 %v1003
  %v2389 = vpop.f32.mrf.mxu0
  %v2390 = vadd.f32 %v2229, %v2389
  %v2391 = vpop.f32.mrf.mxu0
  %v2392 = vpop.f32.mrf.mxu0
  %v2393 = vadd.f32 %v2232, %v2392
  %v2394 = vpop.f32.mrf.mxu0
  %2395 = vmatprep.mubr.bf16.mxu0 0
  %2396 = vmatmul.mubr.bf16.gmra.mxu0 %v1012
  %v2397 = vpop.f32.mrf.mxu0
  %v2398 = vadd.f32 %v2237, %v2397
  %v2399 = vpop.f32.mrf.mxu0
  %v2400 = vpop.f32.mrf.mxu0
  %v2401 = vadd.f32 %v2240, %v2400
  %v2402 = vpop.f32.mrf.mxu0
  %2403 = vmatprep.mubr.bf16.mxu0 0
  %2404 = vmatmul.mubr.bf16.gmra.mxu0 %v1021
  %v2405 = vpop.f32.mrf.mxu0
  %v2406 = vadd.f32 %v2245, %v2405
  %v2407 = vpop.f32.mrf.mxu0
  %v2408 = vpop.f32.mrf.mxu0
  %v2409 = vadd.f32 %v2248, %v2408
  %v2410 = vpop.f32.mrf.mxu0
  %2411 = vmatprep.mubr.bf16.mxu0 0
  %2412 = vmatmul.mubr.bf16.gmra.mxu0 %v1030
  %v2413 = vpop.f32.mrf.mxu0
  %v2414 = vadd.f32 %v2253, %v2413
  %v2415 = vpop.f32.mrf.mxu0
  %v2416 = vpop.f32.mrf.mxu0
  %v2417 = vadd.f32 %v2256, %v2416
  %v2418 = vpop.f32.mrf.mxu0
  %2419 = vmatprep.mubr.bf16.mxu0 0
  %2420 = vmatmul.mubr.bf16.gmra.mxu0 %v1039
  %v2421 = vpop.f32.mrf.mxu0
  %v2422 = vadd.f32 %v2261, %v2421
  %v2423 = vpop.f32.mrf.mxu0
  %v2424 = vpop.f32.mrf.mxu0
  %v2425 = vadd.f32 %v2264, %v2424
  %v2426 = vpop.f32.mrf.mxu0
  %2427 = vmatprep.mubr.bf16.mxu0 0
  %2428 = vmatmul.mubr.bf16.gmra.mxu0 %v1048
  %v2429 = vpop.f32.mrf.mxu0
  %v2430 = vadd.f32 %v2269, %v2429
  %v2431 = vpop.f32.mrf.mxu0
  %v2432 = vpop.f32.mrf.mxu0
  %v2433 = vadd.f32 %v2272, %v2432
  %v2434 = vpop.f32.mrf.mxu0
  %2435 = vmatprep.mubr.bf16.mxu0 0
  %2436 = vmatmul.mubr.bf16.gmra.mxu0 %v1057
  %v2437 = vpop.f32.mrf.mxu0
  %v2438 = vadd.f32 %v2277, %v2437
  %v2439 = vpop.f32.mrf.mxu0
  %v2440 = vpop.f32.mrf.mxu0
  %v2441 = vadd.f32 %v2280, %v2440
  %v2442 = vpop.f32.mrf.mxu0
  %2443 = vmatprep.mubr.bf16.mxu0 0
  %2444 = vmatmul.mubr.bf16.gmra.mxu0 %v1066
  %v2445 = vpop.f32.mrf.mxu0
  %v2446 = vadd.f32 %v2285, %v2445
  %v2447 = vpop.f32.mrf.mxu0
  %v2448 = vpop.f32.mrf.mxu0
  %v2449 = vadd.f32 %v2288, %v2448
  %v2450 = vpop.f32.mrf.mxu0
  %2451 = vmatprep.mubr.bf16.mxu0 0
  %2452 = vmatmul.mubr.bf16.gmra.mxu0 %v1075
  %v2453 = vpop.f32.mrf.mxu0
  %v2454 = vadd.f32 %v2293, %v2453
  %v2455 = vpop.f32.mrf.mxu0
  %v2456 = vpop.f32.mrf.mxu0
  %v2457 = vadd.f32 %v2296, %v2456
  %v2458 = vpop.f32.mrf.mxu0
  %2459 = vmatprep.mubr.bf16.mxu0 0
  %2460 = vmatmul.mubr.bf16.gmra.mxu0 %v1084
  %v2461 = vpop.f32.mrf.mxu0
  %v2462 = vadd.f32 %v2301, %v2461
  %v2463 = vpop.f32.mrf.mxu0
  %v2464 = vpop.f32.mrf.mxu0
  %v2465 = vadd.f32 %v2304, %v2464
  %v2466 = vpop.f32.mrf.mxu0
  %2467 = vmatprep.mubr.bf16.mxu0 0
  %2468 = vmatmul.mubr.bf16.gmra.mxu0 %v1093
  %v2469 = vpop.f32.mrf.mxu0
  %v2470 = vadd.f32 %v2309, %v2469
  %v2471 = vpop.f32.mrf.mxu0
  %v2472 = vpop.f32.mrf.mxu0
  %v2473 = vadd.f32 %v2312, %v2472
  %v2474 = vpop.f32.mrf.mxu0
  %2475 = vmatprep.mubr.bf16.mxu0 0
  %2476 = vmatmul.mubr.bf16.gmra.mxu0 %v1102
  %v2477 = vpop.f32.mrf.mxu0
  %v2478 = vadd.f32 %v2317, %v2477
  %v2479 = vpop.f32.mrf.mxu0
  %v2480 = vpop.f32.mrf.mxu0
  %v2481 = vadd.f32 %v2320, %v2480
  %v2482 = vpop.f32.mrf.mxu0
  %2483 = vdwg.mxu0
  %v2484 = vmax.f32 %v2358, 0.0
  %v2485 = vmax.f32 %v2361, 0.0
  %v2486 = vmax.f32 %v2366, 0.0
  %v2487 = vmax.f32 %v2369, 0.0
  %v2488 = vmax.f32 %v2374, 0.0
  %v2489 = vmax.f32 %v2377, 0.0
  %v2490 = vmax.f32 %v2382, 0.0
  %v2491 = vmax.f32 %v2385, 0.0
  %v2492 = vmax.f32 %v2390, 0.0
  %v2493 = vmax.f32 %v2393, 0.0
  %v2494 = vmax.f32 %v2398, 0.0
  %v2495 = vmax.f32 %v2401, 0.0
  %v2496 = vmax.f32 %v2406, 0.0
  %v2497 = vmax.f32 %v2409, 0.0
  %v2498 = vmax.f32 %v2414, 0.0
  %v2499 = vmax.f32 %v2417, 0.0
  %v2500 = vmax.f32 %v2422, 0.0
  %v2501 = vmax.f32 %v2425, 0.0
  %v2502 = vmax.f32 %v2430, 0.0
  %v2503 = vmax.f32 %v2433, 0.0
  %v2504 = vmax.f32 %v2438, 0.0
  %v2505 = vmax.f32 %v2441, 0.0
  %v2506 = vmax.f32 %v2446, 0.0
  %v2507 = vmax.f32 %v2449, 0.0
  %v2508 = vmax.f32 %v2454, 0.0
  %v2509 = vmax.f32 %v2457, 0.0
  %v2510 = vmax.f32 %v2462, 0.0
  %v2511 = vmax.f32 %v2465, 0.0
  %v2512 = vmax.f32 %v2470, 0.0
  %v2513 = vmax.f32 %v2473, 0.0
  %v2514 = vmax.f32 %v2478, 0.0
  %v2515 = vmax.f32 %v2481, 0.0
  %v2516 = vpack.c.bf16 %v2485, %v2484
  %v2517 = vpack.c.bf16 %v2487, %v2486
  %v2518 = vpack.c.bf16 %v2489, %v2488
  %v2519 = vpack.c.bf16 %v2491, %v2490
  %v2520 = vpack.c.bf16 %v2493, %v2492
  %v2521 = vpack.c.bf16 %v2495, %v2494
  %v2522 = vpack.c.bf16 %v2497, %v2496
  %v2523 = vpack.c.bf16 %v2499, %v2498
  %v2524 = vpack.c.bf16 %v2501, %v2500
  %v2525 = vpack.c.bf16 %v2503, %v2502
  %v2526 = vpack.c.bf16 %v2505, %v2504
  %v2527 = vpack.c.bf16 %v2507, %v2506
  %v2528 = vpack.c.bf16 %v2509, %v2508
  %v2529 = vpack.c.bf16 %v2511, %v2510
  %v2530 = vpack.c.bf16 %v2513, %v2512
  %v2531 = vpack.c.bf16 %v2515, %v2514
  %v2548 = vunpack.c.l.b16 %v2516
  %v2549 = vunpack.c.h.b16 %v2516
  %v2550 = vunpack.c.l.b16 %v2517
  %v2551 = vunpack.c.h.b16 %v2517
  %v2552 = vunpack.c.l.b16 %v2518
  %v2553 = vunpack.c.h.b16 %v2518
  %v2554 = vunpack.c.l.b16 %v2519
  %v2555 = vunpack.c.h.b16 %v2519
  %v2556 = vunpack.c.l.b16 %v2520
  %v2557 = vunpack.c.h.b16 %v2520
  %v2558 = vunpack.c.l.b16 %v2521
  %v2559 = vunpack.c.h.b16 %v2521
  %v2560 = vunpack.c.l.b16 %v2522
  %v2561 = vunpack.c.h.b16 %v2522
  %v2562 = vunpack.c.l.b16 %v2523
  %v2563 = vunpack.c.h.b16 %v2523
  %v2564 = vunpack.c.l.b16 %v2524
  %v2565 = vunpack.c.h.b16 %v2524
  %v2566 = vunpack.c.l.b16 %v2525
  %v2567 = vunpack.c.h.b16 %v2525
  %v2568 = vunpack.c.l.b16 %v2526
  %v2569 = vunpack.c.h.b16 %v2526
  %v2570 = vunpack.c.l.b16 %v2527
  %v2571 = vunpack.c.h.b16 %v2527
  %v2572 = vunpack.c.l.b16 %v2528
  %v2573 = vunpack.c.h.b16 %v2528
  %v2574 = vunpack.c.l.b16 %v2529
  %v2575 = vunpack.c.h.b16 %v2529
  %v2576 = vunpack.c.l.b16 %v2530
  %v2577 = vunpack.c.h.b16 %v2530
  %v2578 = vunpack.c.l.b16 %v2531
  %v2579 = vunpack.c.h.b16 %v2531
  %v2580 = vpack.c.b16 %v2548, %v2548
  %v2581 = vpack.c.b16 %v2549, %v2549
  %v2582 = vpack.c.b16 %v2550, %v2550
  %v2583 = vpack.c.b16 %v2551, %v2551
  %v2584 = vpack.c.b16 %v2552, %v2552
  %v2585 = vpack.c.b16 %v2553, %v2553
  %v2586 = vpack.c.b16 %v2554, %v2554
  %v2587 = vpack.c.b16 %v2555, %v2555
  %v2588 = vpack.c.b16 %v2556, %v2556
  %v2589 = vpack.c.b16 %v2557, %v2557
  %v2590 = vpack.c.b16 %v2558, %v2558
  %v2591 = vpack.c.b16 %v2559, %v2559
  %v2592 = vpack.c.b16 %v2560, %v2560
  %v2593 = vpack.c.b16 %v2561, %v2561
  %v2594 = vpack.c.b16 %v2562, %v2562
  %v2595 = vpack.c.b16 %v2563, %v2563
  %v2596 = vpack.c.b16 %v2564, %v2564
  %v2597 = vpack.c.b16 %v2565, %v2565
  %v2598 = vpack.c.b16 %v2566, %v2566
  %v2599 = vpack.c.b16 %v2567, %v2567
  %v2600 = vpack.c.b16 %v2568, %v2568
  %v2601 = vpack.c.b16 %v2569, %v2569
  %v2602 = vpack.c.b16 %v2570, %v2570
  %v2603 = vpack.c.b16 %v2571, %v2571
  %v2604 = vpack.c.b16 %v2572, %v2572
  %v2605 = vpack.c.b16 %v2573, %v2573
  %v2606 = vpack.c.b16 %v2574, %v2574
  %v2607 = vpack.c.b16 %v2575, %v2575
  %v2608 = vpack.c.b16 %v2576, %v2576
  %v2609 = vpack.c.b16 %v2577, %v2577
  %v2610 = vpack.c.b16 %v2578, %v2578
  %v2611 = vpack.c.b16 %v2579, %v2579
  %vm2644 = vcmask 60416
  %2645 = vst.msk [vmem:[%s3] sm:$0xf] %vm2644, %v2580
  %2646 = vst.msk [vmem:[%s3 + $0x4] sm:$0xf] %vm2644, %v2581
  %2647 = vst.msk [vmem:[%s3 + $0x8] sm:$0xf] %vm2644, %v2582
  %2648 = vst.msk [vmem:[%s3 + $0xc] sm:$0xf] %vm2644, %v2583
  %2649 = vst.msk [vmem:[%s3 + $0x10] sm:$0xf] %vm2644, %v2584
  %2650 = vst.msk [vmem:[%s3 + $0x14] sm:$0xf] %vm2644, %v2585
  %2651 = vst.msk [vmem:[%s3 + $0x18] sm:$0xf] %vm2644, %v2586
  %2652 = vst.msk [vmem:[%s3 + $0x1c] sm:$0xf] %vm2644, %v2587
  %2653 = vst.msk [vmem:[%s3 + $0x20] sm:$0xf] %vm2644, %v2588
  %2654 = vst.msk [vmem:[%s3 + $0x24] sm:$0xf] %vm2644, %v2589
  %2655 = vst.msk [vmem:[%s3 + $0x28] sm:$0xf] %vm2644, %v2590
  %2656 = vst.msk [vmem:[%s3 + $0x2c] sm:$0xf] %vm2644, %v2591
  %2657 = vst.msk [vmem:[%s3 + $0x30] sm:$0xf] %vm2644, %v2592
  %2658 = vst.msk [vmem:[%s3 + $0x34] sm:$0xf] %vm2644, %v2593
  %2659 = vst.msk [vmem:[%s3 + $0x38] sm:$0xf] %vm2644, %v2594
  %2660 = vst.msk [vmem:[%s3 + $0x3c] sm:$0xf] %vm2644, %v2595
  %2661 = vst.msk [vmem:[%s3 + $0x40] sm:$0xf] %vm2644, %v2596
  %2662 = vst.msk [vmem:[%s3 + $0x44] sm:$0xf] %vm2644, %v2597
  %2663 = vst.msk [vmem:[%s3 + $0x48] sm:$0xf] %vm2644, %v2598
  %2664 = vst.msk [vmem:[%s3 + $0x4c] sm:$0xf] %vm2644, %v2599
  %2665 = vst.msk [vmem:[%s3 + $0x50] sm:$0xf] %vm2644, %v2600
  %2666 = vst.msk [vmem:[%s3 + $0x54] sm:$0xf] %vm2644, %v2601
  %2667 = vst.msk [vmem:[%s3 + $0x58] sm:$0xf] %vm2644, %v2602
  %2668 = vst.msk [vmem:[%s3 + $0x5c] sm:$0xf] %vm2644, %v2603
  %2669 = vst.msk [vmem:[%s3 + $0x60] sm:$0xf] %vm2644, %v2604
  %2670 = vst.msk [vmem:[%s3 + $0x64] sm:$0xf] %vm2644, %v2605
  %2671 = vst.msk [vmem:[%s3 + $0x68] sm:$0xf] %vm2644, %v2606
  %2672 = vst.msk [vmem:[%s3 + $0x6c] sm:$0xf] %vm2644, %v2607
  %2673 = vst.msk [vmem:[%s3 + $0x70] sm:$0xf] %vm2644, %v2608
  %2674 = vst.msk [vmem:[%s3 + $0x74] sm:$0xf] %vm2644, %v2609
  %2675 = vst.msk [vmem:[%s3 + $0x78] sm:$0xf] %vm2644, %v2610
  %2676 = vst.msk [vmem:[%s3 + $0x7c] sm:$0xf] %vm2644, %v2611
  // Predicated region
  $region14: #{_lambda_.9} parent=0 // pred_check
    _
  $region15: #{_lambda_.9} parent=0 // pred_check_branch
    %2678 = sbr.rel (0) target = $region17
  $region16: #{_lambda_.9} parent=0 // pred_region
    _
  $region17: #{_lambda_.9} parent=0 // pred_fallthru
    _
  // Predicated region
  $region18: #{_lambda_.9} parent=0 // pred_check
    _
  $region19: #{_lambda_.9} parent=0 // pred_check_branch
    %2680 = sbr.rel (0) target = $region21
  $region20: #{_lambda_.9} parent=0 // pred_region
    _
  $region21: #{_lambda_.9} parent=0 // pred_fallthru
    _

</llo_original>
